<compile_context>
chip_gen: v6e
topology: v6e:2x2x1
jax: 0.10.0
libtpu: 0.0.40
codegen_flags: <defaults>
</compile_context>

<pallas_src>
import math

import jax
import jax.numpy as jnp
from jax import lax
from jax.experimental import pallas as pl
from jax.experimental.pallas import tpu as pltpu

# ---- model dimensions (small, synthetic, consistent with the module) -------
B = 2         # batch
S_COND = 8    # conditioning sequence length (level+1 tokens)
S_TGT = 17    # target sequence length (sl + 1, as built in train_forward)
E = 32        # vqvae embed_dim
D = 64        # transformer d_model
NH = 2        # attention heads
HD = D // NH  # head dim
F = 128       # feed-forward dim
V = 128       # vocab size == num_entries (fc_out output dim)

LN_EPS = 1e-5
NEG_INF = -1e30

# layout of the packed (26, D) f32 bias / LayerNorm-parameter table
#   0: cond_proj b            1: tgt_proj b
#   2-5:  enc self-attn bq,bk,bv,bo      6,7:  enc LN1 g,b
#   8:    enc ffn b2                     9,10: enc LN2 g,b
#   11-14: dec self-attn bq,bk,bv,bo     15,16: dec LN1 g,b
#   17-20: dec cross-attn bq,bk,bv,bo    21,22: dec LN2 g,b
#   23:   dec ffn b2                     24,25: dec LN3 g,b
_BIAS_D_ROWS = 26
_LN_GAMMA_ROWS = (6, 9, 15, 21, 24)


# ---------------------------- Pallas kernel ---------------------------------
def _ar_imgen_kernel(cond_ref, tgt_ref, w_proj_ref, w_attn_ref, w_ffn1_ref,
                     w_ffn2_ref, w_out_ref, bias_d_ref, bias_f_ref,
                     pe_cond_ref, pe_tgt_ref, out_ref):
    """Fused cond_proj + tgt_proj + 1-layer encoder/decoder + fc_out."""

    def bd(i):                       # (1, D) f32 bias / LN row, lazy load
        return bias_d_ref[i:i + 1, :]

    def bf(i):                       # (1, F) f32 bias row, lazy load
        return bias_f_ref[i:i + 1, :]

    def aw(i):                       # i-th packed (D, D) bf16 attention weight
        return w_attn_ref[i * D:(i + 1) * D, :]

    def matmul(x, w):                # bf16 MXU matmul, f32 accumulation
        return jnp.dot(x.astype(jnp.bfloat16), w,
                       preferred_element_type=jnp.float32)

    def layer_norm(x, g, b):         # f32 statistics
        mu = jnp.mean(x, axis=-1, keepdims=True)
        var = jnp.mean(jnp.square(x - mu), axis=-1, keepdims=True)
        return (x - mu) * lax.rsqrt(var + LN_EPS) * g + b

    def mha(xq, xkv, wi, bi, sq, causal):
        """Multi-head attention.  wi / bi index the first of the 4 packed
        (q, k, v, o) weights / biases.  xq: (B*sq, D), xkv: (B*skv, D)."""
        skv = xkv.shape[0] // B
        q = matmul(xq, aw(wi + 0)) + bd(bi + 0)
        k = matmul(xkv, aw(wi + 1)) + bd(bi + 1)
        v = matmul(xkv, aw(wi + 2)) + bd(bi + 2)
        scale = 1.0 / math.sqrt(HD)
        if causal:                    # mask hoisted out of batch / head loops
            row = lax.broadcasted_iota(jnp.int32, (sq, skv), 0)
            col = lax.broadcasted_iota(jnp.int32, (sq, skv), 1)
            keep = col <= row
        ctx_b = []
        for b in range(B):            # B = 2, unrolled
            qb = q[b * sq:(b + 1) * sq]
            kb = k[b * skv:(b + 1) * skv]
            vb = v[b * skv:(b + 1) * skv]
            heads = []
            for h in range(NH):       # NH = 2, unrolled
                hs = slice(h * HD, (h + 1) * HD)
                s = jnp.dot(qb[:, hs].astype(jnp.bfloat16),
                            kb[:, hs].astype(jnp.bfloat16).T,
                            preferred_element_type=jnp.float32) * scale
                if causal:
                    s = jnp.where(keep, s, NEG_INF)
                s = s - jnp.max(s, axis=-1, keepdims=True)
                e = jnp.exp(s)
                p = e * pl.reciprocal(jnp.sum(e, axis=-1, keepdims=True),
                                      approx=True)
                heads.append(jnp.dot(p.astype(jnp.bfloat16),
                                     vb[:, hs].astype(jnp.bfloat16),
                                     preferred_element_type=jnp.float32))
            ctx_b.append(jnp.concatenate(heads, axis=-1))   # (sq, D)
        ctx = jnp.concatenate(ctx_b, axis=0)                # (B*sq, D)
        return matmul(ctx, aw(wi + 3)) + bd(bi + 3)         # single Wo matmul

    # ---- input projections (+ batch-tiled positional encoding) ----
    cond = cond_ref[...]              # (B*S_COND, E) f32
    tgt = tgt_ref[...]                # (B*S_TGT, E)  f32
    x = matmul(cond, w_proj_ref[0:E, :]) + bd(0) + pe_cond_ref[...]
    y = matmul(tgt, w_proj_ref[E:2 * E, :]) + bd(1) + pe_tgt_ref[...]

    # ---- encoder layer (post-LN) ----
    x = layer_norm(x + mha(x, x, 0, 2, S_COND, causal=False), bd(6), bd(7))
    h = jnp.maximum(matmul(x, w_ffn1_ref[0:D, :]) + bf(0), 0.0)
    ff = matmul(h, w_ffn2_ref[0:F, :]) + bd(8)
    x = layer_norm(x + ff, bd(9), bd(10))
    mem = x

    # ---- decoder layer (post-LN) ----
    y = layer_norm(y + mha(y, y, 4, 11, S_TGT, causal=True), bd(15), bd(16))
    y = layer_norm(y + mha(y, mem, 8, 17, S_TGT, causal=False), bd(21), bd(22))
    h = jnp.maximum(matmul(y, w_ffn1_ref[D:2 * D, :]) + bf(1), 0.0)
    ff = matmul(h, w_ffn2_ref[F:2 * F, :]) + bd(23)
    y = layer_norm(y + ff, bd(24), bd(25))

    # ---- fc_out ----
    out_ref[...] = matmul(y, w_out_ref[...]) + bf(2)


# ---------------------------- parameter setup -------------------------------
def _sinusoidal_pe(seq, dim):
    pos = jnp.arange(seq, dtype=jnp.float32)[:, None]
    i = jnp.arange(dim // 2, dtype=jnp.float32)[None, :]
    angle = pos / jnp.power(10000.0, 2.0 * i / dim)
    pe = jnp.zeros((seq, dim), jnp.float32)
    pe = pe.at[:, 0::2].set(jnp.sin(angle))
    pe = pe.at[:, 1::2].set(jnp.cos(angle))
    return pe


def init_params(key):
    """Deterministic synthetic weights, packed into a handful of buffers.

    Weight slabs are ROW-stacked so every in-kernel slice is a sublane-aligned
    static slice at full lane width; weights are stored bf16 (MXU-native),
    biases / LN params / positional encodings stay f32.
    """
    keys = iter(jax.random.split(key, 24))

    def w(shape, scale=0.02):
        return (scale * jax.random.normal(next(keys), shape)).astype(jnp.float32)

    w_proj = jnp.concatenate([w((E, D)), w((E, D))], 0).astype(jnp.bfloat16)
    w_attn = jnp.concatenate([w((D, D)) for _ in range(12)],
                             0).astype(jnp.bfloat16)           # (12*D, D)
    w_ffn1 = jnp.concatenate([w((D, F)), w((D, F))], 0).astype(jnp.bfloat16)
    w_ffn2 = jnp.concatenate([w((F, D)), w((F, D))], 0).astype(jnp.bfloat16)
    w_out = w((D, V)).astype(jnp.bfloat16)

    bias_d = jnp.stack([jnp.ones((D,), jnp.float32) if i in _LN_GAMMA_ROWS
                        else jnp.zeros((D,), jnp.float32)
                        for i in range(_BIAS_D_ROWS)], 0)       # (26, D) f32
    bias_f = jnp.zeros((3, F), jnp.float32)  # enc ffn b1, dec ffn b1, fc_out b

    # positional encodings, pre-tiled over the folded batch dimension
    pe_cond = jnp.tile(_sinusoidal_pe(S_COND, D), (B, 1))       # (B*S_COND, D)
    pe_tgt = jnp.tile(_sinusoidal_pe(S_TGT, D), (B, 1))         # (B*S_TGT, D)

    return (w_proj, w_attn, w_ffn1, w_ffn2, w_out, bias_d, bias_f,
            pe_cond, pe_tgt)


# ---------------------------- wrapper ----------------------------------------
def transformer_ar_imgen_forward(embed_cond, embed_tgt, params):
    bsz = embed_cond.shape[0]
    cond2d = embed_cond.reshape(bsz * S_COND, E)
    tgt2d = embed_tgt.reshape(bsz * S_TGT, E)

    vmem = pl.BlockSpec(memory_space=pltpu.MemorySpace.VMEM)
    n_in = 2 + len(params)

    logits2d = pl.pallas_call(
        _ar_imgen_kernel,
        out_shape=jax.ShapeDtypeStruct((bsz * S_TGT, V), jnp.float32),
        in_specs=[vmem] * n_in,
        out_specs=vmem,
    )(cond2d, tgt2d, *params)
    return logits2d.reshape(bsz, S_TGT, V)


# ---------------------------- main -------------------------------------------
if __name__ == "__main__":
    key = jax.random.PRNGKey(0)
    k_params, k_cond, k_tgt = jax.random.split(key, 3)

    params = init_params(k_params)
    # embed_cond: embeddings of the (level+1) code ids, shape (B, S_cond, E)
    embed_cond = jax.random.normal(k_cond, (B, S_COND, E), jnp.float32)
    # embed_tgt: shifted target embeddings (sl + 1 positions), shape (B, S_tgt, E)
    embed_tgt = jax.random.normal(k_tgt, (B, S_TGT, E), jnp.float32)

    logits = transformer_ar_imgen_forward(embed_cond, embed_tgt, params)
    jax.block_until_ready(logits)
    assert logits.shape == (B, S_TGT, V)
    print("KERNEL_OK")
</pallas_src>

<mosaic_0001>
module attributes {stable_mosaic.version = 11 : i64} {
  func.func @_ar_imgen_kernel(%arg0: memref<16x32xf32, #tpu.memory_space<vmem>>, %arg1: memref<34x32xf32, #tpu.memory_space<vmem>>, %arg2: memref<64x64xbf16, #tpu.memory_space<vmem>>, %arg3: memref<768x64xbf16, #tpu.memory_space<vmem>>, %arg4: memref<128x128xbf16, #tpu.memory_space<vmem>>, %arg5: memref<256x64xbf16, #tpu.memory_space<vmem>>, %arg6: memref<64x128xbf16, #tpu.memory_space<vmem>>, %arg7: memref<26x64xf32, #tpu.memory_space<vmem>>, %arg8: memref<3x128xf32, #tpu.memory_space<vmem>>, %arg9: memref<16x64xf32, #tpu.memory_space<vmem>>, %arg10: memref<34x64xf32, #tpu.memory_space<vmem>>, %arg11: memref<34x128xf32, #tpu.memory_space<vmem>>) attributes {dimension_semantics = [], scalar_prefetch = 0 : i64, scratch_operands = 0 : i64, tpu.core_type = #tpu.core_type<tc>} {
    %c0 = arith.constant 0 : index
    %c0_0 = arith.constant 0 : index
    %0 = vector.load %arg0[%c0, %c0_0] : memref<16x32xf32, #tpu.memory_space<vmem>>, vector<16x32xf32>
    %c0_1 = arith.constant 0 : index
    %c0_2 = arith.constant 0 : index
    %1 = vector.load %arg1[%c0_1, %c0_2] : memref<34x32xf32, #tpu.memory_space<vmem>>, vector<34x32xf32>
    %c0_3 = arith.constant 0 : index
    %c0_4 = arith.constant 0 : index
    %2 = vector.load %arg2[%c0_3, %c0_4] : memref<64x64xbf16, #tpu.memory_space<vmem>>, vector<32x64xbf16>
    %3 = arith.truncf %0 : vector<16x32xf32> to vector<16x32xbf16>
    %cst = arith.constant dense<0.000000e+00> : vector<16x64xf32>
    %4 = tpu.matmul %3, %2, %cst {dimension_numbers = #tpu.dot_dimension_numbers<[1], [0], [0], [1], [0, 0, 1, 1], [], []>} : vector<16x32xbf16>, vector<32x64xbf16>, vector<16x64xf32> -> vector<16x64xf32>
    %c0_5 = arith.constant 0 : index
    %c0_6 = arith.constant 0 : index
    %5 = vector.load %arg7[%c0_5, %c0_6] : memref<26x64xf32, #tpu.memory_space<vmem>>, vector<1x64xf32>
    %6 = vector.broadcast %5 : vector<1x64xf32> to vector<16x64xf32>
    %7 = arith.addf %4, %6 : vector<16x64xf32>
    %c0_7 = arith.constant 0 : index
    %c0_8 = arith.constant 0 : index
    %8 = vector.load %arg9[%c0_7, %c0_8] : memref<16x64xf32, #tpu.memory_space<vmem>>, vector<16x64xf32>
    %9 = arith.addf %7, %8 : vector<16x64xf32>
    %c32 = arith.constant 32 : index
    %c0_9 = arith.constant 0 : index
    %10 = vector.load %arg2[%c32, %c0_9] : memref<64x64xbf16, #tpu.memory_space<vmem>>, vector<32x64xbf16>
    %11 = arith.truncf %1 : vector<34x32xf32> to vector<34x32xbf16>
    %cst_10 = arith.constant dense<0.000000e+00> : vector<34x64xf32>
    %12 = tpu.matmul %11, %10, %cst_10 {dimension_numbers = #tpu.dot_dimension_numbers<[1], [0], [0], [1], [0, 0, 1, 1], [], []>} : vector<34x32xbf16>, vector<32x64xbf16>, vector<34x64xf32> -> vector<34x64xf32>
    %c1 = arith.constant 1 : index
    %c0_11 = arith.constant 0 : index
    %13 = vector.load %arg7[%c1, %c0_11] : memref<26x64xf32, #tpu.memory_space<vmem>>, vector<1x64xf32>
    %14 = vector.broadcast %13 : vector<1x64xf32> to vector<34x64xf32>
    %15 = arith.addf %12, %14 : vector<34x64xf32>
    %c0_12 = arith.constant 0 : index
    %c0_13 = arith.constant 0 : index
    %16 = vector.load %arg10[%c0_12, %c0_13] : memref<34x64xf32, #tpu.memory_space<vmem>>, vector<34x64xf32>
    %17 = arith.addf %15, %16 : vector<34x64xf32>
    %c0_14 = arith.constant 0 : index
    %c0_15 = arith.constant 0 : index
    %18 = vector.load %arg3[%c0_14, %c0_15] : memref<768x64xbf16, #tpu.memory_space<vmem>>, vector<64x64xbf16>
    %19 = arith.truncf %9 : vector<16x64xf32> to vector<16x64xbf16>
    %cst_16 = arith.constant dense<0.000000e+00> : vector<16x64xf32>
    %20 = tpu.matmul %19, %18, %cst_16 {dimension_numbers = #tpu.dot_dimension_numbers<[1], [0], [0], [1], [0, 0, 1, 1], [], []>} : vector<16x64xbf16>, vector<64x64xbf16>, vector<16x64xf32> -> vector<16x64xf32>
    %c2 = arith.constant 2 : index
    %c0_17 = arith.constant 0 : index
    %21 = vector.load %arg7[%c2, %c0_17] : memref<26x64xf32, #tpu.memory_space<vmem>>, vector<1x64xf32>
    %22 = vector.broadcast %21 : vector<1x64xf32> to vector<16x64xf32>
    %23 = arith.addf %20, %22 : vector<16x64xf32>
    %c64 = arith.constant 64 : index
    %c0_18 = arith.constant 0 : index
    %24 = vector.load %arg3[%c64, %c0_18] : memref<768x64xbf16, #tpu.memory_space<vmem>>, vector<64x64xbf16>
    %25 = arith.truncf %9 : vector<16x64xf32> to vector<16x64xbf16>
    %cst_19 = arith.constant dense<0.000000e+00> : vector<16x64xf32>
    %26 = tpu.matmul %25, %24, %cst_19 {dimension_numbers = #tpu.dot_dimension_numbers<[1], [0], [0], [1], [0, 0, 1, 1], [], []>} : vector<16x64xbf16>, vector<64x64xbf16>, vector<16x64xf32> -> vector<16x64xf32>
    %c3 = arith.constant 3 : index
    %c0_20 = arith.constant 0 : index
    %27 = vector.load %arg7[%c3, %c0_20] : memref<26x64xf32, #tpu.memory_space<vmem>>, vector<1x64xf32>
    %28 = vector.broadcast %27 : vector<1x64xf32> to vector<16x64xf32>
    %29 = arith.addf %26, %28 : vector<16x64xf32>
    %c128 = arith.constant 128 : index
    %c0_21 = arith.constant 0 : index
    %30 = vector.load %arg3[%c128, %c0_21] : memref<768x64xbf16, #tpu.memory_space<vmem>>, vector<64x64xbf16>
    %31 = arith.truncf %9 : vector<16x64xf32> to vector<16x64xbf16>
    %cst_22 = arith.constant dense<0.000000e+00> : vector<16x64xf32>
    %32 = tpu.matmul %31, %30, %cst_22 {dimension_numbers = #tpu.dot_dimension_numbers<[1], [0], [0], [1], [0, 0, 1, 1], [], []>} : vector<16x64xbf16>, vector<64x64xbf16>, vector<16x64xf32> -> vector<16x64xf32>
    %c4 = arith.constant 4 : index
    %c0_23 = arith.constant 0 : index
    %33 = vector.load %arg7[%c4, %c0_23] : memref<26x64xf32, #tpu.memory_space<vmem>>, vector<1x64xf32>
    %34 = vector.broadcast %33 : vector<1x64xf32> to vector<16x64xf32>
    %35 = arith.addf %32, %34 : vector<16x64xf32>
    %36 = vector.extract_strided_slice %23 {offsets = [0, 0], sizes = [8, 64], strides = [1, 1]} : vector<16x64xf32> to vector<8x64xf32>
    %37 = vector.extract_strided_slice %29 {offsets = [0, 0], sizes = [8, 64], strides = [1, 1]} : vector<16x64xf32> to vector<8x64xf32>
    %38 = vector.extract_strided_slice %35 {offsets = [0, 0], sizes = [8, 64], strides = [1, 1]} : vector<16x64xf32> to vector<8x64xf32>
    %39 = vector.extract_strided_slice %36 {offsets = [0, 0], sizes = [8, 32], strides = [1, 1]} : vector<8x64xf32> to vector<8x32xf32>
    %40 = arith.truncf %39 : vector<8x32xf32> to vector<8x32xbf16>
    %41 = vector.extract_strided_slice %37 {offsets = [0, 0], sizes = [8, 32], strides = [1, 1]} : vector<8x64xf32> to vector<8x32xf32>
    %42 = arith.truncf %41 : vector<8x32xf32> to vector<8x32xbf16>
    %43 = tpu.transpose %42, [1, 0] : vector<8x32xbf16> -> vector<32x8xbf16>
    %cst_24 = arith.constant dense<0.000000e+00> : vector<8x8xf32>
    %44 = tpu.matmul %40, %43, %cst_24 {dimension_numbers = #tpu.dot_dimension_numbers<[1], [0], [0], [1], [0, 0, 1, 1], [], []>} : vector<8x32xbf16>, vector<32x8xbf16>, vector<8x8xf32> -> vector<8x8xf32>
    %cst_25 = arith.constant 0.176776692 : f32
    %45 = vector.broadcast %cst_25 : f32 to vector<8x8xf32>
    %46 = arith.mulf %44, %45 : vector<8x8xf32>
    %cst_26 = arith.constant dense<0xFF800000> : vector<8xf32>
    %47 = vector.multi_reduction <maximumf>, %46, %cst_26 [1] : vector<8x8xf32> to vector<8xf32>
    %48 = vector.shape_cast %47 : vector<8xf32> to vector<8x1xf32>
    %49 = vector.broadcast %48 : vector<8x1xf32> to vector<8x8xf32>
    %50 = arith.subf %46, %49 : vector<8x8xf32>
    %51 = math.exp %50 : vector<8x8xf32>
    %cst_27 = arith.constant dense<0.000000e+00> : vector<8xf32>
    %52 = vector.multi_reduction <add>, %51, %cst_27 [1] : vector<8x8xf32> to vector<8xf32>
    %53 = vector.shape_cast %52 : vector<8xf32> to vector<8x1xf32>
    %54 = tpu.reciprocal %53 {approx = true} : vector<8x1xf32> -> vector<8x1xf32>
    %55 = vector.broadcast %54 : vector<8x1xf32> to vector<8x8xf32>
    %56 = arith.mulf %51, %55 : vector<8x8xf32>
    %57 = arith.truncf %56 : vector<8x8xf32> to vector<8x8xbf16>
    %58 = vector.extract_strided_slice %38 {offsets = [0, 0], sizes = [8, 32], strides = [1, 1]} : vector<8x64xf32> to vector<8x32xf32>
    %59 = arith.truncf %58 : vector<8x32xf32> to vector<8x32xbf16>
    %cst_28 = arith.constant dense<0.000000e+00> : vector<8x32xf32>
    %60 = tpu.matmul %57, %59, %cst_28 {dimension_numbers = #tpu.dot_dimension_numbers<[1], [0], [0], [1], [0, 0, 1, 1], [], []>} : vector<8x8xbf16>, vector<8x32xbf16>, vector<8x32xf32> -> vector<8x32xf32>
    %61 = vector.extract_strided_slice %36 {offsets = [0, 32], sizes = [8, 32], strides = [1, 1]} : vector<8x64xf32> to vector<8x32xf32>
    %62 = arith.truncf %61 : vector<8x32xf32> to vector<8x32xbf16>
    %63 = vector.extract_strided_slice %37 {offsets = [0, 32], sizes = [8, 32], strides = [1, 1]} : vector<8x64xf32> to vector<8x32xf32>
    %64 = arith.truncf %63 : vector<8x32xf32> to vector<8x32xbf16>
    %65 = tpu.transpose %64, [1, 0] : vector<8x32xbf16> -> vector<32x8xbf16>
    %cst_29 = arith.constant dense<0.000000e+00> : vector<8x8xf32>
    %66 = tpu.matmul %62, %65, %cst_29 {dimension_numbers = #tpu.dot_dimension_numbers<[1], [0], [0], [1], [0, 0, 1, 1], [], []>} : vector<8x32xbf16>, vector<32x8xbf16>, vector<8x8xf32> -> vector<8x8xf32>
    %cst_30 = arith.constant 0.176776692 : f32
    %67 = vector.broadcast %cst_30 : f32 to vector<8x8xf32>
    %68 = arith.mulf %66, %67 : vector<8x8xf32>
    %cst_31 = arith.constant dense<0xFF800000> : vector<8xf32>
    %69 = vector.multi_reduction <maximumf>, %68, %cst_31 [1] : vector<8x8xf32> to vector<8xf32>
    %70 = vector.shape_cast %69 : vector<8xf32> to vector<8x1xf32>
    %71 = vector.broadcast %70 : vector<8x1xf32> to vector<8x8xf32>
    %72 = arith.subf %68, %71 : vector<8x8xf32>
    %73 = math.exp %72 : vector<8x8xf32>
    %cst_32 = arith.constant dense<0.000000e+00> : vector<8xf32>
    %74 = vector.multi_reduction <add>, %73, %cst_32 [1] : vector<8x8xf32> to vector<8xf32>
    %75 = vector.shape_cast %74 : vector<8xf32> to vector<8x1xf32>
    %76 = tpu.reciprocal %75 {approx = true} : vector<8x1xf32> -> vector<8x1xf32>
    %77 = vector.broadcast %76 : vector<8x1xf32> to vector<8x8xf32>
    %78 = arith.mulf %73, %77 : vector<8x8xf32>
    %79 = arith.truncf %78 : vector<8x8xf32> to vector<8x8xbf16>
    %80 = vector.extract_strided_slice %38 {offsets = [0, 32], sizes = [8, 32], strides = [1, 1]} : vector<8x64xf32> to vector<8x32xf32>
    %81 = arith.truncf %80 : vector<8x32xf32> to vector<8x32xbf16>
    %cst_33 = arith.constant dense<0.000000e+00> : vector<8x32xf32>
    %82 = tpu.matmul %79, %81, %cst_33 {dimension_numbers = #tpu.dot_dimension_numbers<[1], [0], [0], [1], [0, 0, 1, 1], [], []>} : vector<8x8xbf16>, vector<8x32xbf16>, vector<8x32xf32> -> vector<8x32xf32>
    %83 = tpu.concatenate %60, %82 in 1 : vector<8x32xf32>, vector<8x32xf32> -> vector<8x64xf32>
    %84 = vector.extract_strided_slice %23 {offsets = [8, 0], sizes = [8, 64], strides = [1, 1]} : vector<16x64xf32> to vector<8x64xf32>
    %85 = vector.extract_strided_slice %29 {offsets = [8, 0], sizes = [8, 64], strides = [1, 1]} : vector<16x64xf32> to vector<8x64xf32>
    %86 = vector.extract_strided_slice %35 {offsets = [8, 0], sizes = [8, 64], strides = [1, 1]} : vector<16x64xf32> to vector<8x64xf32>
    %87 = vector.extract_strided_slice %84 {offsets = [0, 0], sizes = [8, 32], strides = [1, 1]} : vector<8x64xf32> to vector<8x32xf32>
    %88 = arith.truncf %87 : vector<8x32xf32> to vector<8x32xbf16>
    %89 = vector.extract_strided_slice %85 {offsets = [0, 0], sizes = [8, 32], strides = [1, 1]} : vector<8x64xf32> to vector<8x32xf32>
    %90 = arith.truncf %89 : vector<8x32xf32> to vector<8x32xbf16>
    %91 = tpu.transpose %90, [1, 0] : vector<8x32xbf16> -> vector<32x8xbf16>
    %cst_34 = arith.constant dense<0.000000e+00> : vector<8x8xf32>
    %92 = tpu.matmul %88, %91, %cst_34 {dimension_numbers = #tpu.dot_dimension_numbers<[1], [0], [0], [1], [0, 0, 1, 1], [], []>} : vector<8x32xbf16>, vector<32x8xbf16>, vector<8x8xf32> -> vector<8x8xf32>
    %cst_35 = arith.constant 0.176776692 : f32
    %93 = vector.broadcast %cst_35 : f32 to vector<8x8xf32>
    %94 = arith.mulf %92, %93 : vector<8x8xf32>
    %cst_36 = arith.constant dense<0xFF800000> : vector<8xf32>
    %95 = vector.multi_reduction <maximumf>, %94, %cst_36 [1] : vector<8x8xf32> to vector<8xf32>
    %96 = vector.shape_cast %95 : vector<8xf32> to vector<8x1xf32>
    %97 = vector.broadcast %96 : vector<8x1xf32> to vector<8x8xf32>
    %98 = arith.subf %94, %97 : vector<8x8xf32>
    %99 = math.exp %98 : vector<8x8xf32>
    %cst_37 = arith.constant dense<0.000000e+00> : vector<8xf32>
    %100 = vector.multi_reduction <add>, %99, %cst_37 [1] : vector<8x8xf32> to vector<8xf32>
    %101 = vector.shape_cast %100 : vector<8xf32> to vector<8x1xf32>
    %102 = tpu.reciprocal %101 {approx = true} : vector<8x1xf32> -> vector<8x1xf32>
    %103 = vector.broadcast %102 : vector<8x1xf32> to vector<8x8xf32>
    %104 = arith.mulf %99, %103 : vector<8x8xf32>
    %105 = arith.truncf %104 : vector<8x8xf32> to vector<8x8xbf16>
    %106 = vector.extract_strided_slice %86 {offsets = [0, 0], sizes = [8, 32], strides = [1, 1]} : vector<8x64xf32> to vector<8x32xf32>
    %107 = arith.truncf %106 : vector<8x32xf32> to vector<8x32xbf16>
    %cst_38 = arith.constant dense<0.000000e+00> : vector<8x32xf32>
    %108 = tpu.matmul %105, %107, %cst_38 {dimension_numbers = #tpu.dot_dimension_numbers<[1], [0], [0], [1], [0, 0, 1, 1], [], []>} : vector<8x8xbf16>, vector<8x32xbf16>, vector<8x32xf32> -> vector<8x32xf32>
    %109 = vector.extract_strided_slice %84 {offsets = [0, 32], sizes = [8, 32], strides = [1, 1]} : vector<8x64xf32> to vector<8x32xf32>
    %110 = arith.truncf %109 : vector<8x32xf32> to vector<8x32xbf16>
    %111 = vector.extract_strided_slice %85 {offsets = [0, 32], sizes = [8, 32], strides = [1, 1]} : vector<8x64xf32> to vector<8x32xf32>
    %112 = arith.truncf %111 : vector<8x32xf32> to vector<8x32xbf16>
    %113 = tpu.transpose %112, [1, 0] : vector<8x32xbf16> -> vector<32x8xbf16>
    %cst_39 = arith.constant dense<0.000000e+00> : vector<8x8xf32>
    %114 = tpu.matmul %110, %113, %cst_39 {dimension_numbers = #tpu.dot_dimension_numbers<[1], [0], [0], [1], [0, 0, 1, 1], [], []>} : vector<8x32xbf16>, vector<32x8xbf16>, vector<8x8xf32> -> vector<8x8xf32>
    %cst_40 = arith.constant 0.176776692 : f32
    %115 = vector.broadcast %cst_40 : f32 to vector<8x8xf32>
    %116 = arith.mulf %114, %115 : vector<8x8xf32>
    %cst_41 = arith.constant dense<0xFF800000> : vector<8xf32>
    %117 = vector.multi_reduction <maximumf>, %116, %cst_41 [1] : vector<8x8xf32> to vector<8xf32>
    %118 = vector.shape_cast %117 : vector<8xf32> to vector<8x1xf32>
    %119 = vector.broadcast %118 : vector<8x1xf32> to vector<8x8xf32>
    %120 = arith.subf %116, %119 : vector<8x8xf32>
    %121 = math.exp %120 : vector<8x8xf32>
    %cst_42 = arith.constant dense<0.000000e+00> : vector<8xf32>
    %122 = vector.multi_reduction <add>, %121, %cst_42 [1] : vector<8x8xf32> to vector<8xf32>
    %123 = vector.shape_cast %122 : vector<8xf32> to vector<8x1xf32>
    %124 = tpu.reciprocal %123 {approx = true} : vector<8x1xf32> -> vector<8x1xf32>
    %125 = vector.broadcast %124 : vector<8x1xf32> to vector<8x8xf32>
    %126 = arith.mulf %121, %125 : vector<8x8xf32>
    %127 = arith.truncf %126 : vector<8x8xf32> to vector<8x8xbf16>
    %128 = vector.extract_strided_slice %86 {offsets = [0, 32], sizes = [8, 32], strides = [1, 1]} : vector<8x64xf32> to vector<8x32xf32>
    %129 = arith.truncf %128 : vector<8x32xf32> to vector<8x32xbf16>
    %cst_43 = arith.constant dense<0.000000e+00> : vector<8x32xf32>
    %130 = tpu.matmul %127, %129, %cst_43 {dimension_numbers = #tpu.dot_dimension_numbers<[1], [0], [0], [1], [0, 0, 1, 1], [], []>} : vector<8x8xbf16>, vector<8x32xbf16>, vector<8x32xf32> -> vector<8x32xf32>
    %131 = tpu.concatenate %108, %130 in 1 : vector<8x32xf32>, vector<8x32xf32> -> vector<8x64xf32>
    %132 = tpu.concatenate %83, %131 in 0 : vector<8x64xf32>, vector<8x64xf32> -> vector<16x64xf32>
    %c192 = arith.constant 192 : index
    %c0_44 = arith.constant 0 : index
    %133 = vector.load %arg3[%c192, %c0_44] : memref<768x64xbf16, #tpu.memory_space<vmem>>, vector<64x64xbf16>
    %134 = arith.truncf %132 : vector<16x64xf32> to vector<16x64xbf16>
    %cst_45 = arith.constant dense<0.000000e+00> : vector<16x64xf32>
    %135 = tpu.matmul %134, %133, %cst_45 {dimension_numbers = #tpu.dot_dimension_numbers<[1], [0], [0], [1], [0, 0, 1, 1], [], []>} : vector<16x64xbf16>, vector<64x64xbf16>, vector<16x64xf32> -> vector<16x64xf32>
    %c5 = arith.constant 5 : index
    %c0_46 = arith.constant 0 : index
    %136 = vector.load %arg7[%c5, %c0_46] : memref<26x64xf32, #tpu.memory_space<vmem>>, vector<1x64xf32>
    %137 = vector.broadcast %136 : vector<1x64xf32> to vector<16x64xf32>
    %138 = arith.addf %135, %137 : vector<16x64xf32>
    %139 = arith.addf %9, %138 : vector<16x64xf32>
    %c6 = arith.constant 6 : index
    %c0_47 = arith.constant 0 : index
    %140 = vector.load %arg7[%c6, %c0_47] : memref<26x64xf32, #tpu.memory_space<vmem>>, vector<1x64xf32>
    %c7 = arith.constant 7 : index
    %c0_48 = arith.constant 0 : index
    %141 = vector.load %arg7[%c7, %c0_48] : memref<26x64xf32, #tpu.memory_space<vmem>>, vector<1x64xf32>
    %cst_49 = arith.constant dense<0.000000e+00> : vector<16xf32>
    %142 = vector.multi_reduction <add>, %139, %cst_49 [1] : vector<16x64xf32> to vector<16xf32>
    %143 = vector.shape_cast %142 : vector<16xf32> to vector<16x1xf32>
    %cst_50 = arith.constant 6.400000e+01 : f32
    %144 = vector.broadcast %cst_50 : f32 to vector<16x1xf32>
    %145 = arith.divf %143, %144 : vector<16x1xf32>
    %146 = vector.broadcast %145 : vector<16x1xf32> to vector<16x64xf32>
    %147 = arith.subf %139, %146 : vector<16x64xf32>
    %148 = arith.mulf %147, %147 : vector<16x64xf32>
    %cst_51 = arith.constant dense<0.000000e+00> : vector<16xf32>
    %149 = vector.multi_reduction <add>, %148, %cst_51 [1] : vector<16x64xf32> to vector<16xf32>
    %150 = vector.shape_cast %149 : vector<16xf32> to vector<16x1xf32>
    %cst_52 = arith.constant 6.400000e+01 : f32
    %151 = vector.broadcast %cst_52 : f32 to vector<16x1xf32>
    %152 = arith.divf %150, %151 : vector<16x1xf32>
    %153 = vector.broadcast %145 : vector<16x1xf32> to vector<16x64xf32>
    %154 = arith.subf %139, %153 : vector<16x64xf32>
    %cst_53 = arith.constant 9.99999974E-6 : f32
    %155 = vector.broadcast %cst_53 : f32 to vector<16x1xf32>
    %156 = arith.addf %152, %155 : vector<16x1xf32>
    %157 = math.rsqrt %156 : vector<16x1xf32>
    %158 = vector.broadcast %157 : vector<16x1xf32> to vector<16x64xf32>
    %159 = arith.mulf %154, %158 : vector<16x64xf32>
    %160 = vector.broadcast %140 : vector<1x64xf32> to vector<16x64xf32>
    %161 = arith.mulf %159, %160 : vector<16x64xf32>
    %162 = vector.broadcast %141 : vector<1x64xf32> to vector<16x64xf32>
    %163 = arith.addf %161, %162 : vector<16x64xf32>
    %c0_54 = arith.constant 0 : index
    %c0_55 = arith.constant 0 : index
    %164 = vector.load %arg4[%c0_54, %c0_55] : memref<128x128xbf16, #tpu.memory_space<vmem>>, vector<64x128xbf16>
    %165 = arith.truncf %163 : vector<16x64xf32> to vector<16x64xbf16>
    %cst_56 = arith.constant dense<0.000000e+00> : vector<16x128xf32>
    %166 = tpu.matmul %165, %164, %cst_56 {dimension_numbers = #tpu.dot_dimension_numbers<[1], [0], [0], [1], [0, 0, 1, 1], [], []>} : vector<16x64xbf16>, vector<64x128xbf16>, vector<16x128xf32> -> vector<16x128xf32>
    %c0_57 = arith.constant 0 : index
    %c0_58 = arith.constant 0 : index
    %167 = vector.load %arg8[%c0_57, %c0_58] : memref<3x128xf32, #tpu.memory_space<vmem>>, vector<1x128xf32>
    %168 = vector.broadcast %167 : vector<1x128xf32> to vector<16x128xf32>
    %169 = arith.addf %166, %168 : vector<16x128xf32>
    %cst_59 = arith.constant 0.000000e+00 : f32
    %170 = vector.broadcast %cst_59 : f32 to vector<16x128xf32>
    %171 = arith.maximumf %169, %170 : vector<16x128xf32>
    %c0_60 = arith.constant 0 : index
    %c0_61 = arith.constant 0 : index
    %172 = vector.load %arg5[%c0_60, %c0_61] : memref<256x64xbf16, #tpu.memory_space<vmem>>, vector<128x64xbf16>
    %173 = arith.truncf %171 : vector<16x128xf32> to vector<16x128xbf16>
    %cst_62 = arith.constant dense<0.000000e+00> : vector<16x64xf32>
    %174 = tpu.matmul %173, %172, %cst_62 {dimension_numbers = #tpu.dot_dimension_numbers<[1], [0], [0], [1], [0, 0, 1, 1], [], []>} : vector<16x128xbf16>, vector<128x64xbf16>, vector<16x64xf32> -> vector<16x64xf32>
    %c8 = arith.constant 8 : index
    %c0_63 = arith.constant 0 : index
    %175 = vector.load %arg7[%c8, %c0_63] : memref<26x64xf32, #tpu.memory_space<vmem>>, vector<1x64xf32>
    %176 = vector.broadcast %175 : vector<1x64xf32> to vector<16x64xf32>
    %177 = arith.addf %174, %176 : vector<16x64xf32>
    %178 = arith.addf %163, %177 : vector<16x64xf32>
    %c9 = arith.constant 9 : index
    %c0_64 = arith.constant 0 : index
    %179 = vector.load %arg7[%c9, %c0_64] : memref<26x64xf32, #tpu.memory_space<vmem>>, vector<1x64xf32>
    %c10 = arith.constant 10 : index
    %c0_65 = arith.constant 0 : index
    %180 = vector.load %arg7[%c10, %c0_65] : memref<26x64xf32, #tpu.memory_space<vmem>>, vector<1x64xf32>
    %cst_66 = arith.constant dense<0.000000e+00> : vector<16xf32>
    %181 = vector.multi_reduction <add>, %178, %cst_66 [1] : vector<16x64xf32> to vector<16xf32>
    %182 = vector.shape_cast %181 : vector<16xf32> to vector<16x1xf32>
    %cst_67 = arith.constant 6.400000e+01 : f32
    %183 = vector.broadcast %cst_67 : f32 to vector<16x1xf32>
    %184 = arith.divf %182, %183 : vector<16x1xf32>
    %185 = vector.broadcast %184 : vector<16x1xf32> to vector<16x64xf32>
    %186 = arith.subf %178, %185 : vector<16x64xf32>
    %187 = arith.mulf %186, %186 : vector<16x64xf32>
    %cst_68 = arith.constant dense<0.000000e+00> : vector<16xf32>
    %188 = vector.multi_reduction <add>, %187, %cst_68 [1] : vector<16x64xf32> to vector<16xf32>
    %189 = vector.shape_cast %188 : vector<16xf32> to vector<16x1xf32>
    %cst_69 = arith.constant 6.400000e+01 : f32
    %190 = vector.broadcast %cst_69 : f32 to vector<16x1xf32>
    %191 = arith.divf %189, %190 : vector<16x1xf32>
    %192 = vector.broadcast %184 : vector<16x1xf32> to vector<16x64xf32>
    %193 = arith.subf %178, %192 : vector<16x64xf32>
    %cst_70 = arith.constant 9.99999974E-6 : f32
    %194 = vector.broadcast %cst_70 : f32 to vector<16x1xf32>
    %195 = arith.addf %191, %194 : vector<16x1xf32>
    %196 = math.rsqrt %195 : vector<16x1xf32>
    %197 = vector.broadcast %196 : vector<16x1xf32> to vector<16x64xf32>
    %198 = arith.mulf %193, %197 : vector<16x64xf32>
    %199 = vector.broadcast %179 : vector<1x64xf32> to vector<16x64xf32>
    %200 = arith.mulf %198, %199 : vector<16x64xf32>
    %201 = vector.broadcast %180 : vector<1x64xf32> to vector<16x64xf32>
    %202 = arith.addf %200, %201 : vector<16x64xf32>
    %c256 = arith.constant 256 : index
    %c0_71 = arith.constant 0 : index
    %203 = vector.load %arg3[%c256, %c0_71] : memref<768x64xbf16, #tpu.memory_space<vmem>>, vector<64x64xbf16>
    %204 = arith.truncf %17 : vector<34x64xf32> to vector<34x64xbf16>
    %cst_72 = arith.constant dense<0.000000e+00> : vector<34x64xf32>
    %205 = tpu.matmul %204, %203, %cst_72 {dimension_numbers = #tpu.dot_dimension_numbers<[1], [0], [0], [1], [0, 0, 1, 1], [], []>} : vector<34x64xbf16>, vector<64x64xbf16>, vector<34x64xf32> -> vector<34x64xf32>
    %c11 = arith.constant 11 : index
    %c0_73 = arith.constant 0 : index
    %206 = vector.load %arg7[%c11, %c0_73] : memref<26x64xf32, #tpu.memory_space<vmem>>, vector<1x64xf32>
    %207 = vector.broadcast %206 : vector<1x64xf32> to vector<34x64xf32>
    %208 = arith.addf %205, %207 : vector<34x64xf32>
    %c320 = arith.constant 320 : index
    %c0_74 = arith.constant 0 : index
    %209 = vector.load %arg3[%c320, %c0_74] : memref<768x64xbf16, #tpu.memory_space<vmem>>, vector<64x64xbf16>
    %210 = arith.truncf %17 : vector<34x64xf32> to vector<34x64xbf16>
    %cst_75 = arith.constant dense<0.000000e+00> : vector<34x64xf32>
    %211 = tpu.matmul %210, %209, %cst_75 {dimension_numbers = #tpu.dot_dimension_numbers<[1], [0], [0], [1], [0, 0, 1, 1], [], []>} : vector<34x64xbf16>, vector<64x64xbf16>, vector<34x64xf32> -> vector<34x64xf32>
    %c12 = arith.constant 12 : index
    %c0_76 = arith.constant 0 : index
    %212 = vector.load %arg7[%c12, %c0_76] : memref<26x64xf32, #tpu.memory_space<vmem>>, vector<1x64xf32>
    %213 = vector.broadcast %212 : vector<1x64xf32> to vector<34x64xf32>
    %214 = arith.addf %211, %213 : vector<34x64xf32>
    %c384 = arith.constant 384 : index
    %c0_77 = arith.constant 0 : index
    %215 = vector.load %arg3[%c384, %c0_77] : memref<768x64xbf16, #tpu.memory_space<vmem>>, vector<64x64xbf16>
    %216 = arith.truncf %17 : vector<34x64xf32> to vector<34x64xbf16>
    %cst_78 = arith.constant dense<0.000000e+00> : vector<34x64xf32>
    %217 = tpu.matmul %216, %215, %cst_78 {dimension_numbers = #tpu.dot_dimension_numbers<[1], [0], [0], [1], [0, 0, 1, 1], [], []>} : vector<34x64xbf16>, vector<64x64xbf16>, vector<34x64xf32> -> vector<34x64xf32>
    %c13 = arith.constant 13 : index
    %c0_79 = arith.constant 0 : index
    %218 = vector.load %arg7[%c13, %c0_79] : memref<26x64xf32, #tpu.memory_space<vmem>>, vector<1x64xf32>
    %219 = vector.broadcast %218 : vector<1x64xf32> to vector<34x64xf32>
    %220 = arith.addf %217, %219 : vector<34x64xf32>
    %221 = tpu.iota {dimensions = array<i32: 0>} : vector<17x17xi32>
    %222 = tpu.iota {dimensions = array<i32: 1>} : vector<17x17xi32>
    %223 = arith.cmpi sle, %222, %221 : vector<17x17xi32>
    %224 = vector.extract_strided_slice %208 {offsets = [0, 0], sizes = [17, 64], strides = [1, 1]} : vector<34x64xf32> to vector<17x64xf32>
    %225 = vector.extract_strided_slice %214 {offsets = [0, 0], sizes = [17, 64], strides = [1, 1]} : vector<34x64xf32> to vector<17x64xf32>
    %226 = vector.extract_strided_slice %220 {offsets = [0, 0], sizes = [17, 64], strides = [1, 1]} : vector<34x64xf32> to vector<17x64xf32>
    %227 = vector.extract_strided_slice %224 {offsets = [0, 0], sizes = [17, 32], strides = [1, 1]} : vector<17x64xf32> to vector<17x32xf32>
    %228 = arith.truncf %227 : vector<17x32xf32> to vector<17x32xbf16>
    %229 = vector.extract_strided_slice %225 {offsets = [0, 0], sizes = [17, 32], strides = [1, 1]} : vector<17x64xf32> to vector<17x32xf32>
    %230 = arith.truncf %229 : vector<17x32xf32> to vector<17x32xbf16>
    %231 = tpu.transpose %230, [1, 0] : vector<17x32xbf16> -> vector<32x17xbf16>
    %cst_80 = arith.constant dense<0.000000e+00> : vector<17x17xf32>
    %232 = tpu.matmul %228, %231, %cst_80 {dimension_numbers = #tpu.dot_dimension_numbers<[1], [0], [0], [1], [0, 0, 1, 1], [], []>} : vector<17x32xbf16>, vector<32x17xbf16>, vector<17x17xf32> -> vector<17x17xf32>
    %cst_81 = arith.constant 0.176776692 : f32
    %233 = vector.broadcast %cst_81 : f32 to vector<17x17xf32>
    %234 = arith.mulf %232, %233 : vector<17x17xf32>
    %cst_82 = arith.constant -1.000000e+30 : f32
    %235 = vector.broadcast %cst_82 : f32 to vector<17x17xf32>
    %236 = arith.select %223, %234, %235 : vector<17x17xi1>, vector<17x17xf32>
    %cst_83 = arith.constant dense<0xFF800000> : vector<17xf32>
    %237 = vector.multi_reduction <maximumf>, %236, %cst_83 [1] : vector<17x17xf32> to vector<17xf32>
    %238 = vector.shape_cast %237 : vector<17xf32> to vector<17x1xf32>
    %239 = vector.broadcast %238 : vector<17x1xf32> to vector<17x17xf32>
    %240 = arith.subf %236, %239 : vector<17x17xf32>
    %241 = math.exp %240 : vector<17x17xf32>
    %cst_84 = arith.constant dense<0.000000e+00> : vector<17xf32>
    %242 = vector.multi_reduction <add>, %241, %cst_84 [1] : vector<17x17xf32> to vector<17xf32>
    %243 = vector.shape_cast %242 : vector<17xf32> to vector<17x1xf32>
    %244 = tpu.reciprocal %243 {approx = true} : vector<17x1xf32> -> vector<17x1xf32>
    %245 = vector.broadcast %244 : vector<17x1xf32> to vector<17x17xf32>
    %246 = arith.mulf %241, %245 : vector<17x17xf32>
    %247 = arith.truncf %246 : vector<17x17xf32> to vector<17x17xbf16>
    %248 = vector.extract_strided_slice %226 {offsets = [0, 0], sizes = [17, 32], strides = [1, 1]} : vector<17x64xf32> to vector<17x32xf32>
    %249 = arith.truncf %248 : vector<17x32xf32> to vector<17x32xbf16>
    %cst_85 = arith.constant dense<0.000000e+00> : vector<17x32xf32>
    %250 = tpu.matmul %247, %249, %cst_85 {dimension_numbers = #tpu.dot_dimension_numbers<[1], [0], [0], [1], [0, 0, 1, 1], [], []>} : vector<17x17xbf16>, vector<17x32xbf16>, vector<17x32xf32> -> vector<17x32xf32>
    %251 = vector.extract_strided_slice %224 {offsets = [0, 32], sizes = [17, 32], strides = [1, 1]} : vector<17x64xf32> to vector<17x32xf32>
    %252 = arith.truncf %251 : vector<17x32xf32> to vector<17x32xbf16>
    %253 = vector.extract_strided_slice %225 {offsets = [0, 32], sizes = [17, 32], strides = [1, 1]} : vector<17x64xf32> to vector<17x32xf32>
    %254 = arith.truncf %253 : vector<17x32xf32> to vector<17x32xbf16>
    %255 = tpu.transpose %254, [1, 0] : vector<17x32xbf16> -> vector<32x17xbf16>
    %cst_86 = arith.constant dense<0.000000e+00> : vector<17x17xf32>
    %256 = tpu.matmul %252, %255, %cst_86 {dimension_numbers = #tpu.dot_dimension_numbers<[1], [0], [0], [1], [0, 0, 1, 1], [], []>} : vector<17x32xbf16>, vector<32x17xbf16>, vector<17x17xf32> -> vector<17x17xf32>
    %cst_87 = arith.constant 0.176776692 : f32
    %257 = vector.broadcast %cst_87 : f32 to vector<17x17xf32>
    %258 = arith.mulf %256, %257 : vector<17x17xf32>
    %cst_88 = arith.constant -1.000000e+30 : f32
    %259 = vector.broadcast %cst_88 : f32 to vector<17x17xf32>
    %260 = arith.select %223, %258, %259 : vector<17x17xi1>, vector<17x17xf32>
    %cst_89 = arith.constant dense<0xFF800000> : vector<17xf32>
    %261 = vector.multi_reduction <maximumf>, %260, %cst_89 [1] : vector<17x17xf32> to vector<17xf32>
    %262 = vector.shape_cast %261 : vector<17xf32> to vector<17x1xf32>
    %263 = vector.broadcast %262 : vector<17x1xf32> to vector<17x17xf32>
    %264 = arith.subf %260, %263 : vector<17x17xf32>
    %265 = math.exp %264 : vector<17x17xf32>
    %cst_90 = arith.constant dense<0.000000e+00> : vector<17xf32>
    %266 = vector.multi_reduction <add>, %265, %cst_90 [1] : vector<17x17xf32> to vector<17xf32>
    %267 = vector.shape_cast %266 : vector<17xf32> to vector<17x1xf32>
    %268 = tpu.reciprocal %267 {approx = true} : vector<17x1xf32> -> vector<17x1xf32>
    %269 = vector.broadcast %268 : vector<17x1xf32> to vector<17x17xf32>
    %270 = arith.mulf %265, %269 : vector<17x17xf32>
    %271 = arith.truncf %270 : vector<17x17xf32> to vector<17x17xbf16>
    %272 = vector.extract_strided_slice %226 {offsets = [0, 32], sizes = [17, 32], strides = [1, 1]} : vector<17x64xf32> to vector<17x32xf32>
    %273 = arith.truncf %272 : vector<17x32xf32> to vector<17x32xbf16>
    %cst_91 = arith.constant dense<0.000000e+00> : vector<17x32xf32>
    %274 = tpu.matmul %271, %273, %cst_91 {dimension_numbers = #tpu.dot_dimension_numbers<[1], [0], [0], [1], [0, 0, 1, 1], [], []>} : vector<17x17xbf16>, vector<17x32xbf16>, vector<17x32xf32> -> vector<17x32xf32>
    %275 = tpu.concatenate %250, %274 in 1 : vector<17x32xf32>, vector<17x32xf32> -> vector<17x64xf32>
    %276 = vector.extract_strided_slice %208 {offsets = [17, 0], sizes = [17, 64], strides = [1, 1]} : vector<34x64xf32> to vector<17x64xf32>
    %277 = vector.extract_strided_slice %214 {offsets = [17, 0], sizes = [17, 64], strides = [1, 1]} : vector<34x64xf32> to vector<17x64xf32>
    %278 = vector.extract_strided_slice %220 {offsets = [17, 0], sizes = [17, 64], strides = [1, 1]} : vector<34x64xf32> to vector<17x64xf32>
    %279 = vector.extract_strided_slice %276 {offsets = [0, 0], sizes = [17, 32], strides = [1, 1]} : vector<17x64xf32> to vector<17x32xf32>
    %280 = arith.truncf %279 : vector<17x32xf32> to vector<17x32xbf16>
    %281 = vector.extract_strided_slice %277 {offsets = [0, 0], sizes = [17, 32], strides = [1, 1]} : vector<17x64xf32> to vector<17x32xf32>
    %282 = arith.truncf %281 : vector<17x32xf32> to vector<17x32xbf16>
    %283 = tpu.transpose %282, [1, 0] : vector<17x32xbf16> -> vector<32x17xbf16>
    %cst_92 = arith.constant dense<0.000000e+00> : vector<17x17xf32>
    %284 = tpu.matmul %280, %283, %cst_92 {dimension_numbers = #tpu.dot_dimension_numbers<[1], [0], [0], [1], [0, 0, 1, 1], [], []>} : vector<17x32xbf16>, vector<32x17xbf16>, vector<17x17xf32> -> vector<17x17xf32>
    %cst_93 = arith.constant 0.176776692 : f32
    %285 = vector.broadcast %cst_93 : f32 to vector<17x17xf32>
    %286 = arith.mulf %284, %285 : vector<17x17xf32>
    %cst_94 = arith.constant -1.000000e+30 : f32
    %287 = vector.broadcast %cst_94 : f32 to vector<17x17xf32>
    %288 = arith.select %223, %286, %287 : vector<17x17xi1>, vector<17x17xf32>
    %cst_95 = arith.constant dense<0xFF800000> : vector<17xf32>
    %289 = vector.multi_reduction <maximumf>, %288, %cst_95 [1] : vector<17x17xf32> to vector<17xf32>
    %290 = vector.shape_cast %289 : vector<17xf32> to vector<17x1xf32>
    %291 = vector.broadcast %290 : vector<17x1xf32> to vector<17x17xf32>
    %292 = arith.subf %288, %291 : vector<17x17xf32>
    %293 = math.exp %292 : vector<17x17xf32>
    %cst_96 = arith.constant dense<0.000000e+00> : vector<17xf32>
    %294 = vector.multi_reduction <add>, %293, %cst_96 [1] : vector<17x17xf32> to vector<17xf32>
    %295 = vector.shape_cast %294 : vector<17xf32> to vector<17x1xf32>
    %296 = tpu.reciprocal %295 {approx = true} : vector<17x1xf32> -> vector<17x1xf32>
    %297 = vector.broadcast %296 : vector<17x1xf32> to vector<17x17xf32>
    %298 = arith.mulf %293, %297 : vector<17x17xf32>
    %299 = arith.truncf %298 : vector<17x17xf32> to vector<17x17xbf16>
    %300 = vector.extract_strided_slice %278 {offsets = [0, 0], sizes = [17, 32], strides = [1, 1]} : vector<17x64xf32> to vector<17x32xf32>
    %301 = arith.truncf %300 : vector<17x32xf32> to vector<17x32xbf16>
    %cst_97 = arith.constant dense<0.000000e+00> : vector<17x32xf32>
    %302 = tpu.matmul %299, %301, %cst_97 {dimension_numbers = #tpu.dot_dimension_numbers<[1], [0], [0], [1], [0, 0, 1, 1], [], []>} : vector<17x17xbf16>, vector<17x32xbf16>, vector<17x32xf32> -> vector<17x32xf32>
    %303 = vector.extract_strided_slice %276 {offsets = [0, 32], sizes = [17, 32], strides = [1, 1]} : vector<17x64xf32> to vector<17x32xf32>
    %304 = arith.truncf %303 : vector<17x32xf32> to vector<17x32xbf16>
    %305 = vector.extract_strided_slice %277 {offsets = [0, 32], sizes = [17, 32], strides = [1, 1]} : vector<17x64xf32> to vector<17x32xf32>
    %306 = arith.truncf %305 : vector<17x32xf32> to vector<17x32xbf16>
    %307 = tpu.transpose %306, [1, 0] : vector<17x32xbf16> -> vector<32x17xbf16>
    %cst_98 = arith.constant dense<0.000000e+00> : vector<17x17xf32>
    %308 = tpu.matmul %304, %307, %cst_98 {dimension_numbers = #tpu.dot_dimension_numbers<[1], [0], [0], [1], [0, 0, 1, 1], [], []>} : vector<17x32xbf16>, vector<32x17xbf16>, vector<17x17xf32> -> vector<17x17xf32>
    %cst_99 = arith.constant 0.176776692 : f32
    %309 = vector.broadcast %cst_99 : f32 to vector<17x17xf32>
    %310 = arith.mulf %308, %309 : vector<17x17xf32>
    %cst_100 = arith.constant -1.000000e+30 : f32
    %311 = vector.broadcast %cst_100 : f32 to vector<17x17xf32>
    %312 = arith.select %223, %310, %311 : vector<17x17xi1>, vector<17x17xf32>
    %cst_101 = arith.constant dense<0xFF800000> : vector<17xf32>
    %313 = vector.multi_reduction <maximumf>, %312, %cst_101 [1] : vector<17x17xf32> to vector<17xf32>
    %314 = vector.shape_cast %313 : vector<17xf32> to vector<17x1xf32>
    %315 = vector.broadcast %314 : vector<17x1xf32> to vector<17x17xf32>
    %316 = arith.subf %312, %315 : vector<17x17xf32>
    %317 = math.exp %316 : vector<17x17xf32>
    %cst_102 = arith.constant dense<0.000000e+00> : vector<17xf32>
    %318 = vector.multi_reduction <add>, %317, %cst_102 [1] : vector<17x17xf32> to vector<17xf32>
    %319 = vector.shape_cast %318 : vector<17xf32> to vector<17x1xf32>
    %320 = tpu.reciprocal %319 {approx = true} : vector<17x1xf32> -> vector<17x1xf32>
    %321 = vector.broadcast %320 : vector<17x1xf32> to vector<17x17xf32>
    %322 = arith.mulf %317, %321 : vector<17x17xf32>
    %323 = arith.truncf %322 : vector<17x17xf32> to vector<17x17xbf16>
    %324 = vector.extract_strided_slice %278 {offsets = [0, 32], sizes = [17, 32], strides = [1, 1]} : vector<17x64xf32> to vector<17x32xf32>
    %325 = arith.truncf %324 : vector<17x32xf32> to vector<17x32xbf16>
    %cst_103 = arith.constant dense<0.000000e+00> : vector<17x32xf32>
    %326 = tpu.matmul %323, %325, %cst_103 {dimension_numbers = #tpu.dot_dimension_numbers<[1], [0], [0], [1], [0, 0, 1, 1], [], []>} : vector<17x17xbf16>, vector<17x32xbf16>, vector<17x32xf32> -> vector<17x32xf32>
    %327 = tpu.concatenate %302, %326 in 1 : vector<17x32xf32>, vector<17x32xf32> -> vector<17x64xf32>
    %328 = tpu.concatenate %275, %327 in 0 : vector<17x64xf32>, vector<17x64xf32> -> vector<34x64xf32>
    %c448 = arith.constant 448 : index
    %c0_104 = arith.constant 0 : index
    %329 = vector.load %arg3[%c448, %c0_104] : memref<768x64xbf16, #tpu.memory_space<vmem>>, vector<64x64xbf16>
    %330 = arith.truncf %328 : vector<34x64xf32> to vector<34x64xbf16>
    %cst_105 = arith.constant dense<0.000000e+00> : vector<34x64xf32>
    %331 = tpu.matmul %330, %329, %cst_105 {dimension_numbers = #tpu.dot_dimension_numbers<[1], [0], [0], [1], [0, 0, 1, 1], [], []>} : vector<34x64xbf16>, vector<64x64xbf16>, vector<34x64xf32> -> vector<34x64xf32>
    %c14 = arith.constant 14 : index
    %c0_106 = arith.constant 0 : index
    %332 = vector.load %arg7[%c14, %c0_106] : memref<26x64xf32, #tpu.memory_space<vmem>>, vector<1x64xf32>
    %333 = vector.broadcast %332 : vector<1x64xf32> to vector<34x64xf32>
    %334 = arith.addf %331, %333 : vector<34x64xf32>
    %335 = arith.addf %17, %334 : vector<34x64xf32>
    %c15 = arith.constant 15 : index
    %c0_107 = arith.constant 0 : index
    %336 = vector.load %arg7[%c15, %c0_107] : memref<26x64xf32, #tpu.memory_space<vmem>>, vector<1x64xf32>
    %c16 = arith.constant 16 : index
    %c0_108 = arith.constant 0 : index
    %337 = vector.load %arg7[%c16, %c0_108] : memref<26x64xf32, #tpu.memory_space<vmem>>, vector<1x64xf32>
    %cst_109 = arith.constant dense<0.000000e+00> : vector<34xf32>
    %338 = vector.multi_reduction <add>, %335, %cst_109 [1] : vector<34x64xf32> to vector<34xf32>
    %339 = vector.shape_cast %338 : vector<34xf32> to vector<34x1xf32>
    %cst_110 = arith.constant 6.400000e+01 : f32
    %340 = vector.broadcast %cst_110 : f32 to vector<34x1xf32>
    %341 = arith.divf %339, %340 : vector<34x1xf32>
    %342 = vector.broadcast %341 : vector<34x1xf32> to vector<34x64xf32>
    %343 = arith.subf %335, %342 : vector<34x64xf32>
    %344 = arith.mulf %343, %343 : vector<34x64xf32>
    %cst_111 = arith.constant dense<0.000000e+00> : vector<34xf32>
    %345 = vector.multi_reduction <add>, %344, %cst_111 [1] : vector<34x64xf32> to vector<34xf32>
    %346 = vector.shape_cast %345 : vector<34xf32> to vector<34x1xf32>
    %cst_112 = arith.constant 6.400000e+01 : f32
    %347 = vector.broadcast %cst_112 : f32 to vector<34x1xf32>
    %348 = arith.divf %346, %347 : vector<34x1xf32>
    %349 = vector.broadcast %341 : vector<34x1xf32> to vector<34x64xf32>
    %350 = arith.subf %335, %349 : vector<34x64xf32>
    %cst_113 = arith.constant 9.99999974E-6 : f32
    %351 = vector.broadcast %cst_113 : f32 to vector<34x1xf32>
    %352 = arith.addf %348, %351 : vector<34x1xf32>
    %353 = math.rsqrt %352 : vector<34x1xf32>
    %354 = vector.broadcast %353 : vector<34x1xf32> to vector<34x64xf32>
    %355 = arith.mulf %350, %354 : vector<34x64xf32>
    %356 = vector.broadcast %336 : vector<1x64xf32> to vector<34x64xf32>
    %357 = arith.mulf %355, %356 : vector<34x64xf32>
    %358 = vector.broadcast %337 : vector<1x64xf32> to vector<34x64xf32>
    %359 = arith.addf %357, %358 : vector<34x64xf32>
    %c512 = arith.constant 512 : index
    %c0_114 = arith.constant 0 : index
    %360 = vector.load %arg3[%c512, %c0_114] : memref<768x64xbf16, #tpu.memory_space<vmem>>, vector<64x64xbf16>
    %361 = arith.truncf %359 : vector<34x64xf32> to vector<34x64xbf16>
    %cst_115 = arith.constant dense<0.000000e+00> : vector<34x64xf32>
    %362 = tpu.matmul %361, %360, %cst_115 {dimension_numbers = #tpu.dot_dimension_numbers<[1], [0], [0], [1], [0, 0, 1, 1], [], []>} : vector<34x64xbf16>, vector<64x64xbf16>, vector<34x64xf32> -> vector<34x64xf32>
    %c17 = arith.constant 17 : index
    %c0_116 = arith.constant 0 : index
    %363 = vector.load %arg7[%c17, %c0_116] : memref<26x64xf32, #tpu.memory_space<vmem>>, vector<1x64xf32>
    %364 = vector.broadcast %363 : vector<1x64xf32> to vector<34x64xf32>
    %365 = arith.addf %362, %364 : vector<34x64xf32>
    %c576 = arith.constant 576 : index
    %c0_117 = arith.constant 0 : index
    %366 = vector.load %arg3[%c576, %c0_117] : memref<768x64xbf16, #tpu.memory_space<vmem>>, vector<64x64xbf16>
    %367 = arith.truncf %202 : vector<16x64xf32> to vector<16x64xbf16>
    %cst_118 = arith.constant dense<0.000000e+00> : vector<16x64xf32>
    %368 = tpu.matmul %367, %366, %cst_118 {dimension_numbers = #tpu.dot_dimension_numbers<[1], [0], [0], [1], [0, 0, 1, 1], [], []>} : vector<16x64xbf16>, vector<64x64xbf16>, vector<16x64xf32> -> vector<16x64xf32>
    %c18 = arith.constant 18 : index
    %c0_119 = arith.constant 0 : index
    %369 = vector.load %arg7[%c18, %c0_119] : memref<26x64xf32, #tpu.memory_space<vmem>>, vector<1x64xf32>
    %370 = vector.broadcast %369 : vector<1x64xf32> to vector<16x64xf32>
    %371 = arith.addf %368, %370 : vector<16x64xf32>
    %c640 = arith.constant 640 : index
    %c0_120 = arith.constant 0 : index
    %372 = vector.load %arg3[%c640, %c0_120] : memref<768x64xbf16, #tpu.memory_space<vmem>>, vector<64x64xbf16>
    %373 = arith.truncf %202 : vector<16x64xf32> to vector<16x64xbf16>
    %cst_121 = arith.constant dense<0.000000e+00> : vector<16x64xf32>
    %374 = tpu.matmul %373, %372, %cst_121 {dimension_numbers = #tpu.dot_dimension_numbers<[1], [0], [0], [1], [0, 0, 1, 1], [], []>} : vector<16x64xbf16>, vector<64x64xbf16>, vector<16x64xf32> -> vector<16x64xf32>
    %c19 = arith.constant 19 : index
    %c0_122 = arith.constant 0 : index
    %375 = vector.load %arg7[%c19, %c0_122] : memref<26x64xf32, #tpu.memory_space<vmem>>, vector<1x64xf32>
    %376 = vector.broadcast %375 : vector<1x64xf32> to vector<16x64xf32>
    %377 = arith.addf %374, %376 : vector<16x64xf32>
    %378 = vector.extract_strided_slice %365 {offsets = [0, 0], sizes = [17, 64], strides = [1, 1]} : vector<34x64xf32> to vector<17x64xf32>
    %379 = vector.extract_strided_slice %371 {offsets = [0, 0], sizes = [8, 64], strides = [1, 1]} : vector<16x64xf32> to vector<8x64xf32>
    %380 = vector.extract_strided_slice %377 {offsets = [0, 0], sizes = [8, 64], strides = [1, 1]} : vector<16x64xf32> to vector<8x64xf32>
    %381 = vector.extract_strided_slice %378 {offsets = [0, 0], sizes = [17, 32], strides = [1, 1]} : vector<17x64xf32> to vector<17x32xf32>
    %382 = arith.truncf %381 : vector<17x32xf32> to vector<17x32xbf16>
    %383 = vector.extract_strided_slice %379 {offsets = [0, 0], sizes = [8, 32], strides = [1, 1]} : vector<8x64xf32> to vector<8x32xf32>
    %384 = arith.truncf %383 : vector<8x32xf32> to vector<8x32xbf16>
    %385 = tpu.transpose %384, [1, 0] : vector<8x32xbf16> -> vector<32x8xbf16>
    %cst_123 = arith.constant dense<0.000000e+00> : vector<17x8xf32>
    %386 = tpu.matmul %382, %385, %cst_123 {dimension_numbers = #tpu.dot_dimension_numbers<[1], [0], [0], [1], [0, 0, 1, 1], [], []>} : vector<17x32xbf16>, vector<32x8xbf16>, vector<17x8xf32> -> vector<17x8xf32>
    %cst_124 = arith.constant 0.176776692 : f32
    %387 = vector.broadcast %cst_124 : f32 to vector<17x8xf32>
    %388 = arith.mulf %386, %387 : vector<17x8xf32>
    %cst_125 = arith.constant dense<0xFF800000> : vector<17xf32>
    %389 = vector.multi_reduction <maximumf>, %388, %cst_125 [1] : vector<17x8xf32> to vector<17xf32>
    %390 = vector.shape_cast %389 : vector<17xf32> to vector<17x1xf32>
    %391 = vector.broadcast %390 : vector<17x1xf32> to vector<17x8xf32>
    %392 = arith.subf %388, %391 : vector<17x8xf32>
    %393 = math.exp %392 : vector<17x8xf32>
    %cst_126 = arith.constant dense<0.000000e+00> : vector<17xf32>
    %394 = vector.multi_reduction <add>, %393, %cst_126 [1] : vector<17x8xf32> to vector<17xf32>
    %395 = vector.shape_cast %394 : vector<17xf32> to vector<17x1xf32>
    %396 = tpu.reciprocal %395 {approx = true} : vector<17x1xf32> -> vector<17x1xf32>
    %397 = vector.broadcast %396 : vector<17x1xf32> to vector<17x8xf32>
    %398 = arith.mulf %393, %397 : vector<17x8xf32>
    %399 = arith.truncf %398 : vector<17x8xf32> to vector<17x8xbf16>
    %400 = vector.extract_strided_slice %380 {offsets = [0, 0], sizes = [8, 32], strides = [1, 1]} : vector<8x64xf32> to vector<8x32xf32>
    %401 = arith.truncf %400 : vector<8x32xf32> to vector<8x32xbf16>
    %cst_127 = arith.constant dense<0.000000e+00> : vector<17x32xf32>
    %402 = tpu.matmul %399, %401, %cst_127 {dimension_numbers = #tpu.dot_dimension_numbers<[1], [0], [0], [1], [0, 0, 1, 1], [], []>} : vector<17x8xbf16>, vector<8x32xbf16>, vector<17x32xf32> -> vector<17x32xf32>
    %403 = vector.extract_strided_slice %378 {offsets = [0, 32], sizes = [17, 32], strides = [1, 1]} : vector<17x64xf32> to vector<17x32xf32>
    %404 = arith.truncf %403 : vector<17x32xf32> to vector<17x32xbf16>
    %405 = vector.extract_strided_slice %379 {offsets = [0, 32], sizes = [8, 32], strides = [1, 1]} : vector<8x64xf32> to vector<8x32xf32>
    %406 = arith.truncf %405 : vector<8x32xf32> to vector<8x32xbf16>
    %407 = tpu.transpose %406, [1, 0] : vector<8x32xbf16> -> vector<32x8xbf16>
    %cst_128 = arith.constant dense<0.000000e+00> : vector<17x8xf32>
    %408 = tpu.matmul %404, %407, %cst_128 {dimension_numbers = #tpu.dot_dimension_numbers<[1], [0], [0], [1], [0, 0, 1, 1], [], []>} : vector<17x32xbf16>, vector<32x8xbf16>, vector<17x8xf32> -> vector<17x8xf32>
    %cst_129 = arith.constant 0.176776692 : f32
    %409 = vector.broadcast %cst_129 : f32 to vector<17x8xf32>
    %410 = arith.mulf %408, %409 : vector<17x8xf32>
    %cst_130 = arith.constant dense<0xFF800000> : vector<17xf32>
    %411 = vector.multi_reduction <maximumf>, %410, %cst_130 [1] : vector<17x8xf32> to vector<17xf32>
    %412 = vector.shape_cast %411 : vector<17xf32> to vector<17x1xf32>
    %413 = vector.broadcast %412 : vector<17x1xf32> to vector<17x8xf32>
    %414 = arith.subf %410, %413 : vector<17x8xf32>
    %415 = math.exp %414 : vector<17x8xf32>
    %cst_131 = arith.constant dense<0.000000e+00> : vector<17xf32>
    %416 = vector.multi_reduction <add>, %415, %cst_131 [1] : vector<17x8xf32> to vector<17xf32>
    %417 = vector.shape_cast %416 : vector<17xf32> to vector<17x1xf32>
    %418 = tpu.reciprocal %417 {approx = true} : vector<17x1xf32> -> vector<17x1xf32>
    %419 = vector.broadcast %418 : vector<17x1xf32> to vector<17x8xf32>
    %420 = arith.mulf %415, %419 : vector<17x8xf32>
    %421 = arith.truncf %420 : vector<17x8xf32> to vector<17x8xbf16>
    %422 = vector.extract_strided_slice %380 {offsets = [0, 32], sizes = [8, 32], strides = [1, 1]} : vector<8x64xf32> to vector<8x32xf32>
    %423 = arith.truncf %422 : vector<8x32xf32> to vector<8x32xbf16>
    %cst_132 = arith.constant dense<0.000000e+00> : vector<17x32xf32>
    %424 = tpu.matmul %421, %423, %cst_132 {dimension_numbers = #tpu.dot_dimension_numbers<[1], [0], [0], [1], [0, 0, 1, 1], [], []>} : vector<17x8xbf16>, vector<8x32xbf16>, vector<17x32xf32> -> vector<17x32xf32>
    %425 = tpu.concatenate %402, %424 in 1 : vector<17x32xf32>, vector<17x32xf32> -> vector<17x64xf32>
    %426 = vector.extract_strided_slice %365 {offsets = [17, 0], sizes = [17, 64], strides = [1, 1]} : vector<34x64xf32> to vector<17x64xf32>
    %427 = vector.extract_strided_slice %371 {offsets = [8, 0], sizes = [8, 64], strides = [1, 1]} : vector<16x64xf32> to vector<8x64xf32>
    %428 = vector.extract_strided_slice %377 {offsets = [8, 0], sizes = [8, 64], strides = [1, 1]} : vector<16x64xf32> to vector<8x64xf32>
    %429 = vector.extract_strided_slice %426 {offsets = [0, 0], sizes = [17, 32], strides = [1, 1]} : vector<17x64xf32> to vector<17x32xf32>
    %430 = arith.truncf %429 : vector<17x32xf32> to vector<17x32xbf16>
    %431 = vector.extract_strided_slice %427 {offsets = [0, 0], sizes = [8, 32], strides = [1, 1]} : vector<8x64xf32> to vector<8x32xf32>
    %432 = arith.truncf %431 : vector<8x32xf32> to vector<8x32xbf16>
    %433 = tpu.transpose %432, [1, 0] : vector<8x32xbf16> -> vector<32x8xbf16>
    %cst_133 = arith.constant dense<0.000000e+00> : vector<17x8xf32>
    %434 = tpu.matmul %430, %433, %cst_133 {dimension_numbers = #tpu.dot_dimension_numbers<[1], [0], [0], [1], [0, 0, 1, 1], [], []>} : vector<17x32xbf16>, vector<32x8xbf16>, vector<17x8xf32> -> vector<17x8xf32>
    %cst_134 = arith.constant 0.176776692 : f32
    %435 = vector.broadcast %cst_134 : f32 to vector<17x8xf32>
    %436 = arith.mulf %434, %435 : vector<17x8xf32>
    %cst_135 = arith.constant dense<0xFF800000> : vector<17xf32>
    %437 = vector.multi_reduction <maximumf>, %436, %cst_135 [1] : vector<17x8xf32> to vector<17xf32>
    %438 = vector.shape_cast %437 : vector<17xf32> to vector<17x1xf32>
    %439 = vector.broadcast %438 : vector<17x1xf32> to vector<17x8xf32>
    %440 = arith.subf %436, %439 : vector<17x8xf32>
    %441 = math.exp %440 : vector<17x8xf32>
    %cst_136 = arith.constant dense<0.000000e+00> : vector<17xf32>
    %442 = vector.multi_reduction <add>, %441, %cst_136 [1] : vector<17x8xf32> to vector<17xf32>
    %443 = vector.shape_cast %442 : vector<17xf32> to vector<17x1xf32>
    %444 = tpu.reciprocal %443 {approx = true} : vector<17x1xf32> -> vector<17x1xf32>
    %445 = vector.broadcast %444 : vector<17x1xf32> to vector<17x8xf32>
    %446 = arith.mulf %441, %445 : vector<17x8xf32>
    %447 = arith.truncf %446 : vector<17x8xf32> to vector<17x8xbf16>
    %448 = vector.extract_strided_slice %428 {offsets = [0, 0], sizes = [8, 32], strides = [1, 1]} : vector<8x64xf32> to vector<8x32xf32>
    %449 = arith.truncf %448 : vector<8x32xf32> to vector<8x32xbf16>
    %cst_137 = arith.constant dense<0.000000e+00> : vector<17x32xf32>
    %450 = tpu.matmul %447, %449, %cst_137 {dimension_numbers = #tpu.dot_dimension_numbers<[1], [0], [0], [1], [0, 0, 1, 1], [], []>} : vector<17x8xbf16>, vector<8x32xbf16>, vector<17x32xf32> -> vector<17x32xf32>
    %451 = vector.extract_strided_slice %426 {offsets = [0, 32], sizes = [17, 32], strides = [1, 1]} : vector<17x64xf32> to vector<17x32xf32>
    %452 = arith.truncf %451 : vector<17x32xf32> to vector<17x32xbf16>
    %453 = vector.extract_strided_slice %427 {offsets = [0, 32], sizes = [8, 32], strides = [1, 1]} : vector<8x64xf32> to vector<8x32xf32>
    %454 = arith.truncf %453 : vector<8x32xf32> to vector<8x32xbf16>
    %455 = tpu.transpose %454, [1, 0] : vector<8x32xbf16> -> vector<32x8xbf16>
    %cst_138 = arith.constant dense<0.000000e+00> : vector<17x8xf32>
    %456 = tpu.matmul %452, %455, %cst_138 {dimension_numbers = #tpu.dot_dimension_numbers<[1], [0], [0], [1], [0, 0, 1, 1], [], []>} : vector<17x32xbf16>, vector<32x8xbf16>, vector<17x8xf32> -> vector<17x8xf32>
    %cst_139 = arith.constant 0.176776692 : f32
    %457 = vector.broadcast %cst_139 : f32 to vector<17x8xf32>
    %458 = arith.mulf %456, %457 : vector<17x8xf32>
    %cst_140 = arith.constant dense<0xFF800000> : vector<17xf32>
    %459 = vector.multi_reduction <maximumf>, %458, %cst_140 [1] : vector<17x8xf32> to vector<17xf32>
    %460 = vector.shape_cast %459 : vector<17xf32> to vector<17x1xf32>
    %461 = vector.broadcast %460 : vector<17x1xf32> to vector<17x8xf32>
    %462 = arith.subf %458, %461 : vector<17x8xf32>
    %463 = math.exp %462 : vector<17x8xf32>
    %cst_141 = arith.constant dense<0.000000e+00> : vector<17xf32>
    %464 = vector.multi_reduction <add>, %463, %cst_141 [1] : vector<17x8xf32> to vector<17xf32>
    %465 = vector.shape_cast %464 : vector<17xf32> to vector<17x1xf32>
    %466 = tpu.reciprocal %465 {approx = true} : vector<17x1xf32> -> vector<17x1xf32>
    %467 = vector.broadcast %466 : vector<17x1xf32> to vector<17x8xf32>
    %468 = arith.mulf %463, %467 : vector<17x8xf32>
    %469 = arith.truncf %468 : vector<17x8xf32> to vector<17x8xbf16>
    %470 = vector.extract_strided_slice %428 {offsets = [0, 32], sizes = [8, 32], strides = [1, 1]} : vector<8x64xf32> to vector<8x32xf32>
    %471 = arith.truncf %470 : vector<8x32xf32> to vector<8x32xbf16>
    %cst_142 = arith.constant dense<0.000000e+00> : vector<17x32xf32>
    %472 = tpu.matmul %469, %471, %cst_142 {dimension_numbers = #tpu.dot_dimension_numbers<[1], [0], [0], [1], [0, 0, 1, 1], [], []>} : vector<17x8xbf16>, vector<8x32xbf16>, vector<17x32xf32> -> vector<17x32xf32>
    %473 = tpu.concatenate %450, %472 in 1 : vector<17x32xf32>, vector<17x32xf32> -> vector<17x64xf32>
    %474 = tpu.concatenate %425, %473 in 0 : vector<17x64xf32>, vector<17x64xf32> -> vector<34x64xf32>
    %c704 = arith.constant 704 : index
    %c0_143 = arith.constant 0 : index
    %475 = vector.load %arg3[%c704, %c0_143] : memref<768x64xbf16, #tpu.memory_space<vmem>>, vector<64x64xbf16>
    %476 = arith.truncf %474 : vector<34x64xf32> to vector<34x64xbf16>
    %cst_144 = arith.constant dense<0.000000e+00> : vector<34x64xf32>
    %477 = tpu.matmul %476, %475, %cst_144 {dimension_numbers = #tpu.dot_dimension_numbers<[1], [0], [0], [1], [0, 0, 1, 1], [], []>} : vector<34x64xbf16>, vector<64x64xbf16>, vector<34x64xf32> -> vector<34x64xf32>
    %c20 = arith.constant 20 : index
    %c0_145 = arith.constant 0 : index
    %478 = vector.load %arg7[%c20, %c0_145] : memref<26x64xf32, #tpu.memory_space<vmem>>, vector<1x64xf32>
    %479 = vector.broadcast %478 : vector<1x64xf32> to vector<34x64xf32>
    %480 = arith.addf %477, %479 : vector<34x64xf32>
    %481 = arith.addf %359, %480 : vector<34x64xf32>
    %c21 = arith.constant 21 : index
    %c0_146 = arith.constant 0 : index
    %482 = vector.load %arg7[%c21, %c0_146] : memref<26x64xf32, #tpu.memory_space<vmem>>, vector<1x64xf32>
    %c22 = arith.constant 22 : index
    %c0_147 = arith.constant 0 : index
    %483 = vector.load %arg7[%c22, %c0_147] : memref<26x64xf32, #tpu.memory_space<vmem>>, vector<1x64xf32>
    %cst_148 = arith.constant dense<0.000000e+00> : vector<34xf32>
    %484 = vector.multi_reduction <add>, %481, %cst_148 [1] : vector<34x64xf32> to vector<34xf32>
    %485 = vector.shape_cast %484 : vector<34xf32> to vector<34x1xf32>
    %cst_149 = arith.constant 6.400000e+01 : f32
    %486 = vector.broadcast %cst_149 : f32 to vector<34x1xf32>
    %487 = arith.divf %485, %486 : vector<34x1xf32>
    %488 = vector.broadcast %487 : vector<34x1xf32> to vector<34x64xf32>
    %489 = arith.subf %481, %488 : vector<34x64xf32>
    %490 = arith.mulf %489, %489 : vector<34x64xf32>
    %cst_150 = arith.constant dense<0.000000e+00> : vector<34xf32>
    %491 = vector.multi_reduction <add>, %490, %cst_150 [1] : vector<34x64xf32> to vector<34xf32>
    %492 = vector.shape_cast %491 : vector<34xf32> to vector<34x1xf32>
    %cst_151 = arith.constant 6.400000e+01 : f32
    %493 = vector.broadcast %cst_151 : f32 to vector<34x1xf32>
    %494 = arith.divf %492, %493 : vector<34x1xf32>
    %495 = vector.broadcast %487 : vector<34x1xf32> to vector<34x64xf32>
    %496 = arith.subf %481, %495 : vector<34x64xf32>
    %cst_152 = arith.constant 9.99999974E-6 : f32
    %497 = vector.broadcast %cst_152 : f32 to vector<34x1xf32>
    %498 = arith.addf %494, %497 : vector<34x1xf32>
    %499 = math.rsqrt %498 : vector<34x1xf32>
    %500 = vector.broadcast %499 : vector<34x1xf32> to vector<34x64xf32>
    %501 = arith.mulf %496, %500 : vector<34x64xf32>
    %502 = vector.broadcast %482 : vector<1x64xf32> to vector<34x64xf32>
    %503 = arith.mulf %501, %502 : vector<34x64xf32>
    %504 = vector.broadcast %483 : vector<1x64xf32> to vector<34x64xf32>
    %505 = arith.addf %503, %504 : vector<34x64xf32>
    %c64_153 = arith.constant 64 : index
    %c0_154 = arith.constant 0 : index
    %506 = vector.load %arg4[%c64_153, %c0_154] : memref<128x128xbf16, #tpu.memory_space<vmem>>, vector<64x128xbf16>
    %507 = arith.truncf %505 : vector<34x64xf32> to vector<34x64xbf16>
    %cst_155 = arith.constant dense<0.000000e+00> : vector<34x128xf32>
    %508 = tpu.matmul %507, %506, %cst_155 {dimension_numbers = #tpu.dot_dimension_numbers<[1], [0], [0], [1], [0, 0, 1, 1], [], []>} : vector<34x64xbf16>, vector<64x128xbf16>, vector<34x128xf32> -> vector<34x128xf32>
    %c1_156 = arith.constant 1 : index
    %c0_157 = arith.constant 0 : index
    %509 = vector.load %arg8[%c1_156, %c0_157] : memref<3x128xf32, #tpu.memory_space<vmem>>, vector<1x128xf32>
    %510 = vector.broadcast %509 : vector<1x128xf32> to vector<34x128xf32>
    %511 = arith.addf %508, %510 : vector<34x128xf32>
    %cst_158 = arith.constant 0.000000e+00 : f32
    %512 = vector.broadcast %cst_158 : f32 to vector<34x128xf32>
    %513 = arith.maximumf %511, %512 : vector<34x128xf32>
    %c128_159 = arith.constant 128 : index
    %c0_160 = arith.constant 0 : index
    %514 = vector.load %arg5[%c128_159, %c0_160] : memref<256x64xbf16, #tpu.memory_space<vmem>>, vector<128x64xbf16>
    %515 = arith.truncf %513 : vector<34x128xf32> to vector<34x128xbf16>
    %cst_161 = arith.constant dense<0.000000e+00> : vector<34x64xf32>
    %516 = tpu.matmul %515, %514, %cst_161 {dimension_numbers = #tpu.dot_dimension_numbers<[1], [0], [0], [1], [0, 0, 1, 1], [], []>} : vector<34x128xbf16>, vector<128x64xbf16>, vector<34x64xf32> -> vector<34x64xf32>
    %c23 = arith.constant 23 : index
    %c0_162 = arith.constant 0 : index
    %517 = vector.load %arg7[%c23, %c0_162] : memref<26x64xf32, #tpu.memory_space<vmem>>, vector<1x64xf32>
    %518 = vector.broadcast %517 : vector<1x64xf32> to vector<34x64xf32>
    %519 = arith.addf %516, %518 : vector<34x64xf32>
    %520 = arith.addf %505, %519 : vector<34x64xf32>
    %c24 = arith.constant 24 : index
    %c0_163 = arith.constant 0 : index
    %521 = vector.load %arg7[%c24, %c0_163] : memref<26x64xf32, #tpu.memory_space<vmem>>, vector<1x64xf32>
    %c25 = arith.constant 25 : index
    %c0_164 = arith.constant 0 : index
    %522 = vector.load %arg7[%c25, %c0_164] : memref<26x64xf32, #tpu.memory_space<vmem>>, vector<1x64xf32>
    %cst_165 = arith.constant dense<0.000000e+00> : vector<34xf32>
    %523 = vector.multi_reduction <add>, %520, %cst_165 [1] : vector<34x64xf32> to vector<34xf32>
    %524 = vector.shape_cast %523 : vector<34xf32> to vector<34x1xf32>
    %cst_166 = arith.constant 6.400000e+01 : f32
    %525 = vector.broadcast %cst_166 : f32 to vector<34x1xf32>
    %526 = arith.divf %524, %525 : vector<34x1xf32>
    %527 = vector.broadcast %526 : vector<34x1xf32> to vector<34x64xf32>
    %528 = arith.subf %520, %527 : vector<34x64xf32>
    %529 = arith.mulf %528, %528 : vector<34x64xf32>
    %cst_167 = arith.constant dense<0.000000e+00> : vector<34xf32>
    %530 = vector.multi_reduction <add>, %529, %cst_167 [1] : vector<34x64xf32> to vector<34xf32>
    %531 = vector.shape_cast %530 : vector<34xf32> to vector<34x1xf32>
    %cst_168 = arith.constant 6.400000e+01 : f32
    %532 = vector.broadcast %cst_168 : f32 to vector<34x1xf32>
    %533 = arith.divf %531, %532 : vector<34x1xf32>
    %534 = vector.broadcast %526 : vector<34x1xf32> to vector<34x64xf32>
    %535 = arith.subf %520, %534 : vector<34x64xf32>
    %cst_169 = arith.constant 9.99999974E-6 : f32
    %536 = vector.broadcast %cst_169 : f32 to vector<34x1xf32>
    %537 = arith.addf %533, %536 : vector<34x1xf32>
    %538 = math.rsqrt %537 : vector<34x1xf32>
    %539 = vector.broadcast %538 : vector<34x1xf32> to vector<34x64xf32>
    %540 = arith.mulf %535, %539 : vector<34x64xf32>
    %541 = vector.broadcast %521 : vector<1x64xf32> to vector<34x64xf32>
    %542 = arith.mulf %540, %541 : vector<34x64xf32>
    %543 = vector.broadcast %522 : vector<1x64xf32> to vector<34x64xf32>
    %544 = arith.addf %542, %543 : vector<34x64xf32>
    %c0_170 = arith.constant 0 : index
    %c0_171 = arith.constant 0 : index
    %545 = vector.load %arg6[%c0_170, %c0_171] : memref<64x128xbf16, #tpu.memory_space<vmem>>, vector<64x128xbf16>
    %546 = arith.truncf %544 : vector<34x64xf32> to vector<34x64xbf16>
    %cst_172 = arith.constant dense<0.000000e+00> : vector<34x128xf32>
    %547 = tpu.matmul %546, %545, %cst_172 {dimension_numbers = #tpu.dot_dimension_numbers<[1], [0], [0], [1], [0, 0, 1, 1], [], []>} : vector<34x64xbf16>, vector<64x128xbf16>, vector<34x128xf32> -> vector<34x128xf32>
    %c2_173 = arith.constant 2 : index
    %c0_174 = arith.constant 0 : index
    %548 = vector.load %arg8[%c2_173, %c0_174] : memref<3x128xf32, #tpu.memory_space<vmem>>, vector<1x128xf32>
    %549 = vector.broadcast %548 : vector<1x128xf32> to vector<34x128xf32>
    %550 = arith.addf %547, %549 : vector<34x128xf32>
    %c0_175 = arith.constant 0 : index
    %c0_176 = arith.constant 0 : index
    %551 = vector.load %arg11[%c0_175, %c0_176] : memref<34x128xf32, #tpu.memory_space<vmem>>, vector<34x128xf32>
    tpu.vector_store %arg11[%c0_175, %c0_176], %550 {strides = array<i32>} : memref<34x128xf32, #tpu.memory_space<vmem>>, vector<34x128xf32>,
    return
  }
}

</mosaic_0001>

<llo_original>
// kernel: tpu_custom_call.1
$region0: #{tpu_custom_call.1}
  #allocation0 [shape = 'u32[]', space=smem, size = 0x4, offset = 0x4, fixed_abs, tag = 'smem constant byte address 0x4 - core index']
  #allocation1 [shape = 'u32[144,128]{1,0:T(1,128)}', space=vmem, size = 0x12000, scoped, tag = 'internal scratch']
  %s0 = inlined_call_operand.vmem [shape: f32[16,32], index: 0, kind: input, shape index: {}]
  %s1 = inlined_call_operand.vmem [shape: f32[34,32], index: 1, kind: input, shape index: {}]
  %s2 = inlined_call_operand.vmem [shape: bf16[64,64], index: 2, kind: input, shape index: {}]
  %s3 = inlined_call_operand.vmem [shape: bf16[768,64], index: 3, kind: input, shape index: {}]
  %s4 = inlined_call_operand.vmem [shape: bf16[128,128], index: 4, kind: input, shape index: {}]
  %s5 = inlined_call_operand.vmem [shape: bf16[256,64], index: 5, kind: input, shape index: {}]
  %s6 = inlined_call_operand.vmem [shape: bf16[64,128], index: 6, kind: input, shape index: {}]
  %s7 = inlined_call_operand.vmem [shape: f32[26,64], index: 7, kind: input, shape index: {}]
  %s8 = inlined_call_operand.vmem [shape: f32[3,128], index: 8, kind: input, shape index: {}]
  %s9 = inlined_call_operand.vmem [shape: f32[16,64], index: 9, kind: input, shape index: {}]
  %s10 = inlined_call_operand.vmem [shape: f32[34,64], index: 10, kind: input, shape index: {}]
  %s11 = inlined_call_operand.hbm [shape: f32[34,128], index: 11, kind: output, shape index: {}]
  %s12 = sld [smem:[#allocation0]]
  $region54: #{tpu_custom_call.1} parent=0
    _
  %s14 = ssub.s32 1, %s12
  %s15 = scalar_select 0, %s14, %s12
  $region1: #{tpu_custom_call.1} parent=0
    #allocation2 [shape = 'u8[20480]{0}', space=vmem, size = 0x5000, scoped, tag = 'output window, operand 0, single buffered']
    #allocation3 [shape = 's32[1]{0}', space=sflag, size = 0x4, scoped, tag = 'scoped memory for tpu_custom_call.1']
    %16 = vsyncpa [#allocation3], 0
    // Predicated region
    $region2: #{tpu_custom_call.1} parent=1 // pred_check
      _
    $region3: #{tpu_custom_call.1} parent=1 // pred_check_branch
      %18 = sbr.rel (0) target = $region5
    $region4: #{tpu_custom_call.1} parent=1 // pred_region
      _
    $region5: #{tpu_custom_call.1} parent=1 // pred_fallthru
      _
    // Predicated region
    $region6: #{tpu_custom_call.1} parent=1 // pred_check
      _
    $region7: #{tpu_custom_call.1} parent=1 // pred_check_branch
      %20 = sbr.rel (0) target = $region9
    $region8: #{tpu_custom_call.1} parent=1 // pred_region
      _
    $region9: #{tpu_custom_call.1} parent=1 // pred_fallthru
      _
    // Predicated region
    $region10: #{tpu_custom_call.1} parent=1 // pred_check
      _
    $region11: #{tpu_custom_call.1} parent=1 // pred_check_branch
      %22 = sbr.rel (0) target = $region13
    $region12: #{tpu_custom_call.1} parent=1 // pred_region
      _
    $region13: #{tpu_custom_call.1} parent=1 // pred_fallthru
      _
    // Predicated region
    $region14: #{tpu_custom_call.1} parent=1 // pred_check
      _
    $region15: #{tpu_custom_call.1} parent=1 // pred_check_branch
      %24 = sbr.rel (0) target = $region17
    $region16: #{tpu_custom_call.1} parent=1 // pred_region
      _
    $region17: #{tpu_custom_call.1} parent=1 // pred_fallthru
      _
    // Predicated region
    $region18: #{tpu_custom_call.1} parent=1 // pred_check
      _
    $region19: #{tpu_custom_call.1} parent=1 // pred_check_branch
      %26 = sbr.rel (0) target = $region21
    $region20: #{tpu_custom_call.1} parent=1 // pred_region
      _
    $region21: #{tpu_custom_call.1} parent=1 // pred_fallthru
      _
    // Predicated region
    $region22: #{tpu_custom_call.1} parent=1 // pred_check
      _
    $region23: #{tpu_custom_call.1} parent=1 // pred_check_branch
      %28 = sbr.rel (0) target = $region25
    $region24: #{tpu_custom_call.1} parent=1 // pred_region
      _
    $region25: #{tpu_custom_call.1} parent=1 // pred_fallthru
      _
    // Predicated region
    $region26: #{tpu_custom_call.1} parent=1 // pred_check
      _
    $region27: #{tpu_custom_call.1} parent=1 // pred_check_branch
      %30 = sbr.rel (0) target = $region29
    $region28: #{tpu_custom_call.1} parent=1 // pred_region
      _
    $region29: #{tpu_custom_call.1} parent=1 // pred_fallthru
      _
    // Predicated region
    $region30: #{tpu_custom_call.1} parent=1 // pred_check
      _
    $region31: #{tpu_custom_call.1} parent=1 // pred_check_branch
      %32 = sbr.rel (0) target = $region33
    $region32: #{tpu_custom_call.1} parent=1 // pred_region
      _
    $region33: #{tpu_custom_call.1} parent=1 // pred_fallthru
      _
    // Predicated region
    $region34: #{tpu_custom_call.1} parent=1 // pred_check
      _
    $region35: #{tpu_custom_call.1} parent=1 // pred_check_branch
      %34 = sbr.rel (0) target = $region37
    $region36: #{tpu_custom_call.1} parent=1 // pred_region
      _
    $region37: #{tpu_custom_call.1} parent=1 // pred_fallthru
      _
    // Predicated region
    $region38: #{tpu_custom_call.1} parent=1 // pred_check
      _
    $region39: #{tpu_custom_call.1} parent=1 // pred_check_branch
      %36 = sbr.rel (0) target = $region41
    $region40: #{tpu_custom_call.1} parent=1 // pred_region
      _
    $region41: #{tpu_custom_call.1} parent=1 // pred_fallthru
      _
    // Predicated region
    $region42: #{tpu_custom_call.1} parent=1 // pred_check
      _
    $region43: #{tpu_custom_call.1} parent=1 // pred_check_branch
      %38 = sbr.rel (0) target = $region45
    $region44: #{tpu_custom_call.1} parent=1 // pred_region
      _
    $region45: #{tpu_custom_call.1} parent=1 // pred_fallthru
      _
    %v40 = vld [vmem:[%s0] sm:$0xff]
    %v41 = vld [vmem:[%s0 + $0x8] sm:$0xff]
    %v42 = vld [vmem:[%s1] sm:$0xff]
    %v43 = vld [vmem:[%s1 + $0x8] sm:$0xff]
    %v44 = vld [vmem:[%s1 + $0x10] sm:$0xff]
    %v45 = vld [vmem:[%s1 + $0x18] sm:$0xff]
    %v46 = vld [vmem:[%s1 + $0x20] sm:$0x3]
    %v47 = vld [vmem:[%s2] sm:$0xf]
    %v48 = vld [vmem:[%s2 + $0x4] sm:$0xf]
    %v49 = vld [vmem:[%s2 + $0x8] sm:$0xf]
    %v50 = vld [vmem:[%s2 + $0xc] sm:$0xf]
    %v51 = vpack.c.bf16 %v41, %v40
    %v52 = vld [vmem:[%s7] sm:$0x1]
    %v53 = vlaneseq
    %v54 = vshrl.u32 %v53, 7
    %v55 = vsub.s32 0, %v54
    %v56 = vrot.slane %v52, %v55
    %v61 = vunpack.c.l.b16 %v47
    %v62 = vunpack.c.l.b16 %v48
    %v63 = vunpack.c.l.b16 %v49
    %v64 = vunpack.c.l.b16 %v50
    %v65 = vpack.c.b16 %v62, %v61
    %v66 = vpack.c.b16 %v64, %v63
    %vm69 = vcmask 261120
    %v71 = vsel %vm69, %v51, 0
    %73 = vmatprep.subr.bf16.mxu0 0
    %74 = vmatpush1.bf16.msra.mxu0 0
    %75 = vmatprep.subr.bf16.mxu0 0
    %76 = vmatpush1.bf16.msra.mxu0 0
    %77 = vmatprep.subr.bf16.mxu0 0
    %78 = vmatpush1.bf16.msra.mxu0 0
    %79 = vmatprep.subr.bf16.mxu0 0
    %80 = vmatpush1.bf16.msra.mxu0 0
    %81 = vmatprep.subr.bf16.mxu0 0
    %82 = vmatpush1.bf16.msra.mxu0 0
    %83 = vmatprep.subr.bf16.mxu0 0
    %84 = vmatpush1.bf16.msra.mxu0 0
    %85 = vmatprep.subr.bf16.mxu0 0
    %86 = vmatpush1.bf16.msra.mxu0 %v66
    %87 = vmatprep.subr.bf16.mxu0 0
    %88 = vmatpush1.bf16.msra.mxu0 %v65
    %89 = vmatprep.subr.bf16.mxu0 0
    %90 = vmatpush2.bf16.msra.mxu0 0
    %91 = vmatprep.subr.bf16.mxu0 0
    %92 = vmatpush2.bf16.msra.mxu0 0
    %93 = vmatprep.subr.bf16.mxu0 0
    %94 = vmatpush2.bf16.msra.mxu0 0
    %95 = vmatprep.subr.bf16.mxu0 0
    %96 = vmatpush2.bf16.msra.mxu0 0
    %97 = vmatprep.subr.bf16.mxu0 0
    %98 = vmatpush2.bf16.msra.mxu0 0
    %99 = vmatprep.subr.bf16.mxu0 0
    %100 = vmatpush2.bf16.msra.mxu0 0
    %101 = vmatprep.subr.bf16.mxu0 0
    %102 = vmatpush2.bf16.msra.mxu0 0
    %103 = vmatprep.subr.bf16.mxu0 0
    %104 = vmatpush2.bf16.msra.mxu0 0
    %105 = vmatprep.mubr.bf16.mxu0 0
    %106 = vmatmul.mubr.bf16.gmra.mxu0 %v71
    %v107 = vpop.f32.mrf.mxu0
    %v108 = vadd.f32 %v56, %v107
    %v109 = vpop.f32.mrf.mxu0
    %v110 = vpop.f32.mrf.mxu0
    %v111 = vadd.f32 %v56, %v110
    %v112 = vpop.f32.mrf.mxu0
    %113 = vdwg.mxu0
    %v114 = vld [vmem:[%s9] sm:$0xff]
    %v115 = vld [vmem:[%s9 + $0x8] sm:$0xff]
    %v116 = vadd.f32 %v108, %v114
    %v117 = vadd.f32 %v111, %v115
    %v118 = vld [vmem:[%s2 + $0x10] sm:$0xf]
    %v119 = vld [vmem:[%s2 + $0x14] sm:$0xf]
    %v120 = vld [vmem:[%s2 + $0x18] sm:$0xf]
    %v121 = vld [vmem:[%s2 + $0x1c] sm:$0xf]
    %v122 = vpack.c.bf16 %v43, %v42
    %v123 = vpack.c.bf16 %v45, %v44
    %v124 = vpack.c.bf16 %v46, %v46
    %v125 = vld [vmem:[%s7 + $0x1] sm:$0x1]
    %v126 = vlaneseq
    %v127 = vshrl.u32 %v126, 7
    %v128 = vsub.s32 0, %v127
    %v129 = vrot.slane %v125, %v128
    %v134 = vunpack.c.l.b16 %v118
    %v135 = vunpack.c.l.b16 %v119
    %v136 = vunpack.c.l.b16 %v120
    %v137 = vunpack.c.l.b16 %v121
    %v138 = vpack.c.b16 %v135, %v134
    %v139 = vpack.c.b16 %v137, %v136
    %v143 = vsel %vm69, %v122, 0
    %v146 = vsel %vm69, %v123, 0
    %v149 = vsel %vm69, %v124, 0
    %151 = vmatprep.subr.bf16.mxu0 0
    %152 = vmatpush1.bf16.msra.mxu0 0
    %153 = vmatprep.subr.bf16.mxu0 0
    %154 = vmatpush1.bf16.msra.mxu0 0
    %155 = vmatprep.subr.bf16.mxu0 0
    %156 = vmatpush1.bf16.msra.mxu0 0
    %157 = vmatprep.subr.bf16.mxu0 0
    %158 = vmatpush1.bf16.msra.mxu0 0
    %159 = vmatprep.subr.bf16.mxu0 0
    %160 = vmatpush1.bf16.msra.mxu0 0
    %161 = vmatprep.subr.bf16.mxu0 0
    %162 = vmatpush1.bf16.msra.mxu0 0
    %163 = vmatprep.subr.bf16.mxu0 0
    %164 = vmatpush1.bf16.msra.mxu0 %v139
    %165 = vmatprep.subr.bf16.mxu0 0
    %166 = vmatpush1.bf16.msra.mxu0 %v138
    %167 = vmatprep.subr.bf16.mxu0 0
    %168 = vmatpush2.bf16.msra.mxu0 0
    %169 = vmatprep.subr.bf16.mxu0 0
    %170 = vmatpush2.bf16.msra.mxu0 0
    %171 = vmatprep.subr.bf16.mxu0 0
    %172 = vmatpush2.bf16.msra.mxu0 0
    %173 = vmatprep.subr.bf16.mxu0 0
    %174 = vmatpush2.bf16.msra.mxu0 0
    %175 = vmatprep.subr.bf16.mxu0 0
    %176 = vmatpush2.bf16.msra.mxu0 0
    %177 = vmatprep.subr.bf16.mxu0 0
    %178 = vmatpush2.bf16.msra.mxu0 0
    %179 = vmatprep.subr.bf16.mxu0 0
    %180 = vmatpush2.bf16.msra.mxu0 0
    %181 = vmatprep.subr.bf16.mxu0 0
    %182 = vmatpush2.bf16.msra.mxu0 0
    %183 = vmatprep.mubr.bf16.mxu0 0
    %184 = vmatmul.mubr.bf16.gmra.mxu0 %v143
    %v185 = vpop.f32.mrf.mxu0
    %v186 = vadd.f32 %v129, %v185
    %v187 = vpop.f32.mrf.mxu0
    %v188 = vpop.f32.mrf.mxu0
    %v189 = vadd.f32 %v129, %v188
    %v190 = vpop.f32.mrf.mxu0
    %191 = vmatprep.mubr.bf16.mxu0 0
    %192 = vmatmul.mubr.bf16.gmra.mxu0 %v146
    %v193 = vpop.f32.mrf.mxu0
    %v194 = vadd.f32 %v129, %v193
    %v195 = vpop.f32.mrf.mxu0
    %v196 = vpop.f32.mrf.mxu0
    %v197 = vadd.f32 %v129, %v196
    %v198 = vpop.f32.mrf.mxu0
    %199 = vmatprep.mubr.bf16.mxu0 0
    %200 = vmatmul.mubr.bf16.gmra.mxu0 %v149
    %v201 = vpop.f32.mrf.mxu0
    %v202 = vadd.f32 %v129, %v201
    %v203 = vpop.f32.mrf.mxu0
    %v204 = vpop.f32.mrf.mxu0
    %v205 = vpop.f32.mrf.mxu0
    %206 = vdwg.mxu0
    %v207 = vld [vmem:[%s10] sm:$0xff]
    %v208 = vld [vmem:[%s10 + $0x8] sm:$0xff]
    %v209 = vld [vmem:[%s10 + $0x10] sm:$0xff]
    %v210 = vld [vmem:[%s10 + $0x18] sm:$0xff]
    %v211 = vld [vmem:[%s10 + $0x20] sm:$0x3]
    %v212 = vadd.f32 %v186, %v207
    %v213 = vadd.f32 %v189, %v208
    %v214 = vadd.f32 %v194, %v209
    %v215 = vadd.f32 %v197, %v210
    %v216 = vadd.f32 %v202, %v211
    %v217 = vld [vmem:[%s3] sm:$0xf]
    %v218 = vld [vmem:[%s3 + $0x4] sm:$0xf]
    %v219 = vld [vmem:[%s3 + $0x8] sm:$0xf]
    %v220 = vld [vmem:[%s3 + $0xc] sm:$0xf]
    %v221 = vld [vmem:[%s3 + $0x10] sm:$0xf]
    %v222 = vld [vmem:[%s3 + $0x14] sm:$0xf]
    %v223 = vld [vmem:[%s3 + $0x18] sm:$0xf]
    %v224 = vld [vmem:[%s3 + $0x1c] sm:$0xf]
    %v225 = vpack.c.bf16 %v117, %v116
    %v226 = vld [vmem:[%s7 + $0x2] sm:$0x1]
    %v227 = vlaneseq
    %v228 = vshrl.u32 %v227, 7
    %v229 = vsub.s32 0, %v228
    %v230 = vrot.slane %v226, %v229
    %v239 = vunpack.c.l.b16 %v217
    %v240 = vunpack.c.l.b16 %v218
    %v241 = vunpack.c.l.b16 %v219
    %v242 = vunpack.c.l.b16 %v220
    %v243 = vunpack.c.l.b16 %v221
    %v244 = vunpack.c.l.b16 %v222
    %v245 = vunpack.c.l.b16 %v223
    %v246 = vunpack.c.l.b16 %v224
    %v247 = vpack.c.b16 %v240, %v239
    %v248 = vpack.c.b16 %v242, %v241
    %v249 = vpack.c.b16 %v244, %v243
    %v250 = vpack.c.b16 %v246, %v245
    %vm255 = vcmask 523264
    %v257 = vsel %vm255, %v225, 0
    %259 = vmatprep.subr.bf16.mxu0 0
    %260 = vmatpush1.bf16.msra.mxu0 0
    %261 = vmatprep.subr.bf16.mxu0 0
    %262 = vmatpush1.bf16.msra.mxu0 0
    %263 = vmatprep.subr.bf16.mxu0 0
    %264 = vmatpush1.bf16.msra.mxu0 0
    %265 = vmatprep.subr.bf16.mxu0 0
    %266 = vmatpush1.bf16.msra.mxu0 0
    %267 = vmatprep.subr.bf16.mxu0 0
    %268 = vmatpush1.bf16.msra.mxu0 %v250
    %269 = vmatprep.subr.bf16.mxu0 0
    %270 = vmatpush1.bf16.msra.mxu0 %v249
    %271 = vmatprep.subr.bf16.mxu0 0
    %272 = vmatpush1.bf16.msra.mxu0 %v248
    %273 = vmatprep.subr.bf16.mxu0 0
    %274 = vmatpush1.bf16.msra.mxu0 %v247
    %275 = vmatprep.subr.bf16.mxu0 0
    %276 = vmatpush2.bf16.msra.mxu0 0
    %277 = vmatprep.subr.bf16.mxu0 0
    %278 = vmatpush2.bf16.msra.mxu0 0
    %279 = vmatprep.subr.bf16.mxu0 0
    %280 = vmatpush2.bf16.msra.mxu0 0
    %281 = vmatprep.subr.bf16.mxu0 0
    %282 = vmatpush2.bf16.msra.mxu0 0
    %283 = vmatprep.subr.bf16.mxu0 0
    %284 = vmatpush2.bf16.msra.mxu0 0
    %285 = vmatprep.subr.bf16.mxu0 0
    %286 = vmatpush2.bf16.msra.mxu0 0
    %287 = vmatprep.subr.bf16.mxu0 0
    %288 = vmatpush2.bf16.msra.mxu0 0
    %289 = vmatprep.subr.bf16.mxu0 0
    %290 = vmatpush2.bf16.msra.mxu0 0
    %291 = vmatprep.mubr.bf16.mxu0 0
    %292 = vmatmul.mubr.bf16.gmra.mxu0 %v257
    %v293 = vpop.f32.mrf.mxu0
    %v294 = vadd.f32 %v230, %v293
    %v295 = vpop.f32.mrf.mxu0
    %v296 = vpop.f32.mrf.mxu0
    %v297 = vadd.f32 %v230, %v296
    %v298 = vpop.f32.mrf.mxu0
    %299 = vdwg.mxu0
    %v300 = vld [vmem:[%s3 + $0x20] sm:$0xf]
    %v301 = vld [vmem:[%s3 + $0x24] sm:$0xf]
    %v302 = vld [vmem:[%s3 + $0x28] sm:$0xf]
    %v303 = vld [vmem:[%s3 + $0x2c] sm:$0xf]
    %v304 = vld [vmem:[%s3 + $0x30] sm:$0xf]
    %v305 = vld [vmem:[%s3 + $0x34] sm:$0xf]
    %v306 = vld [vmem:[%s3 + $0x38] sm:$0xf]
    %v307 = vld [vmem:[%s3 + $0x3c] sm:$0xf]
    %v308 = vld [vmem:[%s7 + $0x3] sm:$0x1]
    %v309 = vlaneseq
    %v310 = vshrl.u32 %v309, 7
    %v311 = vsub.s32 0, %v310
    %v312 = vrot.slane %v308, %v311
    %v321 = vunpack.c.l.b16 %v300
    %v322 = vunpack.c.l.b16 %v301
    %v323 = vunpack.c.l.b16 %v302
    %v324 = vunpack.c.l.b16 %v303
    %v325 = vunpack.c.l.b16 %v304
    %v326 = vunpack.c.l.b16 %v305
    %v327 = vunpack.c.l.b16 %v306
    %v328 = vunpack.c.l.b16 %v307
    %v329 = vpack.c.b16 %v322, %v321
    %v330 = vpack.c.b16 %v324, %v323
    %v331 = vpack.c.b16 %v326, %v325
    %v332 = vpack.c.b16 %v328, %v327
    %337 = vmatprep.subr.bf16.mxu0 0
    %338 = vmatpush1.bf16.msra.mxu0 0
    %339 = vmatprep.subr.bf16.mxu0 0
    %340 = vmatpush1.bf16.msra.mxu0 0
    %341 = vmatprep.subr.bf16.mxu0 0
    %342 = vmatpush1.bf16.msra.mxu0 0
    %343 = vmatprep.subr.bf16.mxu0 0
    %344 = vmatpush1.bf16.msra.mxu0 0
    %345 = vmatprep.subr.bf16.mxu0 0
    %346 = vmatpush1.bf16.msra.mxu0 %v332
    %347 = vmatprep.subr.bf16.mxu0 0
    %348 = vmatpush1.bf16.msra.mxu0 %v331
    %349 = vmatprep.subr.bf16.mxu0 0
    %350 = vmatpush1.bf16.msra.mxu0 %v330
    %351 = vmatprep.subr.bf16.mxu0 0
    %352 = vmatpush1.bf16.msra.mxu0 %v329
    %353 = vmatprep.subr.bf16.mxu0 0
    %354 = vmatpush2.bf16.msra.mxu0 0
    %355 = vmatprep.subr.bf16.mxu0 0
    %356 = vmatpush2.bf16.msra.mxu0 0
    %357 = vmatprep.subr.bf16.mxu0 0
    %358 = vmatpush2.bf16.msra.mxu0 0
    %359 = vmatprep.subr.bf16.mxu0 0
    %360 = vmatpush2.bf16.msra.mxu0 0
    %361 = vmatprep.subr.bf16.mxu0 0
    %362 = vmatpush2.bf16.msra.mxu0 0
    %363 = vmatprep.subr.bf16.mxu0 0
    %364 = vmatpush2.bf16.msra.mxu0 0
    %365 = vmatprep.subr.bf16.mxu0 0
    %366 = vmatpush2.bf16.msra.mxu0 0
    %367 = vmatprep.subr.bf16.mxu0 0
    %368 = vmatpush2.bf16.msra.mxu0 0
    %369 = vmatprep.mubr.bf16.mxu0 0
    %370 = vmatmul.mubr.bf16.gmra.mxu0 %v257
    %v371 = vpop.f32.mrf.mxu0
    %v372 = vadd.f32 %v312, %v371
    %v373 = vpop.f32.mrf.mxu0
    %v374 = vpop.f32.mrf.mxu0
    %v375 = vadd.f32 %v312, %v374
    %v376 = vpop.f32.mrf.mxu0
    %377 = vdwg.mxu0
    %v378 = vld [vmem:[%s3 + $0x40] sm:$0xf]
    %v379 = vld [vmem:[%s3 + $0x44] sm:$0xf]
    %v380 = vld [vmem:[%s3 + $0x48] sm:$0xf]
    %v381 = vld [vmem:[%s3 + $0x4c] sm:$0xf]
    %v382 = vld [vmem:[%s3 + $0x50] sm:$0xf]
    %v383 = vld [vmem:[%s3 + $0x54] sm:$0xf]
    %v384 = vld [vmem:[%s3 + $0x58] sm:$0xf]
    %v385 = vld [vmem:[%s3 + $0x5c] sm:$0xf]
    %v386 = vld [vmem:[%s7 + $0x4] sm:$0x1]
    %v387 = vlaneseq
    %v388 = vshrl.u32 %v387, 7
    %v389 = vsub.s32 0, %v388
    %v390 = vrot.slane %v386, %v389
    %v399 = vunpack.c.l.b16 %v378
    %v400 = vunpack.c.l.b16 %v379
    %v401 = vunpack.c.l.b16 %v380
    %v402 = vunpack.c.l.b16 %v381
    %v403 = vunpack.c.l.b16 %v382
    %v404 = vunpack.c.l.b16 %v383
    %v405 = vunpack.c.l.b16 %v384
    %v406 = vunpack.c.l.b16 %v385
    %v407 = vpack.c.b16 %v400, %v399
    %v408 = vpack.c.b16 %v402, %v401
    %v409 = vpack.c.b16 %v404, %v403
    %v410 = vpack.c.b16 %v406, %v405
    %415 = vmatprep.subr.bf16.mxu0 0
    %416 = vmatpush1.bf16.msra.mxu0 0
    %417 = vmatprep.subr.bf16.mxu0 0
    %418 = vmatpush1.bf16.msra.mxu0 0
    %419 = vmatprep.subr.bf16.mxu0 0
    %420 = vmatpush1.bf16.msra.mxu0 0
    %421 = vmatprep.subr.bf16.mxu0 0
    %422 = vmatpush1.bf16.msra.mxu0 0
    %423 = vmatprep.subr.bf16.mxu0 0
    %424 = vmatpush1.bf16.msra.mxu0 %v410
    %425 = vmatprep.subr.bf16.mxu0 0
    %426 = vmatpush1.bf16.msra.mxu0 %v409
    %427 = vmatprep.subr.bf16.mxu0 0
    %428 = vmatpush1.bf16.msra.mxu0 %v408
    %429 = vmatprep.subr.bf16.mxu0 0
    %430 = vmatpush1.bf16.msra.mxu0 %v407
    %431 = vmatprep.subr.bf16.mxu0 0
    %432 = vmatpush2.bf16.msra.mxu0 0
    %433 = vmatprep.subr.bf16.mxu0 0
    %434 = vmatpush2.bf16.msra.mxu0 0
    %435 = vmatprep.subr.bf16.mxu0 0
    %436 = vmatpush2.bf16.msra.mxu0 0
    %437 = vmatprep.subr.bf16.mxu0 0
    %438 = vmatpush2.bf16.msra.mxu0 0
    %439 = vmatprep.subr.bf16.mxu0 0
    %440 = vmatpush2.bf16.msra.mxu0 0
    %441 = vmatprep.subr.bf16.mxu0 0
    %442 = vmatpush2.bf16.msra.mxu0 0
    %443 = vmatprep.subr.bf16.mxu0 0
    %444 = vmatpush2.bf16.msra.mxu0 0
    %445 = vmatprep.subr.bf16.mxu0 0
    %446 = vmatpush2.bf16.msra.mxu0 0
    %447 = vmatprep.mubr.bf16.mxu0 0
    %448 = vmatmul.mubr.bf16.gmra.mxu0 %v257
    %v449 = vpop.f32.mrf.mxu0
    %v450 = vadd.f32 %v390, %v449
    %v451 = vpop.f32.mrf.mxu0
    %v452 = vpop.f32.mrf.mxu0
    %v453 = vadd.f32 %v390, %v452
    %v454 = vpop.f32.mrf.mxu0
    %455 = vdwg.mxu0
    %v456 = vpack.c.bf16 %v294, %v294
    %v457 = vpack.c.bf16 %v372, %v372
    %v459 = vsel %vm69, %v456, 0
    %v462 = vsel %vm69, %v457, 0
    %464 = vmatprep.subr.bf16.mxu0 0
    %465 = vmatpush1.bf16.xpose.msra.mxu0 0
    %466 = vmatprep.subr.bf16.mxu0 0
    %467 = vmatpush1.bf16.xpose.msra.mxu0 0
    %468 = vmatprep.subr.bf16.mxu0 0
    %469 = vmatpush1.bf16.xpose.msra.mxu0 0
    %470 = vmatprep.subr.bf16.mxu0 0
    %471 = vmatpush1.bf16.xpose.msra.mxu0 0
    %472 = vmatprep.subr.bf16.mxu0 0
    %473 = vmatpush1.bf16.xpose.msra.mxu0 0
    %474 = vmatprep.subr.bf16.mxu0 0
    %475 = vmatpush1.bf16.xpose.msra.mxu0 0
    %476 = vmatprep.subr.bf16.mxu0 0
    %477 = vmatpush1.bf16.xpose.msra.mxu0 0
    %478 = vmatprep.subr.bf16.mxu0 0
    %479 = vmatpush1.bf16.xpose.msra.mxu0 %v462
    %480 = vmatprep.subr.bf16.mxu0 0
    %481 = vmatpush2.bf16.xpose.msra.mxu0 0
    %482 = vmatprep.subr.bf16.mxu0 0
    %483 = vmatpush2.bf16.xpose.msra.mxu0 0
    %484 = vmatprep.subr.bf16.mxu0 0
    %485 = vmatpush2.bf16.xpose.msra.mxu0 0
    %486 = vmatprep.subr.bf16.mxu0 0
    %487 = vmatpush2.bf16.xpose.msra.mxu0 0
    %488 = vmatprep.subr.bf16.mxu0 0
    %489 = vmatpush2.bf16.xpose.msra.mxu0 0
    %490 = vmatprep.subr.bf16.mxu0 0
    %491 = vmatpush2.bf16.xpose.msra.mxu0 0
    %492 = vmatprep.subr.bf16.mxu0 0
    %493 = vmatpush2.bf16.xpose.msra.mxu0 0
    %494 = vmatprep.subr.bf16.mxu0 0
    %495 = vmatpush2.bf16.xpose.msra.mxu0 0
    %496 = vmatprep.mubr.bf16.mxu0 0
    %497 = vmatmul.mubr.bf16.gmra.mxu0 %v459
    %v498 = vpop.f32.mrf.mxu0
    %v499 = vadd.f32 0.0, %v498
    %v500 = vpop.f32.mrf.mxu0
    %v501 = vpop.f32.mrf.mxu0
    %v502 = vpop.f32.mrf.mxu0
    %503 = vdwg.mxu0
    %v504 = vmul.f32 %v499, 0.17677669
    %vm505 = vcmask 64512
    %v506 = vsel %vm505, %v504, -inf
    %507 = vmax.xlane.f32.xlu0 %v506
    %v508 = vpop.xlane.xlu0 %507
    %v509 = vsub.f32 %v504, %v508
    %v510 = vmul.f32 %v509, 1.442695
    %v511 = vpow.pop %v510
    %v512 = vsel %vm505, %v511, 0.0
    %513 = vadd.xlane.f32.xlu0 %v512
    %v514 = vpop.xlane.xlu0 %513
    %v515 = vrcp.pop %v514
    %v516 = vmul.f32 %v511, %v515
    %v517 = vpack.c.bf16 %v516, %v516
    %v518 = vpack.c.bf16 %v450, %v450
    %v520 = vsel %vm505, %v517, 0
    %vm522 = vcmask 1043456
    %v524 = vsel %vm522, %v518, 0
    %526 = vmatprep.subr.bf16.mxu0 0
    %527 = vmatpush1.bf16.msra.mxu0 0
    %528 = vmatprep.subr.bf16.mxu0 0
    %529 = vmatpush1.bf16.msra.mxu0 0
    %530 = vmatprep.subr.bf16.mxu0 0
    %531 = vmatpush1.bf16.msra.mxu0 0
    %532 = vmatprep.subr.bf16.mxu0 0
    %533 = vmatpush1.bf16.msra.mxu0 0
    %534 = vmatprep.subr.bf16.mxu0 0
    %535 = vmatpush1.bf16.msra.mxu0 0
    %536 = vmatprep.subr.bf16.mxu0 0
    %537 = vmatpush1.bf16.msra.mxu0 0
    %538 = vmatprep.subr.bf16.mxu0 0
    %539 = vmatpush1.bf16.msra.mxu0 0
    %540 = vmatprep.subr.bf16.mxu0 0
    %541 = vmatpush1.bf16.msra.mxu0 %v524
    %542 = vmatprep.subr.bf16.mxu0 0
    %543 = vmatpush2.bf16.msra.mxu0 0
    %544 = vmatprep.subr.bf16.mxu0 0
    %545 = vmatpush2.bf16.msra.mxu0 0
    %546 = vmatprep.subr.bf16.mxu0 0
    %547 = vmatpush2.bf16.msra.mxu0 0
    %548 = vmatprep.subr.bf16.mxu0 0
    %549 = vmatpush2.bf16.msra.mxu0 0
    %550 = vmatprep.subr.bf16.mxu0 0
    %551 = vmatpush2.bf16.msra.mxu0 0
    %552 = vmatprep.subr.bf16.mxu0 0
    %553 = vmatpush2.bf16.msra.mxu0 0
    %554 = vmatprep.subr.bf16.mxu0 0
    %555 = vmatpush2.bf16.msra.mxu0 0
    %556 = vmatprep.subr.bf16.mxu0 0
    %557 = vmatpush2.bf16.msra.mxu0 0
    %558 = vmatprep.mubr.bf16.mxu0 0
    %559 = vmatmul.mubr.bf16.gmra.mxu0 %v520
    %v560 = vpop.f32.mrf.mxu0
    %v561 = vadd.f32 0.0, %v560
    %v562 = vpop.f32.mrf.mxu0
    %v563 = vpop.f32.mrf.mxu0
    %v564 = vpop.f32.mrf.mxu0
    %565 = vdwg.mxu0
    %567 = vrot.lane.b32.xlu0 %v456, 96
    %v568 = vpop.permute.xlu0 %567
    %570 = vrot.lane.b32.xlu0 %v457, 96
    %v571 = vpop.permute.xlu0 %570
    %v573 = vsel %vm69, %v568, 0
    %v576 = vsel %vm69, %v571, 0
    %578 = vmatprep.subr.bf16.mxu0 0
    %579 = vmatpush1.bf16.xpose.msra.mxu0 0
    %580 = vmatprep.subr.bf16.mxu0 0
    %581 = vmatpush1.bf16.xpose.msra.mxu0 0
    %582 = vmatprep.subr.bf16.mxu0 0
    %583 = vmatpush1.bf16.xpose.msra.mxu0 0
    %584 = vmatprep.subr.bf16.mxu0 0
    %585 = vmatpush1.bf16.xpose.msra.mxu0 0
    %586 = vmatprep.subr.bf16.mxu0 0
    %587 = vmatpush1.bf16.xpose.msra.mxu0 0
    %588 = vmatprep.subr.bf16.mxu0 0
    %589 = vmatpush1.bf16.xpose.msra.mxu0 0
    %590 = vmatprep.subr.bf16.mxu0 0
    %591 = vmatpush1.bf16.xpose.msra.mxu0 0
    %592 = vmatprep.subr.bf16.mxu0 0
    %593 = vmatpush1.bf16.xpose.msra.mxu0 %v576
    %594 = vmatprep.subr.bf16.mxu0 0
    %595 = vmatpush2.bf16.xpose.msra.mxu0 0
    %596 = vmatprep.subr.bf16.mxu0 0
    %597 = vmatpush2.bf16.xpose.msra.mxu0 0
    %598 = vmatprep.subr.bf16.mxu0 0
    %599 = vmatpush2.bf16.xpose.msra.mxu0 0
    %600 = vmatprep.subr.bf16.mxu0 0
    %601 = vmatpush2.bf16.xpose.msra.mxu0 0
    %602 = vmatprep.subr.bf16.mxu0 0
    %603 = vmatpush2.bf16.xpose.msra.mxu0 0
    %604 = vmatprep.subr.bf16.mxu0 0
    %605 = vmatpush2.bf16.xpose.msra.mxu0 0
    %606 = vmatprep.subr.bf16.mxu0 0
    %607 = vmatpush2.bf16.xpose.msra.mxu0 0
    %608 = vmatprep.subr.bf16.mxu0 0
    %609 = vmatpush2.bf16.xpose.msra.mxu0 0
    %610 = vmatprep.mubr.bf16.mxu0 0
    %611 = vmatmul.mubr.bf16.gmra.mxu0 %v573
    %v612 = vpop.f32.mrf.mxu0
    %v613 = vadd.f32 0.0, %v612
    %v614 = vpop.f32.mrf.mxu0
    %v615 = vpop.f32.mrf.mxu0
    %v616 = vpop.f32.mrf.mxu0
    %617 = vdwg.mxu0
    %v618 = vmul.f32 %v613, 0.17677669
    %v619 = vsel %vm505, %v618, -inf
    %620 = vmax.xlane.f32.xlu0 %v619
    %v621 = vpop.xlane.xlu0 %620
    %v622 = vsub.f32 %v618, %v621
    %v623 = vmul.f32 %v622, 1.442695
    %v624 = vpow.pop %v623
    %v625 = vsel %vm505, %v624, 0.0
    %626 = vadd.xlane.f32.xlu0 %v625
    %v627 = vpop.xlane.xlu0 %626
    %v628 = vrcp.pop %v627
    %v629 = vmul.f32 %v624, %v628
    %v630 = vpack.c.bf16 %v629, %v629
    %632 = vrot.lane.b32.xlu0 %v518, 96
    %v633 = vpop.permute.xlu0 %632
    %v635 = vsel %vm505, %v630, 0
    %v638 = vsel %vm522, %v633, 0
    %640 = vmatprep.subr.bf16.mxu0 0
    %641 = vmatpush1.bf16.msra.mxu0 0
    %642 = vmatprep.subr.bf16.mxu0 0
    %643 = vmatpush1.bf16.msra.mxu0 0
    %644 = vmatprep.subr.bf16.mxu0 0
    %645 = vmatpush1.bf16.msra.mxu0 0
    %646 = vmatprep.subr.bf16.mxu0 0
    %647 = vmatpush1.bf16.msra.mxu0 0
    %648 = vmatprep.subr.bf16.mxu0 0
    %649 = vmatpush1.bf16.msra.mxu0 0
    %650 = vmatprep.subr.bf16.mxu0 0
    %651 = vmatpush1.bf16.msra.mxu0 0
    %652 = vmatprep.subr.bf16.mxu0 0
    %653 = vmatpush1.bf16.msra.mxu0 0
    %654 = vmatprep.subr.bf16.mxu0 0
    %655 = vmatpush1.bf16.msra.mxu0 %v638
    %656 = vmatprep.subr.bf16.mxu0 0
    %657 = vmatpush2.bf16.msra.mxu0 0
    %658 = vmatprep.subr.bf16.mxu0 0
    %659 = vmatpush2.bf16.msra.mxu0 0
    %660 = vmatprep.subr.bf16.mxu0 0
    %661 = vmatpush2.bf16.msra.mxu0 0
    %662 = vmatprep.subr.bf16.mxu0 0
    %663 = vmatpush2.bf16.msra.mxu0 0
    %664 = vmatprep.subr.bf16.mxu0 0
    %665 = vmatpush2.bf16.msra.mxu0 0
    %666 = vmatprep.subr.bf16.mxu0 0
    %667 = vmatpush2.bf16.msra.mxu0 0
    %668 = vmatprep.subr.bf16.mxu0 0
    %669 = vmatpush2.bf16.msra.mxu0 0
    %670 = vmatprep.subr.bf16.mxu0 0
    %671 = vmatpush2.bf16.msra.mxu0 0
    %672 = vmatprep.mubr.bf16.mxu0 0
    %673 = vmatmul.mubr.bf16.gmra.mxu0 %v635
    %v674 = vpop.f32.mrf.mxu0
    %v675 = vadd.f32 0.0, %v674
    %v676 = vpop.f32.mrf.mxu0
    %v677 = vpop.f32.mrf.mxu0
    %v678 = vpop.f32.mrf.mxu0
    %679 = vdwg.mxu0
    %681 = vrot.lane.b32.xlu0 %v675, 32
    %v682 = vpop.permute.xlu0 %681
    %v684 = vsel %vm69, %v561, %v682
    %v685 = vpack.c.bf16 %v297, %v297
    %v686 = vpack.c.bf16 %v375, %v375
    %v688 = vsel %vm69, %v685, 0
    %v691 = vsel %vm69, %v686, 0
    %693 = vmatprep.subr.bf16.mxu0 0
    %694 = vmatpush1.bf16.xpose.msra.mxu0 0
    %695 = vmatprep.subr.bf16.mxu0 0
    %696 = vmatpush1.bf16.xpose.msra.mxu0 0
    %697 = vmatprep.subr.bf16.mxu0 0
    %698 = vmatpush1.bf16.xpose.msra.mxu0 0
    %699 = vmatprep.subr.bf16.mxu0 0
    %700 = vmatpush1.bf16.xpose.msra.mxu0 0
    %701 = vmatprep.subr.bf16.mxu0 0
    %702 = vmatpush1.bf16.xpose.msra.mxu0 0
    %703 = vmatprep.subr.bf16.mxu0 0
    %704 = vmatpush1.bf16.xpose.msra.mxu0 0
    %705 = vmatprep.subr.bf16.mxu0 0
    %706 = vmatpush1.bf16.xpose.msra.mxu0 0
    %707 = vmatprep.subr.bf16.mxu0 0
    %708 = vmatpush1.bf16.xpose.msra.mxu0 %v691
    %709 = vmatprep.subr.bf16.mxu0 0
    %710 = vmatpush2.bf16.xpose.msra.mxu0 0
    %711 = vmatprep.subr.bf16.mxu0 0
    %712 = vmatpush2.bf16.xpose.msra.mxu0 0
    %713 = vmatprep.subr.bf16.mxu0 0
    %714 = vmatpush2.bf16.xpose.msra.mxu0 0
    %715 = vmatprep.subr.bf16.mxu0 0
    %716 = vmatpush2.bf16.xpose.msra.mxu0 0
    %717 = vmatprep.subr.bf16.mxu0 0
    %718 = vmatpush2.bf16.xpose.msra.mxu0 0
    %719 = vmatprep.subr.bf16.mxu0 0
    %720 = vmatpush2.bf16.xpose.msra.mxu0 0
    %721 = vmatprep.subr.bf16.mxu0 0
    %722 = vmatpush2.bf16.xpose.msra.mxu0 0
    %723 = vmatprep.subr.bf16.mxu0 0
    %724 = vmatpush2.bf16.xpose.msra.mxu0 0
    %725 = vmatprep.mubr.bf16.mxu0 0
    %726 = vmatmul.mubr.bf16.gmra.mxu0 %v688
    %v727 = vpop.f32.mrf.mxu0
    %v728 = vadd.f32 0.0, %v727
    %v729 = vpop.f32.mrf.mxu0
    %v730 = vpop.f32.mrf.mxu0
    %v731 = vpop.f32.mrf.mxu0
    %732 = vdwg.mxu0
    %v733 = vmul.f32 %v728, 0.17677669
    %v734 = vsel %vm505, %v733, -inf
    %735 = vmax.xlane.f32.xlu0 %v734
    %v736 = vpop.xlane.xlu0 %735
    %v737 = vsub.f32 %v733, %v736
    %v738 = vmul.f32 %v737, 1.442695
    %v739 = vpow.pop %v738
    %v740 = vsel %vm505, %v739, 0.0
    %741 = vadd.xlane.f32.xlu0 %v740
    %v742 = vpop.xlane.xlu0 %741
    %v743 = vrcp.pop %v742
    %v744 = vmul.f32 %v739, %v743
    %v745 = vpack.c.bf16 %v744, %v744
    %v746 = vpack.c.bf16 %v453, %v453
    %v748 = vsel %vm505, %v745, 0
    %v751 = vsel %vm522, %v746, 0
    %753 = vmatprep.subr.bf16.mxu0 0
    %754 = vmatpush1.bf16.msra.mxu0 0
    %755 = vmatprep.subr.bf16.mxu0 0
    %756 = vmatpush1.bf16.msra.mxu0 0
    %757 = vmatprep.subr.bf16.mxu0 0
    %758 = vmatpush1.bf16.msra.mxu0 0
    %759 = vmatprep.subr.bf16.mxu0 0
    %760 = vmatpush1.bf16.msra.mxu0 0
    %761 = vmatprep.subr.bf16.mxu0 0
    %762 = vmatpush1.bf16.msra.mxu0 0
    %763 = vmatprep.subr.bf16.mxu0 0
    %764 = vmatpush1.bf16.msra.mxu0 0
    %765 = vmatprep.subr.bf16.mxu0 0
    %766 = vmatpush1.bf16.msra.mxu0 0
    %767 = vmatprep.subr.bf16.mxu0 0
    %768 = vmatpush1.bf16.msra.mxu0 %v751
    %769 = vmatprep.subr.bf16.mxu0 0
    %770 = vmatpush2.bf16.msra.mxu0 0
    %771 = vmatprep.subr.bf16.mxu0 0
    %772 = vmatpush2.bf16.msra.mxu0 0
    %773 = vmatprep.subr.bf16.mxu0 0
    %774 = vmatpush2.bf16.msra.mxu0 0
    %775 = vmatprep.subr.bf16.mxu0 0
    %776 = vmatpush2.bf16.msra.mxu0 0
    %777 = vmatprep.subr.bf16.mxu0 0
    %778 = vmatpush2.bf16.msra.mxu0 0
    %779 = vmatprep.subr.bf16.mxu0 0
    %780 = vmatpush2.bf16.msra.mxu0 0
    %781 = vmatprep.subr.bf16.mxu0 0
    %782 = vmatpush2.bf16.msra.mxu0 0
    %783 = vmatprep.subr.bf16.mxu0 0
    %784 = vmatpush2.bf16.msra.mxu0 0
    %785 = vmatprep.mubr.bf16.mxu0 0
    %786 = vmatmul.mubr.bf16.gmra.mxu0 %v748
    %v787 = vpop.f32.mrf.mxu0
    %v788 = vadd.f32 0.0, %v787
    %v789 = vpop.f32.mrf.mxu0
    %v790 = vpop.f32.mrf.mxu0
    %v791 = vpop.f32.mrf.mxu0
    %792 = vdwg.mxu0
    %794 = vrot.lane.b32.xlu0 %v685, 96
    %v795 = vpop.permute.xlu0 %794
    %797 = vrot.lane.b32.xlu0 %v686, 96
    %v798 = vpop.permute.xlu0 %797
    %v800 = vsel %vm69, %v795, 0
    %v803 = vsel %vm69, %v798, 0
    %805 = vmatprep.subr.bf16.mxu0 0
    %806 = vmatpush1.bf16.xpose.msra.mxu0 0
    %807 = vmatprep.subr.bf16.mxu0 0
    %808 = vmatpush1.bf16.xpose.msra.mxu0 0
    %809 = vmatprep.subr.bf16.mxu0 0
    %810 = vmatpush1.bf16.xpose.msra.mxu0 0
    %811 = vmatprep.subr.bf16.mxu0 0
    %812 = vmatpush1.bf16.xpose.msra.mxu0 0
    %813 = vmatprep.subr.bf16.mxu0 0
    %814 = vmatpush1.bf16.xpose.msra.mxu0 0
    %815 = vmatprep.subr.bf16.mxu0 0
    %816 = vmatpush1.bf16.xpose.msra.mxu0 0
    %817 = vmatprep.subr.bf16.mxu0 0
    %818 = vmatpush1.bf16.xpose.msra.mxu0 0
    %819 = vmatprep.subr.bf16.mxu0 0
    %820 = vmatpush1.bf16.xpose.msra.mxu0 %v803
    %821 = vmatprep.subr.bf16.mxu0 0
    %822 = vmatpush2.bf16.xpose.msra.mxu0 0
    %823 = vmatprep.subr.bf16.mxu0 0
    %824 = vmatpush2.bf16.xpose.msra.mxu0 0
    %825 = vmatprep.subr.bf16.mxu0 0
    %826 = vmatpush2.bf16.xpose.msra.mxu0 0
    %827 = vmatprep.subr.bf16.mxu0 0
    %828 = vmatpush2.bf16.xpose.msra.mxu0 0
    %829 = vmatprep.subr.bf16.mxu0 0
    %830 = vmatpush2.bf16.xpose.msra.mxu0 0
    %831 = vmatprep.subr.bf16.mxu0 0
    %832 = vmatpush2.bf16.xpose.msra.mxu0 0
    %833 = vmatprep.subr.bf16.mxu0 0
    %834 = vmatpush2.bf16.xpose.msra.mxu0 0
    %835 = vmatprep.subr.bf16.mxu0 0
    %836 = vmatpush2.bf16.xpose.msra.mxu0 0
    %837 = vmatprep.mubr.bf16.mxu0 0
    %838 = vmatmul.mubr.bf16.gmra.mxu0 %v800
    %v839 = vpop.f32.mrf.mxu0
    %v840 = vadd.f32 0.0, %v839
    %v841 = vpop.f32.mrf.mxu0
    %v842 = vpop.f32.mrf.mxu0
    %v843 = vpop.f32.mrf.mxu0
    %844 = vdwg.mxu0
    %v845 = vmul.f32 %v840, 0.17677669
    %v846 = vsel %vm505, %v845, -inf
    %847 = vmax.xlane.f32.xlu0 %v846
    %v848 = vpop.xlane.xlu0 %847
    %v849 = vsub.f32 %v845, %v848
    %v850 = vmul.f32 %v849, 1.442695
    %v851 = vpow.pop %v850
    %v852 = vsel %vm505, %v851, 0.0
    %853 = vadd.xlane.f32.xlu0 %v852
    %v854 = vpop.xlane.xlu0 %853
    %v855 = vrcp.pop %v854
    %v856 = vmul.f32 %v851, %v855
    %v857 = vpack.c.bf16 %v856, %v856
    %859 = vrot.lane.b32.xlu0 %v746, 96
    %v860 = vpop.permute.xlu0 %859
    %v862 = vsel %vm505, %v857, 0
    %v865 = vsel %vm522, %v860, 0
    %867 = vmatprep.subr.bf16.mxu0 0
    %868 = vmatpush1.bf16.msra.mxu0 0
    %869 = vmatprep.subr.bf16.mxu0 0
    %870 = vmatpush1.bf16.msra.mxu0 0
    %871 = vmatprep.subr.bf16.mxu0 0
    %872 = vmatpush1.bf16.msra.mxu0 0
    %873 = vmatprep.subr.bf16.mxu0 0
    %874 = vmatpush1.bf16.msra.mxu0 0
    %875 = vmatprep.subr.bf16.mxu0 0
    %876 = vmatpush1.bf16.msra.mxu0 0
    %877 = vmatprep.subr.bf16.mxu0 0
    %878 = vmatpush1.bf16.msra.mxu0 0
    %879 = vmatprep.subr.bf16.mxu0 0
    %880 = vmatpush1.bf16.msra.mxu0 0
    %881 = vmatprep.subr.bf16.mxu0 0
    %882 = vmatpush1.bf16.msra.mxu0 %v865
    %883 = vmatprep.subr.bf16.mxu0 0
    %884 = vmatpush2.bf16.msra.mxu0 0
    %885 = vmatprep.subr.bf16.mxu0 0
    %886 = vmatpush2.bf16.msra.mxu0 0
    %887 = vmatprep.subr.bf16.mxu0 0
    %888 = vmatpush2.bf16.msra.mxu0 0
    %889 = vmatprep.subr.bf16.mxu0 0
    %890 = vmatpush2.bf16.msra.mxu0 0
    %891 = vmatprep.subr.bf16.mxu0 0
    %892 = vmatpush2.bf16.msra.mxu0 0
    %893 = vmatprep.subr.bf16.mxu0 0
    %894 = vmatpush2.bf16.msra.mxu0 0
    %895 = vmatprep.subr.bf16.mxu0 0
    %896 = vmatpush2.bf16.msra.mxu0 0
    %897 = vmatprep.subr.bf16.mxu0 0
    %898 = vmatpush2.bf16.msra.mxu0 0
    %899 = vmatprep.mubr.bf16.mxu0 0
    %900 = vmatmul.mubr.bf16.gmra.mxu0 %v862
    %v901 = vpop.f32.mrf.mxu0
    %v902 = vadd.f32 0.0, %v901
    %v903 = vpop.f32.mrf.mxu0
    %v904 = vpop.f32.mrf.mxu0
    %v905 = vpop.f32.mrf.mxu0
    %906 = vdwg.mxu0
    %908 = vrot.lane.b32.xlu0 %v902, 32
    %v909 = vpop.permute.xlu0 %908
    %v911 = vsel %vm69, %v788, %v909
    %v912 = vld [vmem:[%s3 + $0x60] sm:$0xf]
    %v913 = vld [vmem:[%s3 + $0x64] sm:$0xf]
    %v914 = vld [vmem:[%s3 + $0x68] sm:$0xf]
    %v915 = vld [vmem:[%s3 + $0x6c] sm:$0xf]
    %v916 = vld [vmem:[%s3 + $0x70] sm:$0xf]
    %v917 = vld [vmem:[%s3 + $0x74] sm:$0xf]
    %v918 = vld [vmem:[%s3 + $0x78] sm:$0xf]
    %v919 = vld [vmem:[%s3 + $0x7c] sm:$0xf]
    %v920 = vpack.c.bf16 %v911, %v684
    %v921 = vld [vmem:[%s7 + $0x5] sm:$0x1]
    %v922 = vlaneseq
    %v923 = vshrl.u32 %v922, 7
    %v924 = vsub.s32 0, %v923
    %v925 = vrot.slane %v921, %v924
    %v934 = vunpack.c.l.b16 %v912
    %v935 = vunpack.c.l.b16 %v913
    %v936 = vunpack.c.l.b16 %v914
    %v937 = vunpack.c.l.b16 %v915
    %v938 = vunpack.c.l.b16 %v916
    %v939 = vunpack.c.l.b16 %v917
    %v940 = vunpack.c.l.b16 %v918
    %v941 = vunpack.c.l.b16 %v919
    %v942 = vpack.c.b16 %v935, %v934
    %v943 = vpack.c.b16 %v937, %v936
    %v944 = vpack.c.b16 %v939, %v938
    %v945 = vpack.c.b16 %v941, %v940
    %v951 = vsel %vm255, %v920, 0
    %953 = vmatprep.subr.bf16.mxu0 0
    %954 = vmatpush1.bf16.msra.mxu0 0
    %955 = vmatprep.subr.bf16.mxu0 0
    %956 = vmatpush1.bf16.msra.mxu0 0
    %957 = vmatprep.subr.bf16.mxu0 0
    %958 = vmatpush1.bf16.msra.mxu0 0
    %959 = vmatprep.subr.bf16.mxu0 0
    %960 = vmatpush1.bf16.msra.mxu0 0
    %961 = vmatprep.subr.bf16.mxu0 0
    %962 = vmatpush1.bf16.msra.mxu0 %v945
    %963 = vmatprep.subr.bf16.mxu0 0
    %964 = vmatpush1.bf16.msra.mxu0 %v944
    %965 = vmatprep.subr.bf16.mxu0 0
    %966 = vmatpush1.bf16.msra.mxu0 %v943
    %967 = vmatprep.subr.bf16.mxu0 0
    %968 = vmatpush1.bf16.msra.mxu0 %v942
    %969 = vmatprep.subr.bf16.mxu0 0
    %970 = vmatpush2.bf16.msra.mxu0 0
    %971 = vmatprep.subr.bf16.mxu0 0
    %972 = vmatpush2.bf16.msra.mxu0 0
    %973 = vmatprep.subr.bf16.mxu0 0
    %974 = vmatpush2.bf16.msra.mxu0 0
    %975 = vmatprep.subr.bf16.mxu0 0
    %976 = vmatpush2.bf16.msra.mxu0 0
    %977 = vmatprep.subr.bf16.mxu0 0
    %978 = vmatpush2.bf16.msra.mxu0 0
    %979 = vmatprep.subr.bf16.mxu0 0
    %980 = vmatpush2.bf16.msra.mxu0 0
    %981 = vmatprep.subr.bf16.mxu0 0
    %982 = vmatpush2.bf16.msra.mxu0 0
    %983 = vmatprep.subr.bf16.mxu0 0
    %984 = vmatpush2.bf16.msra.mxu0 0
    %985 = vmatprep.mubr.bf16.mxu0 0
    %986 = vmatmul.mubr.bf16.gmra.mxu0 %v951
    %v987 = vpop.f32.mrf.mxu0
    %v988 = vadd.f32 %v925, %v987
    %v989 = vpop.f32.mrf.mxu0
    %v990 = vpop.f32.mrf.mxu0
    %v991 = vadd.f32 %v925, %v990
    %v992 = vpop.f32.mrf.mxu0
    %993 = vdwg.mxu0
    %v994 = vadd.f32 %v116, %v988
    %v995 = vadd.f32 %v117, %v991
    %v996 = vld [vmem:[%s7 + $0x6] sm:$0x1]
    %v997 = vld [vmem:[%s7 + $0x7] sm:$0x1]
    %v998 = vsel %vm255, %v994, 0.0
    %999 = vadd.xlane.f32.xlu0 %v998
    %v1000 = vpop.xlane.xlu0 %999
    %v1001 = vsel %vm255, %v995, 0.0
    %1002 = vadd.xlane.f32.xlu0 %v1001
    %v1003 = vpop.xlane.xlu0 %1002
    %v1004 = vrcp.pop 64.0
    %v1005 = vmul.f32 %v1000, %v1004
    %v1006 = vmul.f32 %v1003, %v1004
    %v1007 = vsub.f32 %v994, %v1005
    %v1008 = vsub.f32 %v995, %v1006
    %v1009 = vmul.f32 %v1007, %v1007
    %v1010 = vmul.f32 %v1008, %v1008
    %v1011 = vsel %vm255, %v1009, 0.0
    %1012 = vadd.xlane.f32.xlu0 %v1011
    %v1013 = vpop.xlane.xlu0 %1012
    %v1014 = vsel %vm255, %v1010, 0.0
    %1015 = vadd.xlane.f32.xlu0 %v1014
    %v1016 = vpop.xlane.xlu0 %1015
    %v1017 = vmul.f32 %v1013, %v1004
    %v1018 = vmul.f32 %v1016, %v1004
    %v1019 = vadd.f32 %v1017, 1e-05
    %v1020 = vadd.f32 %v1018, 1e-05
    %v1021 = vrsqrt.pop %v1019
    %v1022 = vrsqrt.pop %v1020
    %v1023 = vmul.f32 %v1007, %v1021
    %v1024 = vmul.f32 %v1008, %v1022
    %v1025 = vlaneseq
    %v1026 = vshrl.u32 %v1025, 7
    %v1027 = vsub.s32 0, %v1026
    %v1028 = vrot.slane %v996, %v1027
    %v1029 = vmul.f32 %v1023, %v1028
    %v1030 = vmul.f32 %v1024, %v1028
    %v1031 = vlaneseq
    %v1032 = vshrl.u32 %v1031, 7
    %v1033 = vsub.s32 0, %v1032
    %v1034 = vrot.slane %v997, %v1033
    %v1035 = vadd.f32 %v1029, %v1034
    %v1036 = vadd.f32 %v1030, %v1034
    %v1037 = vld [vmem:[%s4] sm:$0xf]
    %v1038 = vld [vmem:[%s4 + $0x4] sm:$0xf]
    %v1039 = vld [vmem:[%s4 + $0x8] sm:$0xf]
    %v1040 = vld [vmem:[%s4 + $0xc] sm:$0xf]
    %v1041 = vld [vmem:[%s4 + $0x10] sm:$0xf]
    %v1042 = vld [vmem:[%s4 + $0x14] sm:$0xf]
    %v1043 = vld [vmem:[%s4 + $0x18] sm:$0xf]
    %v1044 = vld [vmem:[%s4 + $0x1c] sm:$0xf]
    %v1045 = vpack.c.bf16 %v1036, %v1035
    %v1046 = vld [vmem:[%s8] sm:$0x1]
    %v1047 = vlaneseq
    %v1048 = vshrl.u32 %v1047, 7
    %v1049 = vsub.s32 0, %v1048
    %v1050 = vrot.slane %v1046, %v1049
    %v1059 = vunpack.c.l.b16 %v1037
    %v1060 = vunpack.c.l.b16 %v1038
    %v1061 = vunpack.c.l.b16 %v1039
    %v1062 = vunpack.c.l.b16 %v1040
    %v1063 = vunpack.c.l.b16 %v1041
    %v1064 = vunpack.c.l.b16 %v1042
    %v1065 = vunpack.c.l.b16 %v1043
    %v1066 = vunpack.c.l.b16 %v1044
    %v1067 = vpack.c.b16 %v1060, %v1059
    %v1068 = vpack.c.b16 %v1062, %v1061
    %v1069 = vpack.c.b16 %v1064, %v1063
    %v1070 = vpack.c.b16 %v1066, %v1065
    %v1076 = vsel %vm255, %v1045, 0
    %1078 = vmatprep.subr.bf16.mxu0 0
    %1079 = vmatpush1.bf16.msra.mxu0 0
    %1080 = vmatprep.subr.bf16.mxu0 0
    %1081 = vmatpush1.bf16.msra.mxu0 0
    %1082 = vmatprep.subr.bf16.mxu0 0
    %1083 = vmatpush1.bf16.msra.mxu0 0
    %1084 = vmatprep.subr.bf16.mxu0 0
    %1085 = vmatpush1.bf16.msra.mxu0 0
    %1086 = vmatprep.subr.bf16.mxu0 0
    %1087 = vmatpush1.bf16.msra.mxu0 %v1070
    %1088 = vmatprep.subr.bf16.mxu0 0
    %1089 = vmatpush1.bf16.msra.mxu0 %v1069
    %1090 = vmatprep.subr.bf16.mxu0 0
    %1091 = vmatpush1.bf16.msra.mxu0 %v1068
    %1092 = vmatprep.subr.bf16.mxu0 0
    %1093 = vmatpush1.bf16.msra.mxu0 %v1067
    %1094 = vmatprep.subr.bf16.mxu0 0
    %1095 = vmatpush2.bf16.msra.mxu0 0
    %1096 = vmatprep.subr.bf16.mxu0 0
    %1097 = vmatpush2.bf16.msra.mxu0 0
    %1098 = vmatprep.subr.bf16.mxu0 0
    %1099 = vmatpush2.bf16.msra.mxu0 0
    %1100 = vmatprep.subr.bf16.mxu0 0
    %1101 = vmatpush2.bf16.msra.mxu0 0
    %1102 = vmatprep.subr.bf16.mxu0 0
    %1103 = vmatpush2.bf16.msra.mxu0 0
    %1104 = vmatprep.subr.bf16.mxu0 0
    %1105 = vmatpush2.bf16.msra.mxu0 0
    %1106 = vmatprep.subr.bf16.mxu0 0
    %1107 = vmatpush2.bf16.msra.mxu0 0
    %1108 = vmatprep.subr.bf16.mxu0 0
    %1109 = vmatpush2.bf16.msra.mxu0 0
    %1110 = vmatprep.mubr.bf16.mxu0 0
    %1111 = vmatmul.mubr.bf16.gmra.mxu0 %v1076
    %v1112 = vpop.f32.mrf.mxu0
    %v1113 = vadd.f32 %v1050, %v1112
    %v1114 = vpop.f32.mrf.mxu0
    %v1115 = vpop.f32.mrf.mxu0
    %v1116 = vadd.f32 %v1050, %v1115
    %v1117 = vpop.f32.mrf.mxu0
    %1118 = vdwg.mxu0
    %v1119 = vmax.f32 %v1113, 0.0
    %v1120 = vmax.f32 %v1116, 0.0
    %v1121 = vld [vmem:[%s5] sm:$0xf]
    %v1122 = vld [vmem:[%s5 + $0x4] sm:$0xf]
    %v1123 = vld [vmem:[%s5 + $0x8] sm:$0xf]
    %v1124 = vld [vmem:[%s5 + $0xc] sm:$0xf]
    %v1125 = vld [vmem:[%s5 + $0x10] sm:$0xf]
    %v1126 = vld [vmem:[%s5 + $0x14] sm:$0xf]
    %v1127 = vld [vmem:[%s5 + $0x18] sm:$0xf]
    %v1128 = vld [vmem:[%s5 + $0x1c] sm:$0xf]
    %v1129 = vld [vmem:[%s5 + $0x20] sm:$0xf]
    %v1130 = vld [vmem:[%s5 + $0x24] sm:$0xf]
    %v1131 = vld [vmem:[%s5 + $0x28] sm:$0xf]
    %v1132 = vld [vmem:[%s5 + $0x2c] sm:$0xf]
    %v1133 = vld [vmem:[%s5 + $0x30] sm:$0xf]
    %v1134 = vld [vmem:[%s5 + $0x34] sm:$0xf]
    %v1135 = vld [vmem:[%s5 + $0x38] sm:$0xf]
    %v1136 = vld [vmem:[%s5 + $0x3c] sm:$0xf]
    %v1137 = vpack.c.bf16 %v1120, %v1119
    %v1138 = vld [vmem:[%s7 + $0x8] sm:$0x1]
    %v1139 = vlaneseq
    %v1140 = vshrl.u32 %v1139, 7
    %v1141 = vsub.s32 0, %v1140
    %v1142 = vrot.slane %v1138, %v1141
    %v1159 = vunpack.c.l.b16 %v1121
    %v1160 = vunpack.c.l.b16 %v1122
    %v1161 = vunpack.c.l.b16 %v1123
    %v1162 = vunpack.c.l.b16 %v1124
    %v1163 = vunpack.c.l.b16 %v1125
    %v1164 = vunpack.c.l.b16 %v1126
    %v1165 = vunpack.c.l.b16 %v1127
    %v1166 = vunpack.c.l.b16 %v1128
    %v1167 = vunpack.c.l.b16 %v1129
    %v1168 = vunpack.c.l.b16 %v1130
    %v1169 = vunpack.c.l.b16 %v1131
    %v1170 = vunpack.c.l.b16 %v1132
    %v1171 = vunpack.c.l.b16 %v1133
    %v1172 = vunpack.c.l.b16 %v1134
    %v1173 = vunpack.c.l.b16 %v1135
    %v1174 = vunpack.c.l.b16 %v1136
    %v1175 = vpack.c.b16 %v1160, %v1159
    %v1176 = vpack.c.b16 %v1162, %v1161
    %v1177 = vpack.c.b16 %v1164, %v1163
    %v1178 = vpack.c.b16 %v1166, %v1165
    %v1179 = vpack.c.b16 %v1168, %v1167
    %v1180 = vpack.c.b16 %v1170, %v1169
    %v1181 = vpack.c.b16 %v1172, %v1171
    %v1182 = vpack.c.b16 %v1174, %v1173
    %1191 = vmatprep.subr.bf16.mxu0 0
    %1192 = vmatpush1.bf16.msra.mxu0 %v1182
    %1193 = vmatprep.subr.bf16.mxu0 0
    %1194 = vmatpush1.bf16.msra.mxu0 %v1181
    %1195 = vmatprep.subr.bf16.mxu0 0
    %1196 = vmatpush1.bf16.msra.mxu0 %v1180
    %1197 = vmatprep.subr.bf16.mxu0 0
    %1198 = vmatpush1.bf16.msra.mxu0 %v1179
    %1199 = vmatprep.subr.bf16.mxu0 0
    %1200 = vmatpush1.bf16.msra.mxu0 %v1178
    %1201 = vmatprep.subr.bf16.mxu0 0
    %1202 = vmatpush1.bf16.msra.mxu0 %v1177
    %1203 = vmatprep.subr.bf16.mxu0 0
    %1204 = vmatpush1.bf16.msra.mxu0 %v1176
    %1205 = vmatprep.subr.bf16.mxu0 0
    %1206 = vmatpush1.bf16.msra.mxu0 %v1175
    %1207 = vmatprep.subr.bf16.mxu0 0
    %1208 = vmatpush2.bf16.msra.mxu0 0
    %1209 = vmatprep.subr.bf16.mxu0 0
    %1210 = vmatpush2.bf16.msra.mxu0 0
    %1211 = vmatprep.subr.bf16.mxu0 0
    %1212 = vmatpush2.bf16.msra.mxu0 0
    %1213 = vmatprep.subr.bf16.mxu0 0
    %1214 = vmatpush2.bf16.msra.mxu0 0
    %1215 = vmatprep.subr.bf16.mxu0 0
    %1216 = vmatpush2.bf16.msra.mxu0 0
    %1217 = vmatprep.subr.bf16.mxu0 0
    %1218 = vmatpush2.bf16.msra.mxu0 0
    %1219 = vmatprep.subr.bf16.mxu0 0
    %1220 = vmatpush2.bf16.msra.mxu0 0
    %1221 = vmatprep.subr.bf16.mxu0 0
    %1222 = vmatpush2.bf16.msra.mxu0 0
    %1223 = vmatprep.mubr.bf16.mxu0 0
    %1224 = vmatmul.mubr.bf16.gmra.mxu0 %v1137
    %v1225 = vpop.f32.mrf.mxu0
    %v1226 = vadd.f32 %v1142, %v1225
    %v1227 = vpop.f32.mrf.mxu0
    %v1228 = vpop.f32.mrf.mxu0
    %v1229 = vadd.f32 %v1142, %v1228
    %v1230 = vpop.f32.mrf.mxu0
    %1231 = vdwg.mxu0
    %v1232 = vadd.f32 %v1035, %v1226
    %v1233 = vadd.f32 %v1036, %v1229
    %v1234 = vld [vmem:[%s7 + $0x9] sm:$0x1]
    %v1235 = vld [vmem:[%s7 + $0xa] sm:$0x1]
    %v1236 = vsel %vm255, %v1232, 0.0
    %1237 = vadd.xlane.f32.xlu0 %v1236
    %v1238 = vpop.xlane.xlu0 %1237
    %v1239 = vsel %vm255, %v1233, 0.0
    %1240 = vadd.xlane.f32.xlu0 %v1239
    %v1241 = vpop.xlane.xlu0 %1240
    %v1242 = vmul.f32 %v1238, %v1004
    %v1243 = vmul.f32 %v1241, %v1004
    %v1244 = vsub.f32 %v1232, %v1242
    %v1245 = vsub.f32 %v1233, %v1243
    %v1246 = vmul.f32 %v1244, %v1244
    %v1247 = vmul.f32 %v1245, %v1245
    %v1248 = vsel %vm255, %v1246, 0.0
    %1249 = vadd.xlane.f32.xlu0 %v1248
    %v1250 = vpop.xlane.xlu0 %1249
    %v1251 = vsel %vm255, %v1247, 0.0
    %1252 = vadd.xlane.f32.xlu0 %v1251
    %v1253 = vpop.xlane.xlu0 %1252
    %v1254 = vmul.f32 %v1250, %v1004
    %v1255 = vmul.f32 %v1253, %v1004
    %v1256 = vadd.f32 %v1254, 1e-05
    %v1257 = vadd.f32 %v1255, 1e-05
    %v1258 = vrsqrt.pop %v1256
    %v1259 = vrsqrt.pop %v1257
    %v1260 = vmul.f32 %v1244, %v1258
    %v1261 = vmul.f32 %v1245, %v1259
    %v1262 = vlaneseq
    %v1263 = vshrl.u32 %v1262, 7
    %v1264 = vsub.s32 0, %v1263
    %v1265 = vrot.slane %v1234, %v1264
    %v1266 = vmul.f32 %v1260, %v1265
    %v1267 = vmul.f32 %v1261, %v1265
    %v1268 = vlaneseq
    %v1269 = vshrl.u32 %v1268, 7
    %v1270 = vsub.s32 0, %v1269
    %v1271 = vrot.slane %v1235, %v1270
    %v1272 = vadd.f32 %v1266, %v1271
    %v1273 = vadd.f32 %v1267, %v1271
    %v1274 = vld [vmem:[%s3 + $0x80] sm:$0xf]
    %v1275 = vld [vmem:[%s3 + $0x84] sm:$0xf]
    %v1276 = vld [vmem:[%s3 + $0x88] sm:$0xf]
    %v1277 = vld [vmem:[%s3 + $0x8c] sm:$0xf]
    %v1278 = vld [vmem:[%s3 + $0x90] sm:$0xf]
    %v1279 = vld [vmem:[%s3 + $0x94] sm:$0xf]
    %v1280 = vld [vmem:[%s3 + $0x98] sm:$0xf]
    %v1281 = vld [vmem:[%s3 + $0x9c] sm:$0xf]
    %v1282 = vpack.c.bf16 %v213, %v212
    %v1283 = vpack.c.bf16 %v215, %v214
    %v1284 = vpack.c.bf16 %v216, %v216
    %v1285 = vld [vmem:[%s7 + $0xb] sm:$0x1]
    %v1286 = vlaneseq
    %v1287 = vshrl.u32 %v1286, 7
    %v1288 = vsub.s32 0, %v1287
    %v1289 = vrot.slane %v1285, %v1288
    %v1298 = vunpack.c.l.b16 %v1274
    %v1299 = vunpack.c.l.b16 %v1275
    %v1300 = vunpack.c.l.b16 %v1276
    %v1301 = vunpack.c.l.b16 %v1277
    %v1302 = vunpack.c.l.b16 %v1278
    %v1303 = vunpack.c.l.b16 %v1279
    %v1304 = vunpack.c.l.b16 %v1280
    %v1305 = vunpack.c.l.b16 %v1281
    %v1306 = vpack.c.b16 %v1299, %v1298
    %v1307 = vpack.c.b16 %v1301, %v1300
    %v1308 = vpack.c.b16 %v1303, %v1302
    %v1309 = vpack.c.b16 %v1305, %v1304
    %v1315 = vsel %vm255, %v1282, 0
    %v1318 = vsel %vm255, %v1283, 0
    %v1321 = vsel %vm255, %v1284, 0
    %1323 = vmatprep.subr.bf16.mxu0 0
    %1324 = vmatpush1.bf16.msra.mxu0 0
    %1325 = vmatprep.subr.bf16.mxu0 0
    %1326 = vmatpush1.bf16.msra.mxu0 0
    %1327 = vmatprep.subr.bf16.mxu0 0
    %1328 = vmatpush1.bf16.msra.mxu0 0
    %1329 = vmatprep.subr.bf16.mxu0 0
    %1330 = vmatpush1.bf16.msra.mxu0 0
    %1331 = vmatprep.subr.bf16.mxu0 0
    %1332 = vmatpush1.bf16.msra.mxu0 %v1309
    %1333 = vmatprep.subr.bf16.mxu0 0
    %1334 = vmatpush1.bf16.msra.mxu0 %v1308
    %1335 = vmatprep.subr.bf16.mxu0 0
    %1336 = vmatpush1.bf16.msra.mxu0 %v1307
    %1337 = vmatprep.subr.bf16.mxu0 0
    %1338 = vmatpush1.bf16.msra.mxu0 %v1306
    %1339 = vmatprep.subr.bf16.mxu0 0
    %1340 = vmatpush2.bf16.msra.mxu0 0
    %1341 = vmatprep.subr.bf16.mxu0 0
    %1342 = vmatpush2.bf16.msra.mxu0 0
    %1343 = vmatprep.subr.bf16.mxu0 0
    %1344 = vmatpush2.bf16.msra.mxu0 0
    %1345 = vmatprep.subr.bf16.mxu0 0
    %1346 = vmatpush2.bf16.msra.mxu0 0
    %1347 = vmatprep.subr.bf16.mxu0 0
    %1348 = vmatpush2.bf16.msra.mxu0 0
    %1349 = vmatprep.subr.bf16.mxu0 0
    %1350 = vmatpush2.bf16.msra.mxu0 0
    %1351 = vmatprep.subr.bf16.mxu0 0
    %1352 = vmatpush2.bf16.msra.mxu0 0
    %1353 = vmatprep.subr.bf16.mxu0 0
    %1354 = vmatpush2.bf16.msra.mxu0 0
    %1355 = vmatprep.mubr.bf16.mxu0 0
    %1356 = vmatmul.mubr.bf16.gmra.mxu0 %v1315
    %v1357 = vpop.f32.mrf.mxu0
    %v1358 = vadd.f32 %v1289, %v1357
    %v1359 = vpop.f32.mrf.mxu0
    %v1360 = vpop.f32.mrf.mxu0
    %v1361 = vadd.f32 %v1289, %v1360
    %v1362 = vpop.f32.mrf.mxu0
    %1363 = vmatprep.mubr.bf16.mxu0 0
    %1364 = vmatmul.mubr.bf16.gmra.mxu0 %v1318
    %v1365 = vpop.f32.mrf.mxu0
    %v1366 = vadd.f32 %v1289, %v1365
    %v1367 = vpop.f32.mrf.mxu0
    %v1368 = vpop.f32.mrf.mxu0
    %v1369 = vadd.f32 %v1289, %v1368
    %v1370 = vpop.f32.mrf.mxu0
    %1371 = vmatprep.mubr.bf16.mxu0 0
    %1372 = vmatmul.mubr.bf16.gmra.mxu0 %v1321
    %v1373 = vpop.f32.mrf.mxu0
    %v1374 = vadd.f32 %v1289, %v1373
    %v1375 = vpop.f32.mrf.mxu0
    %v1376 = vpop.f32.mrf.mxu0
    %v1377 = vpop.f32.mrf.mxu0
    %1378 = vdwg.mxu0
    %v1379 = vld [vmem:[%s3 + $0xa0] sm:$0xf]
    %v1380 = vld [vmem:[%s3 + $0xa4] sm:$0xf]
    %v1381 = vld [vmem:[%s3 + $0xa8] sm:$0xf]
    %v1382 = vld [vmem:[%s3 + $0xac] sm:$0xf]
    %v1383 = vld [vmem:[%s3 + $0xb0] sm:$0xf]
    %v1384 = vld [vmem:[%s3 + $0xb4] sm:$0xf]
    %v1385 = vld [vmem:[%s3 + $0xb8] sm:$0xf]
    %v1386 = vld [vmem:[%s3 + $0xbc] sm:$0xf]
    %v1387 = vld [vmem:[%s7 + $0xc] sm:$0x1]
    %v1388 = vlaneseq
    %v1389 = vshrl.u32 %v1388, 7
    %v1390 = vsub.s32 0, %v1389
    %v1391 = vrot.slane %v1387, %v1390
    %v1400 = vunpack.c.l.b16 %v1379
    %v1401 = vunpack.c.l.b16 %v1380
    %v1402 = vunpack.c.l.b16 %v1381
    %v1403 = vunpack.c.l.b16 %v1382
    %v1404 = vunpack.c.l.b16 %v1383
    %v1405 = vunpack.c.l.b16 %v1384
    %v1406 = vunpack.c.l.b16 %v1385
    %v1407 = vunpack.c.l.b16 %v1386
    %v1408 = vpack.c.b16 %v1401, %v1400
    %v1409 = vpack.c.b16 %v1403, %v1402
    %v1410 = vpack.c.b16 %v1405, %v1404
    %v1411 = vpack.c.b16 %v1407, %v1406
    %1416 = vmatprep.subr.bf16.mxu0 0
    %1417 = vmatpush1.bf16.msra.mxu0 0
    %1418 = vmatprep.subr.bf16.mxu0 0
    %1419 = vmatpush1.bf16.msra.mxu0 0
    %1420 = vmatprep.subr.bf16.mxu0 0
    %1421 = vmatpush1.bf16.msra.mxu0 0
    %1422 = vmatprep.subr.bf16.mxu0 0
    %1423 = vmatpush1.bf16.msra.mxu0 0
    %1424 = vmatprep.subr.bf16.mxu0 0
    %1425 = vmatpush1.bf16.msra.mxu0 %v1411
    %1426 = vmatprep.subr.bf16.mxu0 0
    %1427 = vmatpush1.bf16.msra.mxu0 %v1410
    %1428 = vmatprep.subr.bf16.mxu0 0
    %1429 = vmatpush1.bf16.msra.mxu0 %v1409
    %1430 = vmatprep.subr.bf16.mxu0 0
    %1431 = vmatpush1.bf16.msra.mxu0 %v1408
    %1432 = vmatprep.subr.bf16.mxu0 0
    %1433 = vmatpush2.bf16.msra.mxu0 0
    %1434 = vmatprep.subr.bf16.mxu0 0
    %1435 = vmatpush2.bf16.msra.mxu0 0
    %1436 = vmatprep.subr.bf16.mxu0 0
    %1437 = vmatpush2.bf16.msra.mxu0 0
    %1438 = vmatprep.subr.bf16.mxu0 0
    %1439 = vmatpush2.bf16.msra.mxu0 0
    %1440 = vmatprep.subr.bf16.mxu0 0
    %1441 = vmatpush2.bf16.msra.mxu0 0
    %1442 = vmatprep.subr.bf16.mxu0 0
    %1443 = vmatpush2.bf16.msra.mxu0 0
    %1444 = vmatprep.subr.bf16.mxu0 0
    %1445 = vmatpush2.bf16.msra.mxu0 0
    %1446 = vmatprep.subr.bf16.mxu0 0
    %1447 = vmatpush2.bf16.msra.mxu0 0
    %1448 = vmatprep.mubr.bf16.mxu0 0
    %1449 = vmatmul.mubr.bf16.gmra.mxu0 %v1315
    %v1450 = vpop.f32.mrf.mxu0
    %v1451 = vadd.f32 %v1391, %v1450
    %v1452 = vpop.f32.mrf.mxu0
    %v1453 = vpop.f32.mrf.mxu0
    %v1454 = vadd.f32 %v1391, %v1453
    %v1455 = vpop.f32.mrf.mxu0
    %1456 = vmatprep.mubr.bf16.mxu0 0
    %1457 = vmatmul.mubr.bf16.gmra.mxu0 %v1318
    %v1458 = vpop.f32.mrf.mxu0
    %v1459 = vadd.f32 %v1391, %v1458
    %v1460 = vpop.f32.mrf.mxu0
    %v1461 = vpop.f32.mrf.mxu0
    %v1462 = vadd.f32 %v1391, %v1461
    %v1463 = vpop.f32.mrf.mxu0
    %1464 = vmatprep.mubr.bf16.mxu0 0
    %1465 = vmatmul.mubr.bf16.gmra.mxu0 %v1321
    %v1466 = vpop.f32.mrf.mxu0
    %v1467 = vadd.f32 %v1391, %v1466
    %v1468 = vpop.f32.mrf.mxu0
    %v1469 = vpop.f32.mrf.mxu0
    %v1470 = vpop.f32.mrf.mxu0
    %1471 = vdwg.mxu0
    %v1472 = vld [vmem:[%s3 + $0xc0] sm:$0xf]
    %v1473 = vld [vmem:[%s3 + $0xc4] sm:$0xf]
    %v1474 = vld [vmem:[%s3 + $0xc8] sm:$0xf]
    %v1475 = vld [vmem:[%s3 + $0xcc] sm:$0xf]
    %v1476 = vld [vmem:[%s3 + $0xd0] sm:$0xf]
    %v1477 = vld [vmem:[%s3 + $0xd4] sm:$0xf]
    %v1478 = vld [vmem:[%s3 + $0xd8] sm:$0xf]
    %v1479 = vld [vmem:[%s3 + $0xdc] sm:$0xf]
    %v1480 = vld [vmem:[%s7 + $0xd] sm:$0x1]
    %v1481 = vlaneseq
    %v1482 = vshrl.u32 %v1481, 7
    %v1483 = vsub.s32 0, %v1482
    %v1484 = vrot.slane %v1480, %v1483
    %v1493 = vunpack.c.l.b16 %v1472
    %v1494 = vunpack.c.l.b16 %v1473
    %v1495 = vunpack.c.l.b16 %v1474
    %v1496 = vunpack.c.l.b16 %v1475
    %v1497 = vunpack.c.l.b16 %v1476
    %v1498 = vunpack.c.l.b16 %v1477
    %v1499 = vunpack.c.l.b16 %v1478
    %v1500 = vunpack.c.l.b16 %v1479
    %v1501 = vpack.c.b16 %v1494, %v1493
    %v1502 = vpack.c.b16 %v1496, %v1495
    %v1503 = vpack.c.b16 %v1498, %v1497
    %v1504 = vpack.c.b16 %v1500, %v1499
    %1509 = vmatprep.subr.bf16.mxu0 0
    %1510 = vmatpush1.bf16.msra.mxu0 0
    %1511 = vmatprep.subr.bf16.mxu0 0
    %1512 = vmatpush1.bf16.msra.mxu0 0
    %1513 = vmatprep.subr.bf16.mxu0 0
    %1514 = vmatpush1.bf16.msra.mxu0 0
    %1515 = vmatprep.subr.bf16.mxu0 0
    %1516 = vmatpush1.bf16.msra.mxu0 0
    %1517 = vmatprep.subr.bf16.mxu0 0
    %1518 = vmatpush1.bf16.msra.mxu0 %v1504
    %1519 = vmatprep.subr.bf16.mxu0 0
    %1520 = vmatpush1.bf16.msra.mxu0 %v1503
    %1521 = vmatprep.subr.bf16.mxu0 0
    %1522 = vmatpush1.bf16.msra.mxu0 %v1502
    %1523 = vmatprep.subr.bf16.mxu0 0
    %1524 = vmatpush1.bf16.msra.mxu0 %v1501
    %1525 = vmatprep.subr.bf16.mxu0 0
    %1526 = vmatpush2.bf16.msra.mxu0 0
    %1527 = vmatprep.subr.bf16.mxu0 0
    %1528 = vmatpush2.bf16.msra.mxu0 0
    %1529 = vmatprep.subr.bf16.mxu0 0
    %1530 = vmatpush2.bf16.msra.mxu0 0
    %1531 = vmatprep.subr.bf16.mxu0 0
    %1532 = vmatpush2.bf16.msra.mxu0 0
    %1533 = vmatprep.subr.bf16.mxu0 0
    %1534 = vmatpush2.bf16.msra.mxu0 0
    %1535 = vmatprep.subr.bf16.mxu0 0
    %1536 = vmatpush2.bf16.msra.mxu0 0
    %1537 = vmatprep.subr.bf16.mxu0 0
    %1538 = vmatpush2.bf16.msra.mxu0 0
    %1539 = vmatprep.subr.bf16.mxu0 0
    %1540 = vmatpush2.bf16.msra.mxu0 0
    %1541 = vmatprep.mubr.bf16.mxu0 0
    %1542 = vmatmul.mubr.bf16.gmra.mxu0 %v1315
    %v1543 = vpop.f32.mrf.mxu0
    %v1544 = vadd.f32 %v1484, %v1543
    %v1545 = vpop.f32.mrf.mxu0
    %v1546 = vpop.f32.mrf.mxu0
    %v1547 = vadd.f32 %v1484, %v1546
    %v1548 = vpop.f32.mrf.mxu0
    %1549 = vmatprep.mubr.bf16.mxu0 0
    %1550 = vmatmul.mubr.bf16.gmra.mxu0 %v1318
    %v1551 = vpop.f32.mrf.mxu0
    %v1552 = vadd.f32 %v1484, %v1551
    %v1553 = vpop.f32.mrf.mxu0
    %v1554 = vpop.f32.mrf.mxu0
    %v1555 = vadd.f32 %v1484, %v1554
    %v1556 = vpop.f32.mrf.mxu0
    %1557 = vmatprep.mubr.bf16.mxu0 0
    %1558 = vmatmul.mubr.bf16.gmra.mxu0 %v1321
    %v1559 = vpop.f32.mrf.mxu0
    %v1560 = vadd.f32 %v1484, %v1559
    %v1561 = vpop.f32.mrf.mxu0
    %v1562 = vpop.f32.mrf.mxu0
    %v1563 = vpop.f32.mrf.mxu0
    %1564 = vdwg.mxu0
    %v1565 = vlaneseq
    %v1566 = vshrl.u32 %v1565, 7
    %v1567 = vadd.s32 %v1566, 8
    %v1568 = vadd.s32 %v1566, 16
    %v1569 = vlaneseq
    %v1570 = vand.u32 %v1569, 127
    %vm1571 = vcmp.le.s32.totalorder %v1570, %v1566
    %vm1572 = vcmp.le.s32.totalorder %v1570, %v1567
    %vm1573 = vcmp.le.s32.totalorder %v1570, %v1568
    %v1574 = vpack.c.bf16 %v1361, %v1358
    %v1575 = vpack.c.bf16 %v1366, %v1366
    %v1576 = vpack.c.bf16 %v1454, %v1451
    %v1577 = vpack.c.bf16 %v1459, %v1459
    %v1579 = vsel %vm69, %v1574, 0
    %v1582 = vsel %vm69, %v1575, 0
    %v1585 = vsel %vm69, %v1576, 0
    %v1588 = vsel %vm69, %v1577, 0
    %1590 = vmatprep.subr.bf16.mxu0 0
    %1591 = vmatpush1.bf16.xpose.msra.mxu0 0
    %1592 = vmatprep.subr.bf16.mxu0 0
    %1593 = vmatpush1.bf16.xpose.msra.mxu0 0
    %1594 = vmatprep.subr.bf16.mxu0 0
    %1595 = vmatpush1.bf16.xpose.msra.mxu0 0
    %1596 = vmatprep.subr.bf16.mxu0 0
    %1597 = vmatpush1.bf16.xpose.msra.mxu0 0
    %1598 = vmatprep.subr.bf16.mxu0 0
    %1599 = vmatpush1.bf16.xpose.msra.mxu0 0
    %1600 = vmatprep.subr.bf16.mxu0 0
    %1601 = vmatpush1.bf16.xpose.msra.mxu0 0
    %1602 = vmatprep.subr.bf16.mxu0 0
    %1603 = vmatpush1.bf16.xpose.msra.mxu0 %v1588
    %1604 = vmatprep.subr.bf16.mxu0 0
    %1605 = vmatpush1.bf16.xpose.msra.mxu0 %v1585
    %1606 = vmatprep.subr.bf16.mxu0 0
    %1607 = vmatpush2.bf16.xpose.msra.mxu0 0
    %1608 = vmatprep.subr.bf16.mxu0 0
    %1609 = vmatpush2.bf16.xpose.msra.mxu0 0
    %1610 = vmatprep.subr.bf16.mxu0 0
    %1611 = vmatpush2.bf16.xpose.msra.mxu0 0
    %1612 = vmatprep.subr.bf16.mxu0 0
    %1613 = vmatpush2.bf16.xpose.msra.mxu0 0
    %1614 = vmatprep.subr.bf16.mxu0 0
    %1615 = vmatpush2.bf16.xpose.msra.mxu0 0
    %1616 = vmatprep.subr.bf16.mxu0 0
    %1617 = vmatpush2.bf16.xpose.msra.mxu0 0
    %1618 = vmatprep.subr.bf16.mxu0 0
    %1619 = vmatpush2.bf16.xpose.msra.mxu0 0
    %1620 = vmatprep.subr.bf16.mxu0 0
    %1621 = vmatpush2.bf16.xpose.msra.mxu0 0
    %1622 = vmatprep.mubr.bf16.mxu0 0
    %1623 = vmatmul.mubr.bf16.gmra.mxu0 %v1579
    %v1624 = vpop.f32.mrf.mxu0
    %v1625 = vadd.f32 0.0, %v1624
    %v1626 = vpop.f32.mrf.mxu0
    %v1627 = vpop.f32.mrf.mxu0
    %v1628 = vadd.f32 0.0, %v1627
    %v1629 = vpop.f32.mrf.mxu0
    %1630 = vmatprep.mubr.bf16.mxu0 0
    %1631 = vmatmul.mubr.bf16.gmra.mxu0 %v1582
    %v1632 = vpop.f32.mrf.mxu0
    %v1633 = vadd.f32 0.0, %v1632
    %v1634 = vpop.f32.mrf.mxu0
    %v1635 = vpop.f32.mrf.mxu0
    %v1636 = vpop.f32.mrf.mxu0
    %1637 = vdwg.mxu0
    %v1638 = vmul.f32 %v1625, 0.17677669
    %v1639 = vmul.f32 %v1628, 0.17677669
    %v1640 = vmul.f32 %v1633, 0.17677669
    %v1641 = vsel %vm1571, %v1638, -1e+30
    %v1642 = vsel %vm1572, %v1639, -1e+30
    %v1643 = vsel %vm1573, %v1640, -1e+30
    %vm1644 = vcmask 138240
    %v1645 = vsel %vm1644, %v1641, -inf
    %1646 = vmax.xlane.f32.xlu0 %v1645
    %v1647 = vpop.xlane.xlu0 %1646
    %v1648 = vsel %vm1644, %v1642, -inf
    %1649 = vmax.xlane.f32.xlu0 %v1648
    %v1650 = vpop.xlane.xlu0 %1649
    %vm1651 = vcmask 131072
    %v1652 = vsel %vm1651, %v1643, -inf
    %1653 = vmax.xlane.f32.xlu0 %v1652
    %v1654 = vpop.xlane.xlu0 %1653
    %v1655 = vsub.f32 %v1641, %v1647
    %v1656 = vsub.f32 %v1642, %v1650
    %v1657 = vsub.f32 %v1643, %v1654
    %v1658 = vmul.f32 %v1655, 1.442695
    %v1659 = vpow.pop %v1658
    %v1660 = vmul.f32 %v1656, 1.442695
    %v1661 = vpow.pop %v1660
    %v1662 = vmul.f32 %v1657, 1.442695
    %v1663 = vpow.pop %v1662
    %v1664 = vsel %vm1644, %v1659, 0.0
    %1665 = vadd.xlane.f32.xlu0 %v1664
    %v1666 = vpop.xlane.xlu0 %1665
    %v1667 = vsel %vm1644, %v1661, 0.0
    %1668 = vadd.xlane.f32.xlu0 %v1667
    %v1669 = vpop.xlane.xlu0 %1668
    %v1670 = vsel %vm1651, %v1663, 0.0
    %1671 = vadd.xlane.f32.xlu0 %v1670
    %v1672 = vpop.xlane.xlu0 %1671
    %v1673 = vrcp.pop %v1666
    %v1674 = vrcp.pop %v1669
    %v1675 = vrcp.pop %v1672
    %v1676 = vmul.f32 %v1659, %v1673
    %v1677 = vmul.f32 %v1661, %v1674
    %v1678 = vmul.f32 %v1663, %v1675
    %v1679 = vpack.c.bf16 %v1677, %v1676
    %v1680 = vpack.c.bf16 %v1678, %v1678
    %v1681 = vpack.c.bf16 %v1547, %v1544
    %v1682 = vpack.c.bf16 %v1552, %v1552
    %v1684 = vsel %vm1644, %v1679, 0
    %v1687 = vsel %vm1644, %v1680, 0
    %vm1689 = vcmask 1040384
    %v1690 = vsel 0, 4294967295, 65535
    %v1691 = vsel %vm1689, %v1690, 0
    %v1693 = vand.u32 %v1682, %v1691
    %1695 = vmatprep.subr.bf16.mxu0 0
    %1696 = vmatpush1.bf16.msra.mxu0 0
    %1697 = vmatprep.subr.bf16.mxu0 0
    %1698 = vmatpush1.bf16.msra.mxu0 0
    %1699 = vmatprep.subr.bf16.mxu0 0
    %1700 = vmatpush1.bf16.msra.mxu0 0
    %1701 = vmatprep.subr.bf16.mxu0 0
    %1702 = vmatpush1.bf16.msra.mxu0 0
    %1703 = vmatprep.subr.bf16.mxu0 0
    %1704 = vmatpush1.bf16.msra.mxu0 0
    %1705 = vmatprep.subr.bf16.mxu0 0
    %1706 = vmatpush1.bf16.msra.mxu0 0
    %1707 = vmatprep.subr.bf16.mxu0 0
    %1708 = vmatpush1.bf16.msra.mxu0 %v1693
    %1709 = vmatprep.subr.bf16.mxu0 0
    %1710 = vmatpush1.bf16.msra.mxu0 %v1681
    %1711 = vmatprep.subr.bf16.mxu0 0
    %1712 = vmatpush2.bf16.msra.mxu0 0
    %1713 = vmatprep.subr.bf16.mxu0 0
    %1714 = vmatpush2.bf16.msra.mxu0 0
    %1715 = vmatprep.subr.bf16.mxu0 0
    %1716 = vmatpush2.bf16.msra.mxu0 0
    %1717 = vmatprep.subr.bf16.mxu0 0
    %1718 = vmatpush2.bf16.msra.mxu0 0
    %1719 = vmatprep.subr.bf16.mxu0 0
    %1720 = vmatpush2.bf16.msra.mxu0 0
    %1721 = vmatprep.subr.bf16.mxu0 0
    %1722 = vmatpush2.bf16.msra.mxu0 0
    %1723 = vmatprep.subr.bf16.mxu0 0
    %1724 = vmatpush2.bf16.msra.mxu0 0
    %1725 = vmatprep.subr.bf16.mxu0 0
    %1726 = vmatpush2.bf16.msra.mxu0 0
    %1727 = vmatprep.mubr.bf16.mxu0 0
    %1728 = vmatmul.mubr.bf16.gmra.mxu0 %v1684
    %v1729 = vpop.f32.mrf.mxu0
    %v1730 = vadd.f32 0.0, %v1729
    %v1731 = vpop.f32.mrf.mxu0
    %v1732 = vpop.f32.mrf.mxu0
    %v1733 = vadd.f32 0.0, %v1732
    %v1734 = vpop.f32.mrf.mxu0
    %1735 = vmatprep.mubr.bf16.mxu0 0
    %1736 = vmatmul.mubr.bf16.gmra.mxu0 %v1687
    %v1737 = vpop.f32.mrf.mxu0
    %v1738 = vadd.f32 0.0, %v1737
    %v1739 = vpop.f32.mrf.mxu0
    %v1740 = vpop.f32.mrf.mxu0
    %v1741 = vpop.f32.mrf.mxu0
    %1742 = vdwg.mxu0
    %1745 = vrot.lane.b32.xlu0 %v1574, 96
    %v1746 = vpop.permute.xlu0 %1745
    %1747 = vrot.lane.b32.xlu0 %v1575, 96
    %v1748 = vpop.permute.xlu0 %1747
    %1751 = vrot.lane.b32.xlu0 %v1576, 96
    %v1752 = vpop.permute.xlu0 %1751
    %1753 = vrot.lane.b32.xlu0 %v1577, 96
    %v1754 = vpop.permute.xlu0 %1753
    %v1756 = vsel %vm69, %v1746, 0
    %v1759 = vsel %vm69, %v1748, 0
    %v1762 = vsel %vm69, %v1752, 0
    %v1765 = vsel %vm69, %v1754, 0
    %1767 = vmatprep.subr.bf16.mxu0 0
    %1768 = vmatpush1.bf16.xpose.msra.mxu0 0
    %1769 = vmatprep.subr.bf16.mxu0 0
    %1770 = vmatpush1.bf16.xpose.msra.mxu0 0
    %1771 = vmatprep.subr.bf16.mxu0 0
    %1772 = vmatpush1.bf16.xpose.msra.mxu0 0
    %1773 = vmatprep.subr.bf16.mxu0 0
    %1774 = vmatpush1.bf16.xpose.msra.mxu0 0
    %1775 = vmatprep.subr.bf16.mxu0 0
    %1776 = vmatpush1.bf16.xpose.msra.mxu0 0
    %1777 = vmatprep.subr.bf16.mxu0 0
    %1778 = vmatpush1.bf16.xpose.msra.mxu0 0
    %1779 = vmatprep.subr.bf16.mxu0 0
    %1780 = vmatpush1.bf16.xpose.msra.mxu0 %v1765
    %1781 = vmatprep.subr.bf16.mxu0 0
    %1782 = vmatpush1.bf16.xpose.msra.mxu0 %v1762
    %1783 = vmatprep.subr.bf16.mxu0 0
    %1784 = vmatpush2.bf16.xpose.msra.mxu0 0
    %1785 = vmatprep.subr.bf16.mxu0 0
    %1786 = vmatpush2.bf16.xpose.msra.mxu0 0
    %1787 = vmatprep.subr.bf16.mxu0 0
    %1788 = vmatpush2.bf16.xpose.msra.mxu0 0
    %1789 = vmatprep.subr.bf16.mxu0 0
    %1790 = vmatpush2.bf16.xpose.msra.mxu0 0
    %1791 = vmatprep.subr.bf16.mxu0 0
    %1792 = vmatpush2.bf16.xpose.msra.mxu0 0
    %1793 = vmatprep.subr.bf16.mxu0 0
    %1794 = vmatpush2.bf16.xpose.msra.mxu0 0
    %1795 = vmatprep.subr.bf16.mxu0 0
    %1796 = vmatpush2.bf16.xpose.msra.mxu0 0
    %1797 = vmatprep.subr.bf16.mxu0 0
    %1798 = vmatpush2.bf16.xpose.msra.mxu0 0
    %1799 = vmatprep.mubr.bf16.mxu0 0
    %1800 = vmatmul.mubr.bf16.gmra.mxu0 %v1756
    %v1801 = vpop.f32.mrf.mxu0
    %v1802 = vadd.f32 0.0, %v1801
    %v1803 = vpop.f32.mrf.mxu0
    %v1804 = vpop.f32.mrf.mxu0
    %v1805 = vadd.f32 0.0, %v1804
    %v1806 = vpop.f32.mrf.mxu0
    %1807 = vmatprep.mubr.bf16.mxu0 0
    %1808 = vmatmul.mubr.bf16.gmra.mxu0 %v1759
    %v1809 = vpop.f32.mrf.mxu0
    %v1810 = vadd.f32 0.0, %v1809
    %v1811 = vpop.f32.mrf.mxu0
    %v1812 = vpop.f32.mrf.mxu0
    %v1813 = vpop.f32.mrf.mxu0
    %1814 = vdwg.mxu0
    %v1815 = vmul.f32 %v1802, 0.17677669
    %v1816 = vmul.f32 %v1805, 0.17677669
    %v1817 = vmul.f32 %v1810, 0.17677669
    %v1818 = vsel %vm1571, %v1815, -1e+30
    %v1819 = vsel %vm1572, %v1816, -1e+30
    %v1820 = vsel %vm1573, %v1817, -1e+30
    %v1821 = vsel %vm1644, %v1818, -inf
    %1822 = vmax.xlane.f32.xlu0 %v1821
    %v1823 = vpop.xlane.xlu0 %1822
    %v1824 = vsel %vm1644, %v1819, -inf
    %1825 = vmax.xlane.f32.xlu0 %v1824
    %v1826 = vpop.xlane.xlu0 %1825
    %v1827 = vsel %vm1651, %v1820, -inf
    %1828 = vmax.xlane.f32.xlu0 %v1827
    %v1829 = vpop.xlane.xlu0 %1828
    %v1830 = vsub.f32 %v1818, %v1823
    %v1831 = vsub.f32 %v1819, %v1826
    %v1832 = vsub.f32 %v1820, %v1829
    %v1833 = vmul.f32 %v1830, 1.442695
    %v1834 = vpow.pop %v1833
    %v1835 = vmul.f32 %v1831, 1.442695
    %v1836 = vpow.pop %v1835
    %v1837 = vmul.f32 %v1832, 1.442695
    %v1838 = vpow.pop %v1837
    %v1839 = vsel %vm1644, %v1834, 0.0
    %1840 = vadd.xlane.f32.xlu0 %v1839
    %v1841 = vpop.xlane.xlu0 %1840
    %v1842 = vsel %vm1644, %v1836, 0.0
    %1843 = vadd.xlane.f32.xlu0 %v1842
    %v1844 = vpop.xlane.xlu0 %1843
    %v1845 = vsel %vm1651, %v1838, 0.0
    %1846 = vadd.xlane.f32.xlu0 %v1845
    %v1847 = vpop.xlane.xlu0 %1846
    %v1848 = vrcp.pop %v1841
    %v1849 = vrcp.pop %v1844
    %v1850 = vrcp.pop %v1847
    %v1851 = vmul.f32 %v1834, %v1848
    %v1852 = vmul.f32 %v1836, %v1849
    %v1853 = vmul.f32 %v1838, %v1850
    %v1854 = vpack.c.bf16 %v1852, %v1851
    %v1855 = vpack.c.bf16 %v1853, %v1853
    %1858 = vrot.lane.b32.xlu0 %v1681, 96
    %v1859 = vpop.permute.xlu0 %1858
    %1860 = vrot.lane.b32.xlu0 %v1682, 96
    %v1861 = vpop.permute.xlu0 %1860
    %v1864 = vsel %vm1644, %v1854, 0
    %v1867 = vsel %vm1644, %v1855, 0
    %v1870 = vand.u32 %v1861, %v1691
    %1872 = vmatprep.subr.bf16.mxu0 0
    %1873 = vmatpush1.bf16.msra.mxu0 0
    %1874 = vmatprep.subr.bf16.mxu0 0
    %1875 = vmatpush1.bf16.msra.mxu0 0
    %1876 = vmatprep.subr.bf16.mxu0 0
    %1877 = vmatpush1.bf16.msra.mxu0 0
    %1878 = vmatprep.subr.bf16.mxu0 0
    %1879 = vmatpush1.bf16.msra.mxu0 0
    %1880 = vmatprep.subr.bf16.mxu0 0
    %1881 = vmatpush1.bf16.msra.mxu0 0
    %1882 = vmatprep.subr.bf16.mxu0 0
    %1883 = vmatpush1.bf16.msra.mxu0 0
    %1884 = vmatprep.subr.bf16.mxu0 0
    %1885 = vmatpush1.bf16.msra.mxu0 %v1870
    %1886 = vmatprep.subr.bf16.mxu0 0
    %1887 = vmatpush1.bf16.msra.mxu0 %v1859
    %1888 = vmatprep.subr.bf16.mxu0 0
    %1889 = vmatpush2.bf16.msra.mxu0 0
    %1890 = vmatprep.subr.bf16.mxu0 0
    %1891 = vmatpush2.bf16.msra.mxu0 0
    %1892 = vmatprep.subr.bf16.mxu0 0
    %1893 = vmatpush2.bf16.msra.mxu0 0
    %1894 = vmatprep.subr.bf16.mxu0 0
    %1895 = vmatpush2.bf16.msra.mxu0 0
    %1896 = vmatprep.subr.bf16.mxu0 0
    %1897 = vmatpush2.bf16.msra.mxu0 0
    %1898 = vmatprep.subr.bf16.mxu0 0
    %1899 = vmatpush2.bf16.msra.mxu0 0
    %1900 = vmatprep.subr.bf16.mxu0 0
    %1901 = vmatpush2.bf16.msra.mxu0 0
    %1902 = vmatprep.subr.bf16.mxu0 0
    %1903 = vmatpush2.bf16.msra.mxu0 0
    %1904 = vmatprep.mubr.bf16.mxu0 0
    %1905 = vmatmul.mubr.bf16.gmra.mxu0 %v1864
    %v1906 = vpop.f32.mrf.mxu0
    %v1907 = vadd.f32 0.0, %v1906
    %v1908 = vpop.f32.mrf.mxu0
    %v1909 = vpop.f32.mrf.mxu0
    %v1910 = vadd.f32 0.0, %v1909
    %v1911 = vpop.f32.mrf.mxu0
    %1912 = vmatprep.mubr.bf16.mxu0 0
    %1913 = vmatmul.mubr.bf16.gmra.mxu0 %v1867
    %v1914 = vpop.f32.mrf.mxu0
    %v1915 = vadd.f32 0.0, %v1914
    %v1916 = vpop.f32.mrf.mxu0
    %v1917 = vpop.f32.mrf.mxu0
    %v1918 = vpop.f32.mrf.mxu0
    %1919 = vdwg.mxu0
    %1923 = vrot.lane.b32.xlu0 %v1907, 32
    %v1924 = vpop.permute.xlu0 %1923
    %1925 = vrot.lane.b32.xlu0 %v1910, 32
    %v1926 = vpop.permute.xlu0 %1925
    %1927 = vrot.lane.b32.xlu0 %v1915, 32
    %v1928 = vpop.permute.xlu0 %1927
    %v1932 = vsel %vm69, %v1730, %v1924
    %v1933 = vsel %vm69, %v1733, %v1926
    %v1934 = vsel %vm69, %v1738, %v1928
    %v1935 = vpack.c.bf16 %v1369, %v1366
    %v1936 = vpack.c.bf16 %v1374, %v1374
    %v1937 = vpack.c.bf16 %v1462, %v1459
    %v1938 = vpack.c.bf16 %v1467, %v1467
    %vm1939 = vsmask.f32 7424
    %v1941 = vshrl.u32 %v1935, 16
    %v1943 = vshll.u32 %v1935, 16
    %v1945 = vrot.slane %v1943, 1
    %v1946 = vor.u32 %v1941, %v1945
    %v1948 = vshll.u32 %v1936, 16
    %v1950 = vrot.slane %v1948, 1
    %v1951 = vsel %vm1939, %v1946, %v1950
    %v1952 = vshrl.u32 %v1936, 16
    %v1955 = vshrl.u32 %v1937, 16
    %v1957 = vshll.u32 %v1937, 16
    %v1959 = vrot.slane %v1957, 1
    %v1960 = vor.u32 %v1955, %v1959
    %v1962 = vshll.u32 %v1938, 16
    %v1964 = vrot.slane %v1962, 1
    %v1965 = vsel %vm1939, %v1960, %v1964
    %v1966 = vshrl.u32 %v1938, 16
    %v1969 = vsel %vm69, %v1951, 0
    %v1972 = vsel %vm69, %v1952, 0
    %v1975 = vsel %vm69, %v1965, 0
    %v1978 = vsel %vm69, %v1966, 0
    %1980 = vmatprep.subr.bf16.mxu0 0
    %1981 = vmatpush1.bf16.xpose.msra.mxu0 0
    %1982 = vmatprep.subr.bf16.mxu0 0
    %1983 = vmatpush1.bf16.xpose.msra.mxu0 0
    %1984 = vmatprep.subr.bf16.mxu0 0
    %1985 = vmatpush1.bf16.xpose.msra.mxu0 0
    %1986 = vmatprep.subr.bf16.mxu0 0
    %1987 = vmatpush1.bf16.xpose.msra.mxu0 0
    %1988 = vmatprep.subr.bf16.mxu0 0
    %1989 = vmatpush1.bf16.xpose.msra.mxu0 0
    %1990 = vmatprep.subr.bf16.mxu0 0
    %1991 = vmatpush1.bf16.xpose.msra.mxu0 0
    %1992 = vmatprep.subr.bf16.mxu0 0
    %1993 = vmatpush1.bf16.xpose.msra.mxu0 %v1978
    %1994 = vmatprep.subr.bf16.mxu0 0
    %1995 = vmatpush1.bf16.xpose.msra.mxu0 %v1975
    %1996 = vmatprep.subr.bf16.mxu0 0
    %1997 = vmatpush2.bf16.xpose.msra.mxu0 0
    %1998 = vmatprep.subr.bf16.mxu0 0
    %1999 = vmatpush2.bf16.xpose.msra.mxu0 0
    %2000 = vmatprep.subr.bf16.mxu0 0
    %2001 = vmatpush2.bf16.xpose.msra.mxu0 0
    %2002 = vmatprep.subr.bf16.mxu0 0
    %2003 = vmatpush2.bf16.xpose.msra.mxu0 0
    %2004 = vmatprep.subr.bf16.mxu0 0
    %2005 = vmatpush2.bf16.xpose.msra.mxu0 0
    %2006 = vmatprep.subr.bf16.mxu0 0
    %2007 = vmatpush2.bf16.xpose.msra.mxu0 0
    %2008 = vmatprep.subr.bf16.mxu0 0
    %2009 = vmatpush2.bf16.xpose.msra.mxu0 0
    %2010 = vmatprep.subr.bf16.mxu0 0
    %2011 = vmatpush2.bf16.xpose.msra.mxu0 0
    %2012 = vmatprep.mubr.bf16.mxu0 0
    %2013 = vmatmul.mubr.bf16.gmra.mxu0 %v1969
    %v2014 = vpop.f32.mrf.mxu0
    %v2015 = vadd.f32 0.0, %v2014
    %v2016 = vpop.f32.mrf.mxu0
    %v2017 = vpop.f32.mrf.mxu0
    %v2018 = vadd.f32 0.0, %v2017
    %v2019 = vpop.f32.mrf.mxu0
    %2020 = vmatprep.mubr.bf16.mxu0 0
    %2021 = vmatmul.mubr.bf16.gmra.mxu0 %v1972
    %v2022 = vpop.f32.mrf.mxu0
    %v2023 = vadd.f32 0.0, %v2022
    %v2024 = vpop.f32.mrf.mxu0
    %v2025 = vpop.f32.mrf.mxu0
    %v2026 = vpop.f32.mrf.mxu0
    %2027 = vdwg.mxu0
    %v2028 = vmul.f32 %v2015, 0.17677669
    %v2029 = vmul.f32 %v2018, 0.17677669
    %v2030 = vmul.f32 %v2023, 0.17677669
    %v2031 = vsel %vm1571, %v2028, -1e+30
    %v2032 = vsel %vm1572, %v2029, -1e+30
    %v2033 = vsel %vm1573, %v2030, -1e+30
    %v2034 = vsel %vm1644, %v2031, -inf
    %2035 = vmax.xlane.f32.xlu0 %v2034
    %v2036 = vpop.xlane.xlu0 %2035
    %v2037 = vsel %vm1644, %v2032, -inf
    %2038 = vmax.xlane.f32.xlu0 %v2037
    %v2039 = vpop.xlane.xlu0 %2038
    %v2040 = vsel %vm1651, %v2033, -inf
    %2041 = vmax.xlane.f32.xlu0 %v2040
    %v2042 = vpop.xlane.xlu0 %2041
    %v2043 = vsub.f32 %v2031, %v2036
    %v2044 = vsub.f32 %v2032, %v2039
    %v2045 = vsub.f32 %v2033, %v2042
    %v2046 = vmul.f32 %v2043, 1.442695
    %v2047 = vpow.pop %v2046
    %v2048 = vmul.f32 %v2044, 1.442695
    %v2049 = vpow.pop %v2048
    %v2050 = vmul.f32 %v2045, 1.442695
    %v2051 = vpow.pop %v2050
    %v2052 = vsel %vm1644, %v2047, 0.0
    %2053 = vadd.xlane.f32.xlu0 %v2052
    %v2054 = vpop.xlane.xlu0 %2053
    %v2055 = vsel %vm1644, %v2049, 0.0
    %2056 = vadd.xlane.f32.xlu0 %v2055
    %v2057 = vpop.xlane.xlu0 %2056
    %v2058 = vsel %vm1651, %v2051, 0.0
    %2059 = vadd.xlane.f32.xlu0 %v2058
    %v2060 = vpop.xlane.xlu0 %2059
    %v2061 = vrcp.pop %v2054
    %v2062 = vrcp.pop %v2057
    %v2063 = vrcp.pop %v2060
    %v2064 = vmul.f32 %v2047, %v2061
    %v2065 = vmul.f32 %v2049, %v2062
    %v2066 = vmul.f32 %v2051, %v2063
    %v2067 = vpack.c.bf16 %v2065, %v2064
    %v2068 = vpack.c.bf16 %v2066, %v2066
    %v2069 = vpack.c.bf16 %v1555, %v1552
    %v2070 = vpack.c.bf16 %v1560, %v1560
    %v2072 = vshrl.u32 %v2069, 16
    %v2074 = vshll.u32 %v2069, 16
    %v2076 = vrot.slane %v2074, 1
    %v2077 = vor.u32 %v2072, %v2076
    %v2079 = vshll.u32 %v2070, 16
    %v2081 = vrot.slane %v2079, 1
    %v2082 = vsel %vm1939, %v2077, %v2081
    %v2083 = vshrl.u32 %v2070, 16
    %v2087 = vsel %vm1644, %v2067, 0
    %v2090 = vsel %vm1644, %v2068, 0
    %v2093 = vand.u32 %v2083, %v1691
    %2095 = vmatprep.subr.bf16.mxu0 0
    %2096 = vmatpush1.bf16.msra.mxu0 0
    %2097 = vmatprep.subr.bf16.mxu0 0
    %2098 = vmatpush1.bf16.msra.mxu0 0
    %2099 = vmatprep.subr.bf16.mxu0 0
    %2100 = vmatpush1.bf16.msra.mxu0 0
    %2101 = vmatprep.subr.bf16.mxu0 0
    %2102 = vmatpush1.bf16.msra.mxu0 0
    %2103 = vmatprep.subr.bf16.mxu0 0
    %2104 = vmatpush1.bf16.msra.mxu0 0
    %2105 = vmatprep.subr.bf16.mxu0 0
    %2106 = vmatpush1.bf16.msra.mxu0 0
    %2107 = vmatprep.subr.bf16.mxu0 0
    %2108 = vmatpush1.bf16.msra.mxu0 %v2093
    %2109 = vmatprep.subr.bf16.mxu0 0
    %2110 = vmatpush1.bf16.msra.mxu0 %v2082
    %2111 = vmatprep.subr.bf16.mxu0 0
    %2112 = vmatpush2.bf16.msra.mxu0 0
    %2113 = vmatprep.subr.bf16.mxu0 0
    %2114 = vmatpush2.bf16.msra.mxu0 0
    %2115 = vmatprep.subr.bf16.mxu0 0
    %2116 = vmatpush2.bf16.msra.mxu0 0
    %2117 = vmatprep.subr.bf16.mxu0 0
    %2118 = vmatpush2.bf16.msra.mxu0 0
    %2119 = vmatprep.subr.bf16.mxu0 0
    %2120 = vmatpush2.bf16.msra.mxu0 0
    %2121 = vmatprep.subr.bf16.mxu0 0
    %2122 = vmatpush2.bf16.msra.mxu0 0
    %2123 = vmatprep.subr.bf16.mxu0 0
    %2124 = vmatpush2.bf16.msra.mxu0 0
    %2125 = vmatprep.subr.bf16.mxu0 0
    %2126 = vmatpush2.bf16.msra.mxu0 0
    %2127 = vmatprep.mubr.bf16.mxu0 0
    %2128 = vmatmul.mubr.bf16.gmra.mxu0 %v2087
    %v2129 = vpop.f32.mrf.mxu0
    %v2130 = vadd.f32 0.0, %v2129
    %v2131 = vpop.f32.mrf.mxu0
    %v2132 = vpop.f32.mrf.mxu0
    %v2133 = vadd.f32 0.0, %v2132
    %v2134 = vpop.f32.mrf.mxu0
    %2135 = vmatprep.mubr.bf16.mxu0 0
    %2136 = vmatmul.mubr.bf16.gmra.mxu0 %v2090
    %v2137 = vpop.f32.mrf.mxu0
    %v2138 = vadd.f32 0.0, %v2137
    %v2139 = vpop.f32.mrf.mxu0
    %v2140 = vpop.f32.mrf.mxu0
    %v2141 = vpop.f32.mrf.mxu0
    %2142 = vdwg.mxu0
    %2143 = vrot.lane.b32.xlu0 %v1951, 96
    %v2144 = vpop.permute.xlu0 %2143
    %2145 = vrot.lane.b32.xlu0 %v1952, 96
    %v2146 = vpop.permute.xlu0 %2145
    %2147 = vrot.lane.b32.xlu0 %v1965, 96
    %v2148 = vpop.permute.xlu0 %2147
    %2149 = vrot.lane.b32.xlu0 %v1966, 96
    %v2150 = vpop.permute.xlu0 %2149
    %v2152 = vsel %vm69, %v2144, 0
    %v2155 = vsel %vm69, %v2146, 0
    %v2158 = vsel %vm69, %v2148, 0
    %v2161 = vsel %vm69, %v2150, 0
    %2163 = vmatprep.subr.bf16.mxu0 0
    %2164 = vmatpush1.bf16.xpose.msra.mxu0 0
    %2165 = vmatprep.subr.bf16.mxu0 0
    %2166 = vmatpush1.bf16.xpose.msra.mxu0 0
    %2167 = vmatprep.subr.bf16.mxu0 0
    %2168 = vmatpush1.bf16.xpose.msra.mxu0 0
    %2169 = vmatprep.subr.bf16.mxu0 0
    %2170 = vmatpush1.bf16.xpose.msra.mxu0 0
    %2171 = vmatprep.subr.bf16.mxu0 0
    %2172 = vmatpush1.bf16.xpose.msra.mxu0 0
    %2173 = vmatprep.subr.bf16.mxu0 0
    %2174 = vmatpush1.bf16.xpose.msra.mxu0 0
    %2175 = vmatprep.subr.bf16.mxu0 0
    %2176 = vmatpush1.bf16.xpose.msra.mxu0 %v2161
    %2177 = vmatprep.subr.bf16.mxu0 0
    %2178 = vmatpush1.bf16.xpose.msra.mxu0 %v2158
    %2179 = vmatprep.subr.bf16.mxu0 0
    %2180 = vmatpush2.bf16.xpose.msra.mxu0 0
    %2181 = vmatprep.subr.bf16.mxu0 0
    %2182 = vmatpush2.bf16.xpose.msra.mxu0 0
    %2183 = vmatprep.subr.bf16.mxu0 0
    %2184 = vmatpush2.bf16.xpose.msra.mxu0 0
    %2185 = vmatprep.subr.bf16.mxu0 0
    %2186 = vmatpush2.bf16.xpose.msra.mxu0 0
    %2187 = vmatprep.subr.bf16.mxu0 0
    %2188 = vmatpush2.bf16.xpose.msra.mxu0 0
    %2189 = vmatprep.subr.bf16.mxu0 0
    %2190 = vmatpush2.bf16.xpose.msra.mxu0 0
    %2191 = vmatprep.subr.bf16.mxu0 0
    %2192 = vmatpush2.bf16.xpose.msra.mxu0 0
    %2193 = vmatprep.subr.bf16.mxu0 0
    %2194 = vmatpush2.bf16.xpose.msra.mxu0 0
    %2195 = vmatprep.mubr.bf16.mxu0 0
    %2196 = vmatmul.mubr.bf16.gmra.mxu0 %v2152
    %v2197 = vpop.f32.mrf.mxu0
    %v2198 = vadd.f32 0.0, %v2197
    %v2199 = vpop.f32.mrf.mxu0
    %v2200 = vpop.f32.mrf.mxu0
    %v2201 = vadd.f32 0.0, %v2200
    %v2202 = vpop.f32.mrf.mxu0
    %2203 = vmatprep.mubr.bf16.mxu0 0
    %2204 = vmatmul.mubr.bf16.gmra.mxu0 %v2155
    %v2205 = vpop.f32.mrf.mxu0
    %v2206 = vadd.f32 0.0, %v2205
    %v2207 = vpop.f32.mrf.mxu0
    %v2208 = vpop.f32.mrf.mxu0
    %v2209 = vpop.f32.mrf.mxu0
    %2210 = vdwg.mxu0
    %v2211 = vmul.f32 %v2198, 0.17677669
    %v2212 = vmul.f32 %v2201, 0.17677669
    %v2213 = vmul.f32 %v2206, 0.17677669
    %v2214 = vsel %vm1571, %v2211, -1e+30
    %v2215 = vsel %vm1572, %v2212, -1e+30
    %v2216 = vsel %vm1573, %v2213, -1e+30
    %v2217 = vsel %vm1644, %v2214, -inf
    %2218 = vmax.xlane.f32.xlu0 %v2217
    %v2219 = vpop.xlane.xlu0 %2218
    %v2220 = vsel %vm1644, %v2215, -inf
    %2221 = vmax.xlane.f32.xlu0 %v2220
    %v2222 = vpop.xlane.xlu0 %2221
    %v2223 = vsel %vm1651, %v2216, -inf
    %2224 = vmax.xlane.f32.xlu0 %v2223
    %v2225 = vpop.xlane.xlu0 %2224
    %v2226 = vsub.f32 %v2214, %v2219
    %v2227 = vsub.f32 %v2215, %v2222
    %v2228 = vsub.f32 %v2216, %v2225
    %v2229 = vmul.f32 %v2226, 1.442695
    %v2230 = vpow.pop %v2229
    %v2231 = vmul.f32 %v2227, 1.442695
    %v2232 = vpow.pop %v2231
    %v2233 = vmul.f32 %v2228, 1.442695
    %v2234 = vpow.pop %v2233
    %v2235 = vsel %vm1644, %v2230, 0.0
    %2236 = vadd.xlane.f32.xlu0 %v2235
    %v2237 = vpop.xlane.xlu0 %2236
    %v2238 = vsel %vm1644, %v2232, 0.0
    %2239 = vadd.xlane.f32.xlu0 %v2238
    %v2240 = vpop.xlane.xlu0 %2239
    %v2241 = vsel %vm1651, %v2234, 0.0
    %2242 = vadd.xlane.f32.xlu0 %v2241
    %v2243 = vpop.xlane.xlu0 %2242
    %v2244 = vrcp.pop %v2237
    %v2245 = vrcp.pop %v2240
    %v2246 = vrcp.pop %v2243
    %v2247 = vmul.f32 %v2230, %v2244
    %v2248 = vmul.f32 %v2232, %v2245
    %v2249 = vmul.f32 %v2234, %v2246
    %v2250 = vpack.c.bf16 %v2248, %v2247
    %v2251 = vpack.c.bf16 %v2249, %v2249
    %2252 = vrot.lane.b32.xlu0 %v2082, 96
    %v2253 = vpop.permute.xlu0 %2252
    %2254 = vrot.lane.b32.xlu0 %v2083, 96
    %v2255 = vpop.permute.xlu0 %2254
    %v2258 = vsel %vm1644, %v2250, 0
    %v2261 = vsel %vm1644, %v2251, 0
    %v2264 = vand.u32 %v2255, %v1691
    %2266 = vmatprep.subr.bf16.mxu0 0
    %2267 = vmatpush1.bf16.msra.mxu0 0
    %2268 = vmatprep.subr.bf16.mxu0 0
    %2269 = vmatpush1.bf16.msra.mxu0 0
    %2270 = vmatprep.subr.bf16.mxu0 0
    %2271 = vmatpush1.bf16.msra.mxu0 0
    %2272 = vmatprep.subr.bf16.mxu0 0
    %2273 = vmatpush1.bf16.msra.mxu0 0
    %2274 = vmatprep.subr.bf16.mxu0 0
    %2275 = vmatpush1.bf16.msra.mxu0 0
    %2276 = vmatprep.subr.bf16.mxu0 0
    %2277 = vmatpush1.bf16.msra.mxu0 0
    %2278 = vmatprep.subr.bf16.mxu0 0
    %2279 = vmatpush1.bf16.msra.mxu0 %v2264
    %2280 = vmatprep.subr.bf16.mxu0 0
    %2281 = vmatpush1.bf16.msra.mxu0 %v2253
    %2282 = vmatprep.subr.bf16.mxu0 0
    %2283 = vmatpush2.bf16.msra.mxu0 0
    %2284 = vmatprep.subr.bf16.mxu0 0
    %2285 = vmatpush2.bf16.msra.mxu0 0
    %2286 = vmatprep.subr.bf16.mxu0 0
    %2287 = vmatpush2.bf16.msra.mxu0 0
    %2288 = vmatprep.subr.bf16.mxu0 0
    %2289 = vmatpush2.bf16.msra.mxu0 0
    %2290 = vmatprep.subr.bf16.mxu0 0
    %2291 = vmatpush2.bf16.msra.mxu0 0
    %2292 = vmatprep.subr.bf16.mxu0 0
    %2293 = vmatpush2.bf16.msra.mxu0 0
    %2294 = vmatprep.subr.bf16.mxu0 0
    %2295 = vmatpush2.bf16.msra.mxu0 0
    %2296 = vmatprep.subr.bf16.mxu0 0
    %2297 = vmatpush2.bf16.msra.mxu0 0
    %2298 = vmatprep.mubr.bf16.mxu0 0
    %2299 = vmatmul.mubr.bf16.gmra.mxu0 %v2258
    %v2300 = vpop.f32.mrf.mxu0
    %v2301 = vadd.f32 0.0, %v2300
    %v2302 = vpop.f32.mrf.mxu0
    %v2303 = vpop.f32.mrf.mxu0
    %v2304 = vadd.f32 0.0, %v2303
    %v2305 = vpop.f32.mrf.mxu0
    %2306 = vmatprep.mubr.bf16.mxu0 0
    %2307 = vmatmul.mubr.bf16.gmra.mxu0 %v2261
    %v2308 = vpop.f32.mrf.mxu0
    %v2309 = vadd.f32 0.0, %v2308
    %v2310 = vpop.f32.mrf.mxu0
    %v2311 = vpop.f32.mrf.mxu0
    %v2312 = vpop.f32.mrf.mxu0
    %2313 = vdwg.mxu0
    %2317 = vrot.lane.b32.xlu0 %v2301, 32
    %v2318 = vpop.permute.xlu0 %2317
    %2319 = vrot.lane.b32.xlu0 %v2304, 32
    %v2320 = vpop.permute.xlu0 %2319
    %2321 = vrot.lane.b32.xlu0 %v2309, 32
    %v2322 = vpop.permute.xlu0 %2321
    %v2326 = vsel %vm69, %v2130, %v2318
    %v2327 = vsel %vm69, %v2133, %v2320
    %v2328 = vsel %vm69, %v2138, %v2322
    %v2332 = vrot.slane %v2326, 7
    %v2333 = vrot.slane %v2327, 7
    %v2334 = vsel %vm1689, %v2332, %v2333
    %v2335 = vrot.slane %v2328, 7
    %v2336 = vsel %vm1689, %v2333, %v2335
    %v2340 = vsel %vm1689, %v1934, %v2332
    %v2341 = vld [vmem:[%s3 + $0xe0] sm:$0xf]
    %v2342 = vld [vmem:[%s3 + $0xe4] sm:$0xf]
    %v2343 = vld [vmem:[%s3 + $0xe8] sm:$0xf]
    %v2344 = vld [vmem:[%s3 + $0xec] sm:$0xf]
    %v2345 = vld [vmem:[%s3 + $0xf0] sm:$0xf]
    %v2346 = vld [vmem:[%s3 + $0xf4] sm:$0xf]
    %v2347 = vld [vmem:[%s3 + $0xf8] sm:$0xf]
    %v2348 = vld [vmem:[%s3 + $0xfc] sm:$0xf]
    %v2349 = vpack.c.bf16 %v1933, %v1932
    %v2350 = vpack.c.bf16 %v2334, %v2340
    %v2351 = vpack.c.bf16 %v2336, %v2336
    %v2352 = vld [vmem:[%s7 + $0xe] sm:$0x1]
    %v2353 = vlaneseq
    %v2354 = vshrl.u32 %v2353, 7
    %v2355 = vsub.s32 0, %v2354
    %v2356 = vrot.slane %v2352, %v2355
    %v2365 = vunpack.c.l.b16 %v2341
    %v2366 = vunpack.c.l.b16 %v2342
    %v2367 = vunpack.c.l.b16 %v2343
    %v2368 = vunpack.c.l.b16 %v2344
    %v2369 = vunpack.c.l.b16 %v2345
    %v2370 = vunpack.c.l.b16 %v2346
    %v2371 = vunpack.c.l.b16 %v2347
    %v2372 = vunpack.c.l.b16 %v2348
    %v2373 = vpack.c.b16 %v2366, %v2365
    %v2374 = vpack.c.b16 %v2368, %v2367
    %v2375 = vpack.c.b16 %v2370, %v2369
    %v2376 = vpack.c.b16 %v2372, %v2371
    %v2382 = vsel %vm255, %v2349, 0
    %v2385 = vsel %vm255, %v2350, 0
    %v2388 = vsel %vm255, %v2351, 0
    %2390 = vmatprep.subr.bf16.mxu0 0
    %2391 = vmatpush1.bf16.msra.mxu0 0
    %2392 = vmatprep.subr.bf16.mxu0 0
    %2393 = vmatpush1.bf16.msra.mxu0 0
    %2394 = vmatprep.subr.bf16.mxu0 0
    %2395 = vmatpush1.bf16.msra.mxu0 0
    %2396 = vmatprep.subr.bf16.mxu0 0
    %2397 = vmatpush1.bf16.msra.mxu0 0
    %2398 = vmatprep.subr.bf16.mxu0 0
    %2399 = vmatpush1.bf16.msra.mxu0 %v2376
    %2400 = vmatprep.subr.bf16.mxu0 0
    %2401 = vmatpush1.bf16.msra.mxu0 %v2375
    %2402 = vmatprep.subr.bf16.mxu0 0
    %2403 = vmatpush1.bf16.msra.mxu0 %v2374
    %2404 = vmatprep.subr.bf16.mxu0 0
    %2405 = vmatpush1.bf16.msra.mxu0 %v2373
    %2406 = vmatprep.subr.bf16.mxu0 0
    %2407 = vmatpush2.bf16.msra.mxu0 0
    %2408 = vmatprep.subr.bf16.mxu0 0
    %2409 = vmatpush2.bf16.msra.mxu0 0
    %2410 = vmatprep.subr.bf16.mxu0 0
    %2411 = vmatpush2.bf16.msra.mxu0 0
    %2412 = vmatprep.subr.bf16.mxu0 0
    %2413 = vmatpush2.bf16.msra.mxu0 0
    %2414 = vmatprep.subr.bf16.mxu0 0
    %2415 = vmatpush2.bf16.msra.mxu0 0
    %2416 = vmatprep.subr.bf16.mxu0 0
    %2417 = vmatpush2.bf16.msra.mxu0 0
    %2418 = vmatprep.subr.bf16.mxu0 0
    %2419 = vmatpush2.bf16.msra.mxu0 0
    %2420 = vmatprep.subr.bf16.mxu0 0
    %2421 = vmatpush2.bf16.msra.mxu0 0
    %2422 = vmatprep.mubr.bf16.mxu0 0
    %2423 = vmatmul.mubr.bf16.gmra.mxu0 %v2382
    %v2424 = vpop.f32.mrf.mxu0
    %v2425 = vadd.f32 %v2356, %v2424
    %v2426 = vpop.f32.mrf.mxu0
    %v2427 = vpop.f32.mrf.mxu0
    %v2428 = vadd.f32 %v2356, %v2427
    %v2429 = vpop.f32.mrf.mxu0
    %2430 = vmatprep.mubr.bf16.mxu0 0
    %2431 = vmatmul.mubr.bf16.gmra.mxu0 %v2385
    %v2432 = vpop.f32.mrf.mxu0
    %v2433 = vadd.f32 %v2356, %v2432
    %v2434 = vpop.f32.mrf.mxu0
    %v2435 = vpop.f32.mrf.mxu0
    %v2436 = vadd.f32 %v2356, %v2435
    %v2437 = vpop.f32.mrf.mxu0
    %2438 = vmatprep.mubr.bf16.mxu0 0
    %2439 = vmatmul.mubr.bf16.gmra.mxu0 %v2388
    %v2440 = vpop.f32.mrf.mxu0
    %v2441 = vadd.f32 %v2356, %v2440
    %v2442 = vpop.f32.mrf.mxu0
    %v2443 = vpop.f32.mrf.mxu0
    %v2444 = vpop.f32.mrf.mxu0
    %2445 = vdwg.mxu0
    %v2446 = vadd.f32 %v212, %v2425
    %v2447 = vadd.f32 %v213, %v2428
    %v2448 = vadd.f32 %v214, %v2433
    %v2449 = vadd.f32 %v215, %v2436
    %v2450 = vadd.f32 %v216, %v2441
    %v2451 = vld [vmem:[%s7 + $0xf] sm:$0x1]
    %v2452 = vld [vmem:[%s7 + $0x10] sm:$0x1]
    %v2453 = vsel %vm255, %v2446, 0.0
    %2454 = vadd.xlane.f32.xlu0 %v2453
    %v2455 = vpop.xlane.xlu0 %2454
    %v2456 = vsel %vm255, %v2447, 0.0
    %2457 = vadd.xlane.f32.xlu0 %v2456
    %v2458 = vpop.xlane.xlu0 %2457
    %v2459 = vsel %vm255, %v2448, 0.0
    %2460 = vadd.xlane.f32.xlu0 %v2459
    %v2461 = vpop.xlane.xlu0 %2460
    %v2462 = vsel %vm255, %v2449, 0.0
    %2463 = vadd.xlane.f32.xlu0 %v2462
    %v2464 = vpop.xlane.xlu0 %2463
    %vm2465 = vcmask 517120
    %v2466 = vsel %vm2465, %v2450, 0.0
    %2467 = vadd.xlane.f32.xlu0 %v2466
    %v2468 = vpop.xlane.xlu0 %2467
    %v2469 = vmul.f32 %v2455, %v1004
    %v2470 = vmul.f32 %v2458, %v1004
    %v2471 = vmul.f32 %v2461, %v1004
    %v2472 = vmul.f32 %v2464, %v1004
    %v2473 = vmul.f32 %v2468, %v1004
    %v2474 = vsub.f32 %v2446, %v2469
    %v2475 = vsub.f32 %v2447, %v2470
    %v2476 = vsub.f32 %v2448, %v2471
    %v2477 = vsub.f32 %v2449, %v2472
    %v2478 = vsub.f32 %v2450, %v2473
    %v2479 = vmul.f32 %v2474, %v2474
    %v2480 = vmul.f32 %v2475, %v2475
    %v2481 = vmul.f32 %v2476, %v2476
    %v2482 = vmul.f32 %v2477, %v2477
    %v2483 = vmul.f32 %v2478, %v2478
    %v2484 = vsel %vm255, %v2479, 0.0
    %2485 = vadd.xlane.f32.xlu0 %v2484
    %v2486 = vpop.xlane.xlu0 %2485
    %v2487 = vsel %vm255, %v2480, 0.0
    %2488 = vadd.xlane.f32.xlu0 %v2487
    %v2489 = vpop.xlane.xlu0 %2488
    %v2490 = vsel %vm255, %v2481, 0.0
    %2491 = vadd.xlane.f32.xlu0 %v2490
    %v2492 = vpop.xlane.xlu0 %2491
    %v2493 = vsel %vm255, %v2482, 0.0
    %2494 = vadd.xlane.f32.xlu0 %v2493
    %v2495 = vpop.xlane.xlu0 %2494
    %v2496 = vsel %vm2465, %v2483, 0.0
    %2497 = vadd.xlane.f32.xlu0 %v2496
    %v2498 = vpop.xlane.xlu0 %2497
    %v2499 = vmul.f32 %v2486, %v1004
    %v2500 = vmul.f32 %v2489, %v1004
    %v2501 = vmul.f32 %v2492, %v1004
    %v2502 = vmul.f32 %v2495, %v1004
    %v2503 = vmul.f32 %v2498, %v1004
    %v2504 = vadd.f32 %v2499, 1e-05
    %v2505 = vadd.f32 %v2500, 1e-05
    %v2506 = vadd.f32 %v2501, 1e-05
    %v2507 = vadd.f32 %v2502, 1e-05
    %v2508 = vadd.f32 %v2503, 1e-05
    %v2509 = vrsqrt.pop %v2504
    %v2510 = vrsqrt.pop %v2505
    %v2511 = vrsqrt.pop %v2506
    %v2512 = vrsqrt.pop %v2507
    %v2513 = vrsqrt.pop %v2508
    %v2514 = vmul.f32 %v2474, %v2509
    %v2515 = vmul.f32 %v2475, %v2510
    %v2516 = vmul.f32 %v2476, %v2511
    %v2517 = vmul.f32 %v2477, %v2512
    %v2518 = vmul.f32 %v2478, %v2513
    %v2519 = vlaneseq
    %v2520 = vshrl.u32 %v2519, 7
    %v2521 = vsub.s32 0, %v2520
    %v2522 = vrot.slane %v2451, %v2521
    %v2523 = vmul.f32 %v2514, %v2522
    %v2524 = vmul.f32 %v2515, %v2522
    %v2525 = vmul.f32 %v2516, %v2522
    %v2526 = vmul.f32 %v2517, %v2522
    %v2527 = vmul.f32 %v2518, %v2522
    %v2528 = vlaneseq
    %v2529 = vshrl.u32 %v2528, 7
    %v2530 = vsub.s32 0, %v2529
    %v2531 = vrot.slane %v2452, %v2530
    %v2532 = vadd.f32 %v2523, %v2531
    %v2533 = vadd.f32 %v2524, %v2531
    %v2534 = vadd.f32 %v2525, %v2531
    %v2535 = vadd.f32 %v2526, %v2531
    %v2536 = vadd.f32 %v2527, %v2531
    %v2537 = vld [vmem:[%s3 + $0x100] sm:$0xf]
    %v2538 = vld [vmem:[%s3 + $0x104] sm:$0xf]
    %v2539 = vld [vmem:[%s3 + $0x108] sm:$0xf]
    %v2540 = vld [vmem:[%s3 + $0x10c] sm:$0xf]
    %v2541 = vld [vmem:[%s3 + $0x110] sm:$0xf]
    %v2542 = vld [vmem:[%s3 + $0x114] sm:$0xf]
    %v2543 = vld [vmem:[%s3 + $0x118] sm:$0xf]
    %v2544 = vld [vmem:[%s3 + $0x11c] sm:$0xf]
    %v2545 = vpack.c.bf16 %v2533, %v2532
    %v2546 = vpack.c.bf16 %v2535, %v2534
    %v2547 = vpack.c.bf16 %v2536, %v2536
    %v2548 = vld [vmem:[%s7 + $0x11] sm:$0x1]
    %v2549 = vlaneseq
    %v2550 = vshrl.u32 %v2549, 7
    %v2551 = vsub.s32 0, %v2550
    %v2552 = vrot.slane %v2548, %v2551
    %v2561 = vunpack.c.l.b16 %v2537
    %v2562 = vunpack.c.l.b16 %v2538
    %v2563 = vunpack.c.l.b16 %v2539
    %v2564 = vunpack.c.l.b16 %v2540
    %v2565 = vunpack.c.l.b16 %v2541
    %v2566 = vunpack.c.l.b16 %v2542
    %v2567 = vunpack.c.l.b16 %v2543
    %v2568 = vunpack.c.l.b16 %v2544
    %v2569 = vpack.c.b16 %v2562, %v2561
    %v2570 = vpack.c.b16 %v2564, %v2563
    %v2571 = vpack.c.b16 %v2566, %v2565
    %v2572 = vpack.c.b16 %v2568, %v2567
    %v2578 = vsel %vm255, %v2545, 0
    %v2581 = vsel %vm255, %v2546, 0
    %v2584 = vsel %vm255, %v2547, 0
    %2586 = vmatprep.subr.bf16.mxu0 0
    %2587 = vmatpush1.bf16.msra.mxu0 0
    %2588 = vmatprep.subr.bf16.mxu0 0
    %2589 = vmatpush1.bf16.msra.mxu0 0
    %2590 = vmatprep.subr.bf16.mxu0 0
    %2591 = vmatpush1.bf16.msra.mxu0 0
    %2592 = vmatprep.subr.bf16.mxu0 0
    %2593 = vmatpush1.bf16.msra.mxu0 0
    %2594 = vmatprep.subr.bf16.mxu0 0
    %2595 = vmatpush1.bf16.msra.mxu0 %v2572
    %2596 = vmatprep.subr.bf16.mxu0 0
    %2597 = vmatpush1.bf16.msra.mxu0 %v2571
    %2598 = vmatprep.subr.bf16.mxu0 0
    %2599 = vmatpush1.bf16.msra.mxu0 %v2570
    %2600 = vmatprep.subr.bf16.mxu0 0
    %2601 = vmatpush1.bf16.msra.mxu0 %v2569
    %2602 = vmatprep.subr.bf16.mxu0 0
    %2603 = vmatpush2.bf16.msra.mxu0 0
    %2604 = vmatprep.subr.bf16.mxu0 0
    %2605 = vmatpush2.bf16.msra.mxu0 0
    %2606 = vmatprep.subr.bf16.mxu0 0
    %2607 = vmatpush2.bf16.msra.mxu0 0
    %2608 = vmatprep.subr.bf16.mxu0 0
    %2609 = vmatpush2.bf16.msra.mxu0 0
    %2610 = vmatprep.subr.bf16.mxu0 0
    %2611 = vmatpush2.bf16.msra.mxu0 0
    %2612 = vmatprep.subr.bf16.mxu0 0
    %2613 = vmatpush2.bf16.msra.mxu0 0
    %2614 = vmatprep.subr.bf16.mxu0 0
    %2615 = vmatpush2.bf16.msra.mxu0 0
    %2616 = vmatprep.subr.bf16.mxu0 0
    %2617 = vmatpush2.bf16.msra.mxu0 0
    %2618 = vmatprep.mubr.bf16.mxu0 0
    %2619 = vmatmul.mubr.bf16.gmra.mxu0 %v2578
    %v2620 = vpop.f32.mrf.mxu0
    %v2621 = vadd.f32 %v2552, %v2620
    %v2622 = vpop.f32.mrf.mxu0
    %v2623 = vpop.f32.mrf.mxu0
    %v2624 = vadd.f32 %v2552, %v2623
    %v2625 = vpop.f32.mrf.mxu0
    %2626 = vmatprep.mubr.bf16.mxu0 0
    %2627 = vmatmul.mubr.bf16.gmra.mxu0 %v2581
    %v2628 = vpop.f32.mrf.mxu0
    %v2629 = vadd.f32 %v2552, %v2628
    %v2630 = vpop.f32.mrf.mxu0
    %v2631 = vpop.f32.mrf.mxu0
    %v2632 = vadd.f32 %v2552, %v2631
    %v2633 = vpop.f32.mrf.mxu0
    %2634 = vmatprep.mubr.bf16.mxu0 0
    %2635 = vmatmul.mubr.bf16.gmra.mxu0 %v2584
    %v2636 = vpop.f32.mrf.mxu0
    %v2637 = vadd.f32 %v2552, %v2636
    %v2638 = vpop.f32.mrf.mxu0
    %v2639 = vpop.f32.mrf.mxu0
    %v2640 = vpop.f32.mrf.mxu0
    %2641 = vdwg.mxu0
    %v2642 = vld [vmem:[%s3 + $0x120] sm:$0xf]
    %v2643 = vld [vmem:[%s3 + $0x124] sm:$0xf]
    %v2644 = vld [vmem:[%s3 + $0x128] sm:$0xf]
    %v2645 = vld [vmem:[%s3 + $0x12c] sm:$0xf]
    %v2646 = vld [vmem:[%s3 + $0x130] sm:$0xf]
    %v2647 = vld [vmem:[%s3 + $0x134] sm:$0xf]
    %v2648 = vld [vmem:[%s3 + $0x138] sm:$0xf]
    %v2649 = vld [vmem:[%s3 + $0x13c] sm:$0xf]
    %v2650 = vpack.c.bf16 %v1273, %v1272
    %v2651 = vld [vmem:[%s7 + $0x12] sm:$0x1]
    %v2652 = vlaneseq
    %v2653 = vshrl.u32 %v2652, 7
    %v2654 = vsub.s32 0, %v2653
    %v2655 = vrot.slane %v2651, %v2654
    %v2664 = vunpack.c.l.b16 %v2642
    %v2665 = vunpack.c.l.b16 %v2643
    %v2666 = vunpack.c.l.b16 %v2644
    %v2667 = vunpack.c.l.b16 %v2645
    %v2668 = vunpack.c.l.b16 %v2646
    %v2669 = vunpack.c.l.b16 %v2647
    %v2670 = vunpack.c.l.b16 %v2648
    %v2671 = vunpack.c.l.b16 %v2649
    %v2672 = vpack.c.b16 %v2665, %v2664
    %v2673 = vpack.c.b16 %v2667, %v2666
    %v2674 = vpack.c.b16 %v2669, %v2668
    %v2675 = vpack.c.b16 %v2671, %v2670
    %v2681 = vsel %vm255, %v2650, 0
    %2683 = vmatprep.subr.bf16.mxu0 0
    %2684 = vmatpush1.bf16.msra.mxu0 0
    %2685 = vmatprep.subr.bf16.mxu0 0
    %2686 = vmatpush1.bf16.msra.mxu0 0
    %2687 = vmatprep.subr.bf16.mxu0 0
    %2688 = vmatpush1.bf16.msra.mxu0 0
    %2689 = vmatprep.subr.bf16.mxu0 0
    %2690 = vmatpush1.bf16.msra.mxu0 0
    %2691 = vmatprep.subr.bf16.mxu0 0
    %2692 = vmatpush1.bf16.msra.mxu0 %v2675
    %2693 = vmatprep.subr.bf16.mxu0 0
    %2694 = vmatpush1.bf16.msra.mxu0 %v2674
    %2695 = vmatprep.subr.bf16.mxu0 0
    %2696 = vmatpush1.bf16.msra.mxu0 %v2673
    %2697 = vmatprep.subr.bf16.mxu0 0
    %2698 = vmatpush1.bf16.msra.mxu0 %v2672
    %2699 = vmatprep.subr.bf16.mxu0 0
    %2700 = vmatpush2.bf16.msra.mxu0 0
    %2701 = vmatprep.subr.bf16.mxu0 0
    %2702 = vmatpush2.bf16.msra.mxu0 0
    %2703 = vmatprep.subr.bf16.mxu0 0
    %2704 = vmatpush2.bf16.msra.mxu0 0
    %2705 = vmatprep.subr.bf16.mxu0 0
    %2706 = vmatpush2.bf16.msra.mxu0 0
    %2707 = vmatprep.subr.bf16.mxu0 0
    %2708 = vmatpush2.bf16.msra.mxu0 0
    %2709 = vmatprep.subr.bf16.mxu0 0
    %2710 = vmatpush2.bf16.msra.mxu0 0
    %2711 = vmatprep.subr.bf16.mxu0 0
    %2712 = vmatpush2.bf16.msra.mxu0 0
    %2713 = vmatprep.subr.bf16.mxu0 0
    %2714 = vmatpush2.bf16.msra.mxu0 0
    %2715 = vmatprep.mubr.bf16.mxu0 0
    %2716 = vmatmul.mubr.bf16.gmra.mxu0 %v2681
    %v2717 = vpop.f32.mrf.mxu0
    %v2718 = vadd.f32 %v2655, %v2717
    %v2719 = vpop.f32.mrf.mxu0
    %v2720 = vpop.f32.mrf.mxu0
    %v2721 = vadd.f32 %v2655, %v2720
    %v2722 = vpop.f32.mrf.mxu0
    %2723 = vdwg.mxu0
    %v2724 = vld [vmem:[%s3 + $0x140] sm:$0xf]
    %v2725 = vld [vmem:[%s3 + $0x144] sm:$0xf]
    %v2726 = vld [vmem:[%s3 + $0x148] sm:$0xf]
    %v2727 = vld [vmem:[%s3 + $0x14c] sm:$0xf]
    %v2728 = vld [vmem:[%s3 + $0x150] sm:$0xf]
    %v2729 = vld [vmem:[%s3 + $0x154] sm:$0xf]
    %v2730 = vld [vmem:[%s3 + $0x158] sm:$0xf]
    %v2731 = vld [vmem:[%s3 + $0x15c] sm:$0xf]
    %v2732 = vld [vmem:[%s7 + $0x13] sm:$0x1]
    %v2733 = vlaneseq
    %v2734 = vshrl.u32 %v2733, 7
    %v2735 = vsub.s32 0, %v2734
    %v2736 = vrot.slane %v2732, %v2735
    %v2745 = vunpack.c.l.b16 %v2724
    %v2746 = vunpack.c.l.b16 %v2725
    %v2747 = vunpack.c.l.b16 %v2726
    %v2748 = vunpack.c.l.b16 %v2727
    %v2749 = vunpack.c.l.b16 %v2728
    %v2750 = vunpack.c.l.b16 %v2729
    %v2751 = vunpack.c.l.b16 %v2730
    %v2752 = vunpack.c.l.b16 %v2731
    %v2753 = vpack.c.b16 %v2746, %v2745
    %v2754 = vpack.c.b16 %v2748, %v2747
    %v2755 = vpack.c.b16 %v2750, %v2749
    %v2756 = vpack.c.b16 %v2752, %v2751
    %2761 = vmatprep.subr.bf16.mxu0 0
    %2762 = vmatpush1.bf16.msra.mxu0 0
    %2763 = vmatprep.subr.bf16.mxu0 0
    %2764 = vmatpush1.bf16.msra.mxu0 0
    %2765 = vmatprep.subr.bf16.mxu0 0
    %2766 = vmatpush1.bf16.msra.mxu0 0
    %2767 = vmatprep.subr.bf16.mxu0 0
    %2768 = vmatpush1.bf16.msra.mxu0 0
    %2769 = vmatprep.subr.bf16.mxu0 0
    %2770 = vmatpush1.bf16.msra.mxu0 %v2756
    %2771 = vmatprep.subr.bf16.mxu0 0
    %2772 = vmatpush1.bf16.msra.mxu0 %v2755
    %2773 = vmatprep.subr.bf16.mxu0 0
    %2774 = vmatpush1.bf16.msra.mxu0 %v2754
    %2775 = vmatprep.subr.bf16.mxu0 0
    %2776 = vmatpush1.bf16.msra.mxu0 %v2753
    %2777 = vmatprep.subr.bf16.mxu0 0
    %2778 = vmatpush2.bf16.msra.mxu0 0
    %2779 = vmatprep.subr.bf16.mxu0 0
    %2780 = vmatpush2.bf16.msra.mxu0 0
    %2781 = vmatprep.subr.bf16.mxu0 0
    %2782 = vmatpush2.bf16.msra.mxu0 0
    %2783 = vmatprep.subr.bf16.mxu0 0
    %2784 = vmatpush2.bf16.msra.mxu0 0
    %2785 = vmatprep.subr.bf16.mxu0 0
    %2786 = vmatpush2.bf16.msra.mxu0 0
    %2787 = vmatprep.subr.bf16.mxu0 0
    %2788 = vmatpush2.bf16.msra.mxu0 0
    %2789 = vmatprep.subr.bf16.mxu0 0
    %2790 = vmatpush2.bf16.msra.mxu0 0
    %2791 = vmatprep.subr.bf16.mxu0 0
    %2792 = vmatpush2.bf16.msra.mxu0 0
    %2793 = vmatprep.mubr.bf16.mxu0 0
    %2794 = vmatmul.mubr.bf16.gmra.mxu0 %v2681
    %v2795 = vpop.f32.mrf.mxu0
    %v2796 = vadd.f32 %v2736, %v2795
    %v2797 = vpop.f32.mrf.mxu0
    %v2798 = vpop.f32.mrf.mxu0
    %v2799 = vadd.f32 %v2736, %v2798
    %v2800 = vpop.f32.mrf.mxu0
    %2801 = vdwg.mxu0
    %v2802 = vpack.c.bf16 %v2624, %v2621
    %v2803 = vpack.c.bf16 %v2629, %v2629
    %v2804 = vpack.c.bf16 %v2718, %v2718
    %v2806 = vsel %vm69, %v2802, 0
    %v2809 = vsel %vm69, %v2803, 0
    %v2812 = vsel %vm69, %v2804, 0
    %2814 = vmatprep.subr.bf16.mxu0 0
    %2815 = vmatpush1.bf16.xpose.msra.mxu0 0
    %2816 = vmatprep.subr.bf16.mxu0 0
    %2817 = vmatpush1.bf16.xpose.msra.mxu0 0
    %2818 = vmatprep.subr.bf16.mxu0 0
    %2819 = vmatpush1.bf16.xpose.msra.mxu0 0
    %2820 = vmatprep.subr.bf16.mxu0 0
    %2821 = vmatpush1.bf16.xpose.msra.mxu0 0
    %2822 = vmatprep.subr.bf16.mxu0 0
    %2823 = vmatpush1.bf16.xpose.msra.mxu0 0
    %2824 = vmatprep.subr.bf16.mxu0 0
    %2825 = vmatpush1.bf16.xpose.msra.mxu0 0
    %2826 = vmatprep.subr.bf16.mxu0 0
    %2827 = vmatpush1.bf16.xpose.msra.mxu0 0
    %2828 = vmatprep.subr.bf16.mxu0 0
    %2829 = vmatpush1.bf16.xpose.msra.mxu0 %v2812
    %2830 = vmatprep.subr.bf16.mxu0 0
    %2831 = vmatpush2.bf16.xpose.msra.mxu0 0
    %2832 = vmatprep.subr.bf16.mxu0 0
    %2833 = vmatpush2.bf16.xpose.msra.mxu0 0
    %2834 = vmatprep.subr.bf16.mxu0 0
    %2835 = vmatpush2.bf16.xpose.msra.mxu0 0
    %2836 = vmatprep.subr.bf16.mxu0 0
    %2837 = vmatpush2.bf16.xpose.msra.mxu0 0
    %2838 = vmatprep.subr.bf16.mxu0 0
    %2839 = vmatpush2.bf16.xpose.msra.mxu0 0
    %2840 = vmatprep.subr.bf16.mxu0 0
    %2841 = vmatpush2.bf16.xpose.msra.mxu0 0
    %2842 = vmatprep.subr.bf16.mxu0 0
    %2843 = vmatpush2.bf16.xpose.msra.mxu0 0
    %2844 = vmatprep.subr.bf16.mxu0 0
    %2845 = vmatpush2.bf16.xpose.msra.mxu0 0
    %2846 = vmatprep.mubr.bf16.mxu0 0
    %2847 = vmatmul.mubr.bf16.gmra.mxu0 %v2806
    %v2848 = vpop.f32.mrf.mxu0
    %v2849 = vadd.f32 0.0, %v2848
    %v2850 = vpop.f32.mrf.mxu0
    %v2851 = vpop.f32.mrf.mxu0
    %v2852 = vadd.f32 0.0, %v2851
    %v2853 = vpop.f32.mrf.mxu0
    %2854 = vmatprep.mubr.bf16.mxu0 0
    %2855 = vmatmul.mubr.bf16.gmra.mxu0 %v2809
    %v2856 = vpop.f32.mrf.mxu0
    %v2857 = vadd.f32 0.0, %v2856
    %v2858 = vpop.f32.mrf.mxu0
    %v2859 = vpop.f32.mrf.mxu0
    %v2860 = vpop.f32.mrf.mxu0
    %2861 = vdwg.mxu0
    %v2862 = vmul.f32 %v2849, 0.17677669
    %v2863 = vmul.f32 %v2852, 0.17677669
    %v2864 = vmul.f32 %v2857, 0.17677669
    %v2865 = vsel %vm505, %v2862, -inf
    %2866 = vmax.xlane.f32.xlu0 %v2865
    %v2867 = vpop.xlane.xlu0 %2866
    %v2868 = vsel %vm505, %v2863, -inf
    %2869 = vmax.xlane.f32.xlu0 %v2868
    %v2870 = vpop.xlane.xlu0 %2869
    %vm2871 = vcmask 57344
    %v2872 = vsel %vm2871, %v2864, -inf
    %2873 = vmax.xlane.f32.xlu0 %v2872
    %v2874 = vpop.xlane.xlu0 %2873
    %v2875 = vsub.f32 %v2862, %v2867
    %v2876 = vsub.f32 %v2863, %v2870
    %v2877 = vsub.f32 %v2864, %v2874
    %v2878 = vmul.f32 %v2875, 1.442695
    %v2879 = vpow.pop %v2878
    %v2880 = vmul.f32 %v2876, 1.442695
    %v2881 = vpow.pop %v2880
    %v2882 = vmul.f32 %v2877, 1.442695
    %v2883 = vpow.pop %v2882
    %v2884 = vsel %vm505, %v2879, 0.0
    %2885 = vadd.xlane.f32.xlu0 %v2884
    %v2886 = vpop.xlane.xlu0 %2885
    %v2887 = vsel %vm505, %v2881, 0.0
    %2888 = vadd.xlane.f32.xlu0 %v2887
    %v2889 = vpop.xlane.xlu0 %2888
    %v2890 = vsel %vm2871, %v2883, 0.0
    %2891 = vadd.xlane.f32.xlu0 %v2890
    %v2892 = vpop.xlane.xlu0 %2891
    %v2893 = vrcp.pop %v2886
    %v2894 = vrcp.pop %v2889
    %v2895 = vrcp.pop %v2892
    %v2896 = vmul.f32 %v2879, %v2893
    %v2897 = vmul.f32 %v2881, %v2894
    %v2898 = vmul.f32 %v2883, %v2895
    %v2899 = vpack.c.bf16 %v2897, %v2896
    %v2900 = vpack.c.bf16 %v2898, %v2898
    %v2901 = vpack.c.bf16 %v2796, %v2796
    %v2903 = vsel %vm505, %v2899, 0
    %v2906 = vsel %vm505, %v2900, 0
    %v2909 = vsel %vm522, %v2901, 0
    %2911 = vmatprep.subr.bf16.mxu0 0
    %2912 = vmatpush1.bf16.msra.mxu0 0
    %2913 = vmatprep.subr.bf16.mxu0 0
    %2914 = vmatpush1.bf16.msra.mxu0 0
    %2915 = vmatprep.subr.bf16.mxu0 0
    %2916 = vmatpush1.bf16.msra.mxu0 0
    %2917 = vmatprep.subr.bf16.mxu0 0
    %2918 = vmatpush1.bf16.msra.mxu0 0
    %2919 = vmatprep.subr.bf16.mxu0 0
    %2920 = vmatpush1.bf16.msra.mxu0 0
    %2921 = vmatprep.subr.bf16.mxu0 0
    %2922 = vmatpush1.bf16.msra.mxu0 0
    %2923 = vmatprep.subr.bf16.mxu0 0
    %2924 = vmatpush1.bf16.msra.mxu0 0
    %2925 = vmatprep.subr.bf16.mxu0 0
    %2926 = vmatpush1.bf16.msra.mxu0 %v2909
    %2927 = vmatprep.subr.bf16.mxu0 0
    %2928 = vmatpush2.bf16.msra.mxu0 0
    %2929 = vmatprep.subr.bf16.mxu0 0
    %2930 = vmatpush2.bf16.msra.mxu0 0
    %2931 = vmatprep.subr.bf16.mxu0 0
    %2932 = vmatpush2.bf16.msra.mxu0 0
    %2933 = vmatprep.subr.bf16.mxu0 0
    %2934 = vmatpush2.bf16.msra.mxu0 0
    %2935 = vmatprep.subr.bf16.mxu0 0
    %2936 = vmatpush2.bf16.msra.mxu0 0
    %2937 = vmatprep.subr.bf16.mxu0 0
    %2938 = vmatpush2.bf16.msra.mxu0 0
    %2939 = vmatprep.subr.bf16.mxu0 0
    %2940 = vmatpush2.bf16.msra.mxu0 0
    %2941 = vmatprep.subr.bf16.mxu0 0
    %2942 = vmatpush2.bf16.msra.mxu0 0
    %2943 = vmatprep.mubr.bf16.mxu0 0
    %2944 = vmatmul.mubr.bf16.gmra.mxu0 %v2903
    %v2945 = vpop.f32.mrf.mxu0
    %v2946 = vadd.f32 0.0, %v2945
    %v2947 = vpop.f32.mrf.mxu0
    %v2948 = vpop.f32.mrf.mxu0
    %v2949 = vadd.f32 0.0, %v2948
    %v2950 = vpop.f32.mrf.mxu0
    %2951 = vmatprep.mubr.bf16.mxu0 0
    %2952 = vmatmul.mubr.bf16.gmra.mxu0 %v2906
    %v2953 = vpop.f32.mrf.mxu0
    %v2954 = vadd.f32 0.0, %v2953
    %v2955 = vpop.f32.mrf.mxu0
    %v2956 = vpop.f32.mrf.mxu0
    %v2957 = vpop.f32.mrf.mxu0
    %2958 = vdwg.mxu0
    %2961 = vrot.lane.b32.xlu0 %v2802, 96
    %v2962 = vpop.permute.xlu0 %2961
    %2963 = vrot.lane.b32.xlu0 %v2803, 96
    %v2964 = vpop.permute.xlu0 %2963
    %2966 = vrot.lane.b32.xlu0 %v2804, 96
    %v2967 = vpop.permute.xlu0 %2966
    %v2969 = vsel %vm69, %v2962, 0
    %v2972 = vsel %vm69, %v2964, 0
    %v2975 = vsel %vm69, %v2967, 0
    %2977 = vmatprep.subr.bf16.mxu0 0
    %2978 = vmatpush1.bf16.xpose.msra.mxu0 0
    %2979 = vmatprep.subr.bf16.mxu0 0
    %2980 = vmatpush1.bf16.xpose.msra.mxu0 0
    %2981 = vmatprep.subr.bf16.mxu0 0
    %2982 = vmatpush1.bf16.xpose.msra.mxu0 0
    %2983 = vmatprep.subr.bf16.mxu0 0
    %2984 = vmatpush1.bf16.xpose.msra.mxu0 0
    %2985 = vmatprep.subr.bf16.mxu0 0
    %2986 = vmatpush1.bf16.xpose.msra.mxu0 0
    %2987 = vmatprep.subr.bf16.mxu0 0
    %2988 = vmatpush1.bf16.xpose.msra.mxu0 0
    %2989 = vmatprep.subr.bf16.mxu0 0
    %2990 = vmatpush1.bf16.xpose.msra.mxu0 0
    %2991 = vmatprep.subr.bf16.mxu0 0
    %2992 = vmatpush1.bf16.xpose.msra.mxu0 %v2975
    %2993 = vmatprep.subr.bf16.mxu0 0
    %2994 = vmatpush2.bf16.xpose.msra.mxu0 0
    %2995 = vmatprep.subr.bf16.mxu0 0
    %2996 = vmatpush2.bf16.xpose.msra.mxu0 0
    %2997 = vmatprep.subr.bf16.mxu0 0
    %2998 = vmatpush2.bf16.xpose.msra.mxu0 0
    %2999 = vmatprep.subr.bf16.mxu0 0
    %3000 = vmatpush2.bf16.xpose.msra.mxu0 0
    %3001 = vmatprep.subr.bf16.mxu0 0
    %3002 = vmatpush2.bf16.xpose.msra.mxu0 0
    %3003 = vmatprep.subr.bf16.mxu0 0
    %3004 = vmatpush2.bf16.xpose.msra.mxu0 0
    %3005 = vmatprep.subr.bf16.mxu0 0
    %3006 = vmatpush2.bf16.xpose.msra.mxu0 0
    %3007 = vmatprep.subr.bf16.mxu0 0
    %3008 = vmatpush2.bf16.xpose.msra.mxu0 0
    %3009 = vmatprep.mubr.bf16.mxu0 0
    %3010 = vmatmul.mubr.bf16.gmra.mxu0 %v2969
    %v3011 = vpop.f32.mrf.mxu0
    %v3012 = vadd.f32 0.0, %v3011
    %v3013 = vpop.f32.mrf.mxu0
    %v3014 = vpop.f32.mrf.mxu0
    %v3015 = vadd.f32 0.0, %v3014
    %v3016 = vpop.f32.mrf.mxu0
    %3017 = vmatprep.mubr.bf16.mxu0 0
    %3018 = vmatmul.mubr.bf16.gmra.mxu0 %v2972
    %v3019 = vpop.f32.mrf.mxu0
    %v3020 = vadd.f32 0.0, %v3019
    %v3021 = vpop.f32.mrf.mxu0
    %v3022 = vpop.f32.mrf.mxu0
    %v3023 = vpop.f32.mrf.mxu0
    %3024 = vdwg.mxu0
    %v3025 = vmul.f32 %v3012, 0.17677669
    %v3026 = vmul.f32 %v3015, 0.17677669
    %v3027 = vmul.f32 %v3020, 0.17677669
    %v3028 = vsel %vm505, %v3025, -inf
    %3029 = vmax.xlane.f32.xlu0 %v3028
    %v3030 = vpop.xlane.xlu0 %3029
    %v3031 = vsel %vm505, %v3026, -inf
    %3032 = vmax.xlane.f32.xlu0 %v3031
    %v3033 = vpop.xlane.xlu0 %3032
    %v3034 = vsel %vm2871, %v3027, -inf
    %3035 = vmax.xlane.f32.xlu0 %v3034
    %v3036 = vpop.xlane.xlu0 %3035
    %v3037 = vsub.f32 %v3025, %v3030
    %v3038 = vsub.f32 %v3026, %v3033
    %v3039 = vsub.f32 %v3027, %v3036
    %v3040 = vmul.f32 %v3037, 1.442695
    %v3041 = vpow.pop %v3040
    %v3042 = vmul.f32 %v3038, 1.442695
    %v3043 = vpow.pop %v3042
    %v3044 = vmul.f32 %v3039, 1.442695
    %v3045 = vpow.pop %v3044
    %v3046 = vsel %vm505, %v3041, 0.0
    %3047 = vadd.xlane.f32.xlu0 %v3046
    %v3048 = vpop.xlane.xlu0 %3047
    %v3049 = vsel %vm505, %v3043, 0.0
    %3050 = vadd.xlane.f32.xlu0 %v3049
    %v3051 = vpop.xlane.xlu0 %3050
    %v3052 = vsel %vm2871, %v3045, 0.0
    %3053 = vadd.xlane.f32.xlu0 %v3052
    %v3054 = vpop.xlane.xlu0 %3053
    %v3055 = vrcp.pop %v3048
    %v3056 = vrcp.pop %v3051
    %v3057 = vrcp.pop %v3054
    %v3058 = vmul.f32 %v3041, %v3055
    %v3059 = vmul.f32 %v3043, %v3056
    %v3060 = vmul.f32 %v3045, %v3057
    %v3061 = vpack.c.bf16 %v3059, %v3058
    %v3062 = vpack.c.bf16 %v3060, %v3060
    %3064 = vrot.lane.b32.xlu0 %v2901, 96
    %v3065 = vpop.permute.xlu0 %3064
    %v3067 = vsel %vm505, %v3061, 0
    %v3070 = vsel %vm505, %v3062, 0
    %v3073 = vsel %vm522, %v3065, 0
    %3075 = vmatprep.subr.bf16.mxu0 0
    %3076 = vmatpush1.bf16.msra.mxu0 0
    %3077 = vmatprep.subr.bf16.mxu0 0
    %3078 = vmatpush1.bf16.msra.mxu0 0
    %3079 = vmatprep.subr.bf16.mxu0 0
    %3080 = vmatpush1.bf16.msra.mxu0 0
    %3081 = vmatprep.subr.bf16.mxu0 0
    %3082 = vmatpush1.bf16.msra.mxu0 0
    %3083 = vmatprep.subr.bf16.mxu0 0
    %3084 = vmatpush1.bf16.msra.mxu0 0
    %3085 = vmatprep.subr.bf16.mxu0 0
    %3086 = vmatpush1.bf16.msra.mxu0 0
    %3087 = vmatprep.subr.bf16.mxu0 0
    %3088 = vmatpush1.bf16.msra.mxu0 0
    %3089 = vmatprep.subr.bf16.mxu0 0
    %3090 = vmatpush1.bf16.msra.mxu0 %v3073
    %3091 = vmatprep.subr.bf16.mxu0 0
    %3092 = vmatpush2.bf16.msra.mxu0 0
    %3093 = vmatprep.subr.bf16.mxu0 0
    %3094 = vmatpush2.bf16.msra.mxu0 0
    %3095 = vmatprep.subr.bf16.mxu0 0
    %3096 = vmatpush2.bf16.msra.mxu0 0
    %3097 = vmatprep.subr.bf16.mxu0 0
    %3098 = vmatpush2.bf16.msra.mxu0 0
    %3099 = vmatprep.subr.bf16.mxu0 0
    %3100 = vmatpush2.bf16.msra.mxu0 0
    %3101 = vmatprep.subr.bf16.mxu0 0
    %3102 = vmatpush2.bf16.msra.mxu0 0
    %3103 = vmatprep.subr.bf16.mxu0 0
    %3104 = vmatpush2.bf16.msra.mxu0 0
    %3105 = vmatprep.subr.bf16.mxu0 0
    %3106 = vmatpush2.bf16.msra.mxu0 0
    %3107 = vmatprep.mubr.bf16.mxu0 0
    %3108 = vmatmul.mubr.bf16.gmra.mxu0 %v3067
    %v3109 = vpop.f32.mrf.mxu0
    %v3110 = vadd.f32 0.0, %v3109
    %v3111 = vpop.f32.mrf.mxu0
    %v3112 = vpop.f32.mrf.mxu0
    %v3113 = vadd.f32 0.0, %v3112
    %v3114 = vpop.f32.mrf.mxu0
    %3115 = vmatprep.mubr.bf16.mxu0 0
    %3116 = vmatmul.mubr.bf16.gmra.mxu0 %v3070
    %v3117 = vpop.f32.mrf.mxu0
    %v3118 = vadd.f32 0.0, %v3117
    %v3119 = vpop.f32.mrf.mxu0
    %v3120 = vpop.f32.mrf.mxu0
    %v3121 = vpop.f32.mrf.mxu0
    %3122 = vdwg.mxu0
    %3126 = vrot.lane.b32.xlu0 %v3110, 32
    %v3127 = vpop.permute.xlu0 %3126
    %3128 = vrot.lane.b32.xlu0 %v3113, 32
    %v3129 = vpop.permute.xlu0 %3128
    %3130 = vrot.lane.b32.xlu0 %v3118, 32
    %v3131 = vpop.permute.xlu0 %3130
    %v3135 = vsel %vm69, %v2946, %v3127
    %v3136 = vsel %vm69, %v2949, %v3129
    %v3137 = vsel %vm69, %v2954, %v3131
    %v3138 = vpack.c.bf16 %v2632, %v2629
    %v3139 = vpack.c.bf16 %v2637, %v2637
    %v3140 = vpack.c.bf16 %v2721, %v2721
    %v3142 = vshrl.u32 %v3138, 16
    %v3144 = vshll.u32 %v3138, 16
    %v3146 = vrot.slane %v3144, 1
    %v3147 = vor.u32 %v3142, %v3146
    %v3149 = vshll.u32 %v3139, 16
    %v3151 = vrot.slane %v3149, 1
    %v3152 = vsel %vm1939, %v3147, %v3151
    %v3153 = vshrl.u32 %v3139, 16
    %v3156 = vsel %vm69, %v3152, 0
    %v3159 = vsel %vm69, %v3153, 0
    %v3162 = vsel %vm69, %v3140, 0
    %3164 = vmatprep.subr.bf16.mxu0 0
    %3165 = vmatpush1.bf16.xpose.msra.mxu0 0
    %3166 = vmatprep.subr.bf16.mxu0 0
    %3167 = vmatpush1.bf16.xpose.msra.mxu0 0
    %3168 = vmatprep.subr.bf16.mxu0 0
    %3169 = vmatpush1.bf16.xpose.msra.mxu0 0
    %3170 = vmatprep.subr.bf16.mxu0 0
    %3171 = vmatpush1.bf16.xpose.msra.mxu0 0
    %3172 = vmatprep.subr.bf16.mxu0 0
    %3173 = vmatpush1.bf16.xpose.msra.mxu0 0
    %3174 = vmatprep.subr.bf16.mxu0 0
    %3175 = vmatpush1.bf16.xpose.msra.mxu0 0
    %3176 = vmatprep.subr.bf16.mxu0 0
    %3177 = vmatpush1.bf16.xpose.msra.mxu0 0
    %3178 = vmatprep.subr.bf16.mxu0 0
    %3179 = vmatpush1.bf16.xpose.msra.mxu0 %v3162
    %3180 = vmatprep.subr.bf16.mxu0 0
    %3181 = vmatpush2.bf16.xpose.msra.mxu0 0
    %3182 = vmatprep.subr.bf16.mxu0 0
    %3183 = vmatpush2.bf16.xpose.msra.mxu0 0
    %3184 = vmatprep.subr.bf16.mxu0 0
    %3185 = vmatpush2.bf16.xpose.msra.mxu0 0
    %3186 = vmatprep.subr.bf16.mxu0 0
    %3187 = vmatpush2.bf16.xpose.msra.mxu0 0
    %3188 = vmatprep.subr.bf16.mxu0 0
    %3189 = vmatpush2.bf16.xpose.msra.mxu0 0
    %3190 = vmatprep.subr.bf16.mxu0 0
    %3191 = vmatpush2.bf16.xpose.msra.mxu0 0
    %3192 = vmatprep.subr.bf16.mxu0 0
    %3193 = vmatpush2.bf16.xpose.msra.mxu0 0
    %3194 = vmatprep.subr.bf16.mxu0 0
    %3195 = vmatpush2.bf16.xpose.msra.mxu0 0
    %3196 = vmatprep.mubr.bf16.mxu0 0
    %3197 = vmatmul.mubr.bf16.gmra.mxu0 %v3156
    %v3198 = vpop.f32.mrf.mxu0
    %v3199 = vadd.f32 0.0, %v3198
    %v3200 = vpop.f32.mrf.mxu0
    %v3201 = vpop.f32.mrf.mxu0
    %v3202 = vadd.f32 0.0, %v3201
    %v3203 = vpop.f32.mrf.mxu0
    %3204 = vmatprep.mubr.bf16.mxu0 0
    %3205 = vmatmul.mubr.bf16.gmra.mxu0 %v3159
    %v3206 = vpop.f32.mrf.mxu0
    %v3207 = vadd.f32 0.0, %v3206
    %v3208 = vpop.f32.mrf.mxu0
    %v3209 = vpop.f32.mrf.mxu0
    %v3210 = vpop.f32.mrf.mxu0
    %3211 = vdwg.mxu0
    %v3212 = vmul.f32 %v3199, 0.17677669
    %v3213 = vmul.f32 %v3202, 0.17677669
    %v3214 = vmul.f32 %v3207, 0.17677669
    %v3215 = vsel %vm505, %v3212, -inf
    %3216 = vmax.xlane.f32.xlu0 %v3215
    %v3217 = vpop.xlane.xlu0 %3216
    %v3218 = vsel %vm505, %v3213, -inf
    %3219 = vmax.xlane.f32.xlu0 %v3218
    %v3220 = vpop.xlane.xlu0 %3219
    %v3221 = vsel %vm2871, %v3214, -inf
    %3222 = vmax.xlane.f32.xlu0 %v3221
    %v3223 = vpop.xlane.xlu0 %3222
    %v3224 = vsub.f32 %v3212, %v3217
    %v3225 = vsub.f32 %v3213, %v3220
    %v3226 = vsub.f32 %v3214, %v3223
    %v3227 = vmul.f32 %v3224, 1.442695
    %v3228 = vpow.pop %v3227
    %v3229 = vmul.f32 %v3225, 1.442695
    %v3230 = vpow.pop %v3229
    %v3231 = vmul.f32 %v3226, 1.442695
    %v3232 = vpow.pop %v3231
    %v3233 = vsel %vm505, %v3228, 0.0
    %3234 = vadd.xlane.f32.xlu0 %v3233
    %v3235 = vpop.xlane.xlu0 %3234
    %v3236 = vsel %vm505, %v3230, 0.0
    %3237 = vadd.xlane.f32.xlu0 %v3236
    %v3238 = vpop.xlane.xlu0 %3237
    %v3239 = vsel %vm2871, %v3232, 0.0
    %3240 = vadd.xlane.f32.xlu0 %v3239
    %v3241 = vpop.xlane.xlu0 %3240
    %v3242 = vrcp.pop %v3235
    %v3243 = vrcp.pop %v3238
    %v3244 = vrcp.pop %v3241
    %v3245 = vmul.f32 %v3228, %v3242
    %v3246 = vmul.f32 %v3230, %v3243
    %v3247 = vmul.f32 %v3232, %v3244
    %v3248 = vpack.c.bf16 %v3246, %v3245
    %v3249 = vpack.c.bf16 %v3247, %v3247
    %v3250 = vpack.c.bf16 %v2799, %v2799
    %v3252 = vsel %vm505, %v3248, 0
    %v3255 = vsel %vm505, %v3249, 0
    %v3258 = vsel %vm522, %v3250, 0
    %3260 = vmatprep.subr.bf16.mxu0 0
    %3261 = vmatpush1.bf16.msra.mxu0 0
    %3262 = vmatprep.subr.bf16.mxu0 0
    %3263 = vmatpush1.bf16.msra.mxu0 0
    %3264 = vmatprep.subr.bf16.mxu0 0
    %3265 = vmatpush1.bf16.msra.mxu0 0
    %3266 = vmatprep.subr.bf16.mxu0 0
    %3267 = vmatpush1.bf16.msra.mxu0 0
    %3268 = vmatprep.subr.bf16.mxu0 0
    %3269 = vmatpush1.bf16.msra.mxu0 0
    %3270 = vmatprep.subr.bf16.mxu0 0
    %3271 = vmatpush1.bf16.msra.mxu0 0
    %3272 = vmatprep.subr.bf16.mxu0 0
    %3273 = vmatpush1.bf16.msra.mxu0 0
    %3274 = vmatprep.subr.bf16.mxu0 0
    %3275 = vmatpush1.bf16.msra.mxu0 %v3258
    %3276 = vmatprep.subr.bf16.mxu0 0
    %3277 = vmatpush2.bf16.msra.mxu0 0
    %3278 = vmatprep.subr.bf16.mxu0 0
    %3279 = vmatpush2.bf16.msra.mxu0 0
    %3280 = vmatprep.subr.bf16.mxu0 0
    %3281 = vmatpush2.bf16.msra.mxu0 0
    %3282 = vmatprep.subr.bf16.mxu0 0
    %3283 = vmatpush2.bf16.msra.mxu0 0
    %3284 = vmatprep.subr.bf16.mxu0 0
    %3285 = vmatpush2.bf16.msra.mxu0 0
    %3286 = vmatprep.subr.bf16.mxu0 0
    %3287 = vmatpush2.bf16.msra.mxu0 0
    %3288 = vmatprep.subr.bf16.mxu0 0
    %3289 = vmatpush2.bf16.msra.mxu0 0
    %3290 = vmatprep.subr.bf16.mxu0 0
    %3291 = vmatpush2.bf16.msra.mxu0 0
    %3292 = vmatprep.mubr.bf16.mxu0 0
    %3293 = vmatmul.mubr.bf16.gmra.mxu0 %v3252
    %v3294 = vpop.f32.mrf.mxu0
    %v3295 = vadd.f32 0.0, %v3294
    %v3296 = vpop.f32.mrf.mxu0
    %v3297 = vpop.f32.mrf.mxu0
    %v3298 = vadd.f32 0.0, %v3297
    %v3299 = vpop.f32.mrf.mxu0
    %3300 = vmatprep.mubr.bf16.mxu0 0
    %3301 = vmatmul.mubr.bf16.gmra.mxu0 %v3255
    %v3302 = vpop.f32.mrf.mxu0
    %v3303 = vadd.f32 0.0, %v3302
    %v3304 = vpop.f32.mrf.mxu0
    %v3305 = vpop.f32.mrf.mxu0
    %v3306 = vpop.f32.mrf.mxu0
    %3307 = vdwg.mxu0
    %3308 = vrot.lane.b32.xlu0 %v3152, 96
    %v3309 = vpop.permute.xlu0 %3308
    %3310 = vrot.lane.b32.xlu0 %v3153, 96
    %v3311 = vpop.permute.xlu0 %3310
    %3313 = vrot.lane.b32.xlu0 %v3140, 96
    %v3314 = vpop.permute.xlu0 %3313
    %v3316 = vsel %vm69, %v3309, 0
    %v3319 = vsel %vm69, %v3311, 0
    %v3322 = vsel %vm69, %v3314, 0
    %3324 = vmatprep.subr.bf16.mxu0 0
    %3325 = vmatpush1.bf16.xpose.msra.mxu0 0
    %3326 = vmatprep.subr.bf16.mxu0 0
    %3327 = vmatpush1.bf16.xpose.msra.mxu0 0
    %3328 = vmatprep.subr.bf16.mxu0 0
    %3329 = vmatpush1.bf16.xpose.msra.mxu0 0
    %3330 = vmatprep.subr.bf16.mxu0 0
    %3331 = vmatpush1.bf16.xpose.msra.mxu0 0
    %3332 = vmatprep.subr.bf16.mxu0 0
    %3333 = vmatpush1.bf16.xpose.msra.mxu0 0
    %3334 = vmatprep.subr.bf16.mxu0 0
    %3335 = vmatpush1.bf16.xpose.msra.mxu0 0
    %3336 = vmatprep.subr.bf16.mxu0 0
    %3337 = vmatpush1.bf16.xpose.msra.mxu0 0
    %3338 = vmatprep.subr.bf16.mxu0 0
    %3339 = vmatpush1.bf16.xpose.msra.mxu0 %v3322
    %3340 = vmatprep.subr.bf16.mxu0 0
    %3341 = vmatpush2.bf16.xpose.msra.mxu0 0
    %3342 = vmatprep.subr.bf16.mxu0 0
    %3343 = vmatpush2.bf16.xpose.msra.mxu0 0
    %3344 = vmatprep.subr.bf16.mxu0 0
    %3345 = vmatpush2.bf16.xpose.msra.mxu0 0
    %3346 = vmatprep.subr.bf16.mxu0 0
    %3347 = vmatpush2.bf16.xpose.msra.mxu0 0
    %3348 = vmatprep.subr.bf16.mxu0 0
    %3349 = vmatpush2.bf16.xpose.msra.mxu0 0
    %3350 = vmatprep.subr.bf16.mxu0 0
    %3351 = vmatpush2.bf16.xpose.msra.mxu0 0
    %3352 = vmatprep.subr.bf16.mxu0 0
    %3353 = vmatpush2.bf16.xpose.msra.mxu0 0
    %3354 = vmatprep.subr.bf16.mxu0 0
    %3355 = vmatpush2.bf16.xpose.msra.mxu0 0
    %3356 = vmatprep.mubr.bf16.mxu0 0
    %3357 = vmatmul.mubr.bf16.gmra.mxu0 %v3316
    %v3358 = vpop.f32.mrf.mxu0
    %v3359 = vadd.f32 0.0, %v3358
    %v3360 = vpop.f32.mrf.mxu0
    %v3361 = vpop.f32.mrf.mxu0
    %v3362 = vadd.f32 0.0, %v3361
    %v3363 = vpop.f32.mrf.mxu0
    %3364 = vmatprep.mubr.bf16.mxu0 0
    %3365 = vmatmul.mubr.bf16.gmra.mxu0 %v3319
    %v3366 = vpop.f32.mrf.mxu0
    %v3367 = vadd.f32 0.0, %v3366
    %v3368 = vpop.f32.mrf.mxu0
    %v3369 = vpop.f32.mrf.mxu0
    %v3370 = vpop.f32.mrf.mxu0
    %3371 = vdwg.mxu0
    %v3372 = vmul.f32 %v3359, 0.17677669
    %v3373 = vmul.f32 %v3362, 0.17677669
    %v3374 = vmul.f32 %v3367, 0.17677669
    %v3375 = vsel %vm505, %v3372, -inf
    %3376 = vmax.xlane.f32.xlu0 %v3375
    %v3377 = vpop.xlane.xlu0 %3376
    %v3378 = vsel %vm505, %v3373, -inf
    %3379 = vmax.xlane.f32.xlu0 %v3378
    %v3380 = vpop.xlane.xlu0 %3379
    %v3381 = vsel %vm2871, %v3374, -inf
    %3382 = vmax.xlane.f32.xlu0 %v3381
    %v3383 = vpop.xlane.xlu0 %3382
    %v3384 = vsub.f32 %v3372, %v3377
    %v3385 = vsub.f32 %v3373, %v3380
    %v3386 = vsub.f32 %v3374, %v3383
    %v3387 = vmul.f32 %v3384, 1.442695
    %v3388 = vpow.pop %v3387
    %v3389 = vmul.f32 %v3385, 1.442695
    %v3390 = vpow.pop %v3389
    %v3391 = vmul.f32 %v3386, 1.442695
    %v3392 = vpow.pop %v3391
    %v3393 = vsel %vm505, %v3388, 0.0
    %3394 = vadd.xlane.f32.xlu0 %v3393
    %v3395 = vpop.xlane.xlu0 %3394
    %v3396 = vsel %vm505, %v3390, 0.0
    %3397 = vadd.xlane.f32.xlu0 %v3396
    %v3398 = vpop.xlane.xlu0 %3397
    %v3399 = vsel %vm2871, %v3392, 0.0
    %3400 = vadd.xlane.f32.xlu0 %v3399
    %v3401 = vpop.xlane.xlu0 %3400
    %v3402 = vrcp.pop %v3395
    %v3403 = vrcp.pop %v3398
    %v3404 = vrcp.pop %v3401
    %v3405 = vmul.f32 %v3388, %v3402
    %v3406 = vmul.f32 %v3390, %v3403
    %v3407 = vmul.f32 %v3392, %v3404
    %v3408 = vpack.c.bf16 %v3406, %v3405
    %v3409 = vpack.c.bf16 %v3407, %v3407
    %3411 = vrot.lane.b32.xlu0 %v3250, 96
    %v3412 = vpop.permute.xlu0 %3411
    %v3414 = vsel %vm505, %v3408, 0
    %v3417 = vsel %vm505, %v3409, 0
    %v3420 = vsel %vm522, %v3412, 0
    %3422 = vmatprep.subr.bf16.mxu0 0
    %3423 = vmatpush1.bf16.msra.mxu0 0
    %3424 = vmatprep.subr.bf16.mxu0 0
    %3425 = vmatpush1.bf16.msra.mxu0 0
    %3426 = vmatprep.subr.bf16.mxu0 0
    %3427 = vmatpush1.bf16.msra.mxu0 0
    %3428 = vmatprep.subr.bf16.mxu0 0
    %3429 = vmatpush1.bf16.msra.mxu0 0
    %3430 = vmatprep.subr.bf16.mxu0 0
    %3431 = vmatpush1.bf16.msra.mxu0 0
    %3432 = vmatprep.subr.bf16.mxu0 0
    %3433 = vmatpush1.bf16.msra.mxu0 0
    %3434 = vmatprep.subr.bf16.mxu0 0
    %3435 = vmatpush1.bf16.msra.mxu0 0
    %3436 = vmatprep.subr.bf16.mxu0 0
    %3437 = vmatpush1.bf16.msra.mxu0 %v3420
    %3438 = vmatprep.subr.bf16.mxu0 0
    %3439 = vmatpush2.bf16.msra.mxu0 0
    %3440 = vmatprep.subr.bf16.mxu0 0
    %3441 = vmatpush2.bf16.msra.mxu0 0
    %3442 = vmatprep.subr.bf16.mxu0 0
    %3443 = vmatpush2.bf16.msra.mxu0 0
    %3444 = vmatprep.subr.bf16.mxu0 0
    %3445 = vmatpush2.bf16.msra.mxu0 0
    %3446 = vmatprep.subr.bf16.mxu0 0
    %3447 = vmatpush2.bf16.msra.mxu0 0
    %3448 = vmatprep.subr.bf16.mxu0 0
    %3449 = vmatpush2.bf16.msra.mxu0 0
    %3450 = vmatprep.subr.bf16.mxu0 0
    %3451 = vmatpush2.bf16.msra.mxu0 0
    %3452 = vmatprep.subr.bf16.mxu0 0
    %3453 = vmatpush2.bf16.msra.mxu0 0
    %3454 = vmatprep.mubr.bf16.mxu0 0
    %3455 = vmatmul.mubr.bf16.gmra.mxu0 %v3414
    %v3456 = vpop.f32.mrf.mxu0
    %v3457 = vadd.f32 0.0, %v3456
    %v3458 = vpop.f32.mrf.mxu0
    %v3459 = vpop.f32.mrf.mxu0
    %v3460 = vadd.f32 0.0, %v3459
    %v3461 = vpop.f32.mrf.mxu0
    %3462 = vmatprep.mubr.bf16.mxu0 0
    %3463 = vmatmul.mubr.bf16.gmra.mxu0 %v3417
    %v3464 = vpop.f32.mrf.mxu0
    %v3465 = vadd.f32 0.0, %v3464
    %v3466 = vpop.f32.mrf.mxu0
    %v3467 = vpop.f32.mrf.mxu0
    %v3468 = vpop.f32.mrf.mxu0
    %3469 = vdwg.mxu0
    %3473 = vrot.lane.b32.xlu0 %v3457, 32
    %v3474 = vpop.permute.xlu0 %3473
    %3475 = vrot.lane.b32.xlu0 %v3460, 32
    %v3476 = vpop.permute.xlu0 %3475
    %3477 = vrot.lane.b32.xlu0 %v3465, 32
    %v3478 = vpop.permute.xlu0 %3477
    %v3482 = vsel %vm69, %v3295, %v3474
    %v3483 = vsel %vm69, %v3298, %v3476
    %v3484 = vsel %vm69, %v3303, %v3478
    %v3488 = vrot.slane %v3482, 7
    %v3489 = vrot.slane %v3483, 7
    %v3490 = vsel %vm1689, %v3488, %v3489
    %v3491 = vrot.slane %v3484, 7
    %v3492 = vsel %vm1689, %v3489, %v3491
    %v3496 = vsel %vm1689, %v3137, %v3488
    %v3497 = vld [vmem:[%s3 + $0x160] sm:$0xf]
    %v3498 = vld [vmem:[%s3 + $0x164] sm:$0xf]
    %v3499 = vld [vmem:[%s3 + $0x168] sm:$0xf]
    %v3500 = vld [vmem:[%s3 + $0x16c] sm:$0xf]
    %v3501 = vld [vmem:[%s3 + $0x170] sm:$0xf]
    %v3502 = vld [vmem:[%s3 + $0x174] sm:$0xf]
    %v3503 = vld [vmem:[%s3 + $0x178] sm:$0xf]
    %v3504 = vld [vmem:[%s3 + $0x17c] sm:$0xf]
    %v3505 = vpack.c.bf16 %v3136, %v3135
    %v3506 = vpack.c.bf16 %v3490, %v3496
    %v3507 = vpack.c.bf16 %v3492, %v3492
    %v3508 = vld [vmem:[%s7 + $0x14] sm:$0x1]
    %v3509 = vlaneseq
    %v3510 = vshrl.u32 %v3509, 7
    %v3511 = vsub.s32 0, %v3510
    %v3512 = vrot.slane %v3508, %v3511
    %v3521 = vunpack.c.l.b16 %v3497
    %v3522 = vunpack.c.l.b16 %v3498
    %v3523 = vunpack.c.l.b16 %v3499
    %v3524 = vunpack.c.l.b16 %v3500
    %v3525 = vunpack.c.l.b16 %v3501
    %v3526 = vunpack.c.l.b16 %v3502
    %v3527 = vunpack.c.l.b16 %v3503
    %v3528 = vunpack.c.l.b16 %v3504
    %v3529 = vpack.c.b16 %v3522, %v3521
    %v3530 = vpack.c.b16 %v3524, %v3523
    %v3531 = vpack.c.b16 %v3526, %v3525
    %v3532 = vpack.c.b16 %v3528, %v3527
    %v3538 = vsel %vm255, %v3505, 0
    %v3541 = vsel %vm255, %v3506, 0
    %v3544 = vsel %vm255, %v3507, 0
    %3546 = vmatprep.subr.bf16.mxu0 0
    %3547 = vmatpush1.bf16.msra.mxu0 0
    %3548 = vmatprep.subr.bf16.mxu0 0
    %3549 = vmatpush1.bf16.msra.mxu0 0
    %3550 = vmatprep.subr.bf16.mxu0 0
    %3551 = vmatpush1.bf16.msra.mxu0 0
    %3552 = vmatprep.subr.bf16.mxu0 0
    %3553 = vmatpush1.bf16.msra.mxu0 0
    %3554 = vmatprep.subr.bf16.mxu0 0
    %3555 = vmatpush1.bf16.msra.mxu0 %v3532
    %3556 = vmatprep.subr.bf16.mxu0 0
    %3557 = vmatpush1.bf16.msra.mxu0 %v3531
    %3558 = vmatprep.subr.bf16.mxu0 0
    %3559 = vmatpush1.bf16.msra.mxu0 %v3530
    %3560 = vmatprep.subr.bf16.mxu0 0
    %3561 = vmatpush1.bf16.msra.mxu0 %v3529
    %3562 = vmatprep.subr.bf16.mxu0 0
    %3563 = vmatpush2.bf16.msra.mxu0 0
    %3564 = vmatprep.subr.bf16.mxu0 0
    %3565 = vmatpush2.bf16.msra.mxu0 0
    %3566 = vmatprep.subr.bf16.mxu0 0
    %3567 = vmatpush2.bf16.msra.mxu0 0
    %3568 = vmatprep.subr.bf16.mxu0 0
    %3569 = vmatpush2.bf16.msra.mxu0 0
    %3570 = vmatprep.subr.bf16.mxu0 0
    %3571 = vmatpush2.bf16.msra.mxu0 0
    %3572 = vmatprep.subr.bf16.mxu0 0
    %3573 = vmatpush2.bf16.msra.mxu0 0
    %3574 = vmatprep.subr.bf16.mxu0 0
    %3575 = vmatpush2.bf16.msra.mxu0 0
    %3576 = vmatprep.subr.bf16.mxu0 0
    %3577 = vmatpush2.bf16.msra.mxu0 0
    %3578 = vmatprep.mubr.bf16.mxu0 0
    %3579 = vmatmul.mubr.bf16.gmra.mxu0 %v3538
    %v3580 = vpop.f32.mrf.mxu0
    %v3581 = vadd.f32 %v3512, %v3580
    %v3582 = vpop.f32.mrf.mxu0
    %v3583 = vpop.f32.mrf.mxu0
    %v3584 = vadd.f32 %v3512, %v3583
    %v3585 = vpop.f32.mrf.mxu0
    %3586 = vmatprep.mubr.bf16.mxu0 0
    %3587 = vmatmul.mubr.bf16.gmra.mxu0 %v3541
    %v3588 = vpop.f32.mrf.mxu0
    %v3589 = vadd.f32 %v3512, %v3588
    %v3590 = vpop.f32.mrf.mxu0
    %v3591 = vpop.f32.mrf.mxu0
    %v3592 = vadd.f32 %v3512, %v3591
    %v3593 = vpop.f32.mrf.mxu0
    %3594 = vmatprep.mubr.bf16.mxu0 0
    %3595 = vmatmul.mubr.bf16.gmra.mxu0 %v3544
    %v3596 = vpop.f32.mrf.mxu0
    %v3597 = vadd.f32 %v3512, %v3596
    %v3598 = vpop.f32.mrf.mxu0
    %v3599 = vpop.f32.mrf.mxu0
    %v3600 = vpop.f32.mrf.mxu0
    %3601 = vdwg.mxu0
    %v3602 = vadd.f32 %v2532, %v3581
    %v3603 = vadd.f32 %v2533, %v3584
    %v3604 = vadd.f32 %v2534, %v3589
    %v3605 = vadd.f32 %v2535, %v3592
    %v3606 = vadd.f32 %v2536, %v3597
    %v3607 = vld [vmem:[%s7 + $0x15] sm:$0x1]
    %v3608 = vld [vmem:[%s7 + $0x16] sm:$0x1]
    %v3609 = vsel %vm255, %v3602, 0.0
    %3610 = vadd.xlane.f32.xlu0 %v3609
    %v3611 = vpop.xlane.xlu0 %3610
    %v3612 = vsel %vm255, %v3603, 0.0
    %3613 = vadd.xlane.f32.xlu0 %v3612
    %v3614 = vpop.xlane.xlu0 %3613
    %v3615 = vsel %vm255, %v3604, 0.0
    %3616 = vadd.xlane.f32.xlu0 %v3615
    %v3617 = vpop.xlane.xlu0 %3616
    %v3618 = vsel %vm255, %v3605, 0.0
    %3619 = vadd.xlane.f32.xlu0 %v3618
    %v3620 = vpop.xlane.xlu0 %3619
    %v3621 = vsel %vm2465, %v3606, 0.0
    %3622 = vadd.xlane.f32.xlu0 %v3621
    %v3623 = vpop.xlane.xlu0 %3622
    %v3624 = vmul.f32 %v3611, %v1004
    %v3625 = vmul.f32 %v3614, %v1004
    %v3626 = vmul.f32 %v3617, %v1004
    %v3627 = vmul.f32 %v3620, %v1004
    %v3628 = vmul.f32 %v3623, %v1004
    %v3629 = vsub.f32 %v3602, %v3624
    %v3630 = vsub.f32 %v3603, %v3625
    %v3631 = vsub.f32 %v3604, %v3626
    %v3632 = vsub.f32 %v3605, %v3627
    %v3633 = vsub.f32 %v3606, %v3628
    %v3634 = vmul.f32 %v3629, %v3629
    %v3635 = vmul.f32 %v3630, %v3630
    %v3636 = vmul.f32 %v3631, %v3631
    %v3637 = vmul.f32 %v3632, %v3632
    %v3638 = vmul.f32 %v3633, %v3633
    %v3639 = vsel %vm255, %v3634, 0.0
    %3640 = vadd.xlane.f32.xlu0 %v3639
    %v3641 = vpop.xlane.xlu0 %3640
    %v3642 = vsel %vm255, %v3635, 0.0
    %3643 = vadd.xlane.f32.xlu0 %v3642
    %v3644 = vpop.xlane.xlu0 %3643
    %v3645 = vsel %vm255, %v3636, 0.0
    %3646 = vadd.xlane.f32.xlu0 %v3645
    %v3647 = vpop.xlane.xlu0 %3646
    %v3648 = vsel %vm255, %v3637, 0.0
    %3649 = vadd.xlane.f32.xlu0 %v3648
    %v3650 = vpop.xlane.xlu0 %3649
    %v3651 = vsel %vm2465, %v3638, 0.0
    %3652 = vadd.xlane.f32.xlu0 %v3651
    %v3653 = vpop.xlane.xlu0 %3652
    %v3654 = vmul.f32 %v3641, %v1004
    %v3655 = vmul.f32 %v3644, %v1004
    %v3656 = vmul.f32 %v3647, %v1004
    %v3657 = vmul.f32 %v3650, %v1004
    %v3658 = vmul.f32 %v3653, %v1004
    %v3659 = vadd.f32 %v3654, 1e-05
    %v3660 = vadd.f32 %v3655, 1e-05
    %v3661 = vadd.f32 %v3656, 1e-05
    %v3662 = vadd.f32 %v3657, 1e-05
    %v3663 = vadd.f32 %v3658, 1e-05
    %v3664 = vrsqrt.pop %v3659
    %v3665 = vrsqrt.pop %v3660
    %v3666 = vrsqrt.pop %v3661
    %v3667 = vrsqrt.pop %v3662
    %v3668 = vrsqrt.pop %v3663
    %v3669 = vmul.f32 %v3629, %v3664
    %v3670 = vmul.f32 %v3630, %v3665
    %v3671 = vmul.f32 %v3631, %v3666
    %v3672 = vmul.f32 %v3632, %v3667
    %v3673 = vmul.f32 %v3633, %v3668
    %v3674 = vlaneseq
    %v3675 = vshrl.u32 %v3674, 7
    %v3676 = vsub.s32 0, %v3675
    %v3677 = vrot.slane %v3607, %v3676
    %v3678 = vmul.f32 %v3669, %v3677
    %v3679 = vmul.f32 %v3670, %v3677
    %v3680 = vmul.f32 %v3671, %v3677
    %v3681 = vmul.f32 %v3672, %v3677
    %v3682 = vmul.f32 %v3673, %v3677
    %v3683 = vlaneseq
    %v3684 = vshrl.u32 %v3683, 7
    %v3685 = vsub.s32 0, %v3684
    %v3686 = vrot.slane %v3608, %v3685
    %v3687 = vadd.f32 %v3678, %v3686
    %v3688 = vadd.f32 %v3679, %v3686
    %v3689 = vadd.f32 %v3680, %v3686
    %v3690 = vadd.f32 %v3681, %v3686
    %v3691 = vadd.f32 %v3682, %v3686
    %v3692 = vld [vmem:[%s4 + $0x20] sm:$0xf]
    %v3693 = vld [vmem:[%s4 + $0x24] sm:$0xf]
    %v3694 = vld [vmem:[%s4 + $0x28] sm:$0xf]
    %v3695 = vld [vmem:[%s4 + $0x2c] sm:$0xf]
    %v3696 = vld [vmem:[%s4 + $0x30] sm:$0xf]
    %v3697 = vld [vmem:[%s4 + $0x34] sm:$0xf]
    %v3698 = vld [vmem:[%s4 + $0x38] sm:$0xf]
    %v3699 = vld [vmem:[%s4 + $0x3c] sm:$0xf]
    %v3700 = vpack.c.bf16 %v3688, %v3687
    %v3701 = vpack.c.bf16 %v3690, %v3689
    %v3702 = vpack.c.bf16 %v3691, %v3691
    %v3703 = vld [vmem:[%s8 + $0x1] sm:$0x1]
    %v3704 = vlaneseq
    %v3705 = vshrl.u32 %v3704, 7
    %v3706 = vsub.s32 0, %v3705
    %v3707 = vrot.slane %v3703, %v3706
    %v3716 = vunpack.c.l.b16 %v3692
    %v3717 = vunpack.c.l.b16 %v3693
    %v3718 = vunpack.c.l.b16 %v3694
    %v3719 = vunpack.c.l.b16 %v3695
    %v3720 = vunpack.c.l.b16 %v3696
    %v3721 = vunpack.c.l.b16 %v3697
    %v3722 = vunpack.c.l.b16 %v3698
    %v3723 = vunpack.c.l.b16 %v3699
    %v3724 = vpack.c.b16 %v3717, %v3716
    %v3725 = vpack.c.b16 %v3719, %v3718
    %v3726 = vpack.c.b16 %v3721, %v3720
    %v3727 = vpack.c.b16 %v3723, %v3722
    %v3733 = vsel %vm255, %v3700, 0
    %v3736 = vsel %vm255, %v3701, 0
    %v3739 = vsel %vm255, %v3702, 0
    %3741 = vmatprep.subr.bf16.mxu0 0
    %3742 = vmatpush1.bf16.msra.mxu0 0
    %3743 = vmatprep.subr.bf16.mxu0 0
    %3744 = vmatpush1.bf16.msra.mxu0 0
    %3745 = vmatprep.subr.bf16.mxu0 0
    %3746 = vmatpush1.bf16.msra.mxu0 0
    %3747 = vmatprep.subr.bf16.mxu0 0
    %3748 = vmatpush1.bf16.msra.mxu0 0
    %3749 = vmatprep.subr.bf16.mxu0 0
    %3750 = vmatpush1.bf16.msra.mxu0 %v3727
    %3751 = vmatprep.subr.bf16.mxu0 0
    %3752 = vmatpush1.bf16.msra.mxu0 %v3726
    %3753 = vmatprep.subr.bf16.mxu0 0
    %3754 = vmatpush1.bf16.msra.mxu0 %v3725
    %3755 = vmatprep.subr.bf16.mxu0 0
    %3756 = vmatpush1.bf16.msra.mxu0 %v3724
    %3757 = vmatprep.subr.bf16.mxu0 0
    %3758 = vmatpush2.bf16.msra.mxu0 0
    %3759 = vmatprep.subr.bf16.mxu0 0
    %3760 = vmatpush2.bf16.msra.mxu0 0
    %3761 = vmatprep.subr.bf16.mxu0 0
    %3762 = vmatpush2.bf16.msra.mxu0 0
    %3763 = vmatprep.subr.bf16.mxu0 0
    %3764 = vmatpush2.bf16.msra.mxu0 0
    %3765 = vmatprep.subr.bf16.mxu0 0
    %3766 = vmatpush2.bf16.msra.mxu0 0
    %3767 = vmatprep.subr.bf16.mxu0 0
    %3768 = vmatpush2.bf16.msra.mxu0 0
    %3769 = vmatprep.subr.bf16.mxu0 0
    %3770 = vmatpush2.bf16.msra.mxu0 0
    %3771 = vmatprep.subr.bf16.mxu0 0
    %3772 = vmatpush2.bf16.msra.mxu0 0
    %3773 = vmatprep.mubr.bf16.mxu0 0
    %3774 = vmatmul.mubr.bf16.gmra.mxu0 %v3733
    %v3775 = vpop.f32.mrf.mxu0
    %v3776 = vadd.f32 %v3707, %v3775
    %v3777 = vpop.f32.mrf.mxu0
    %v3778 = vpop.f32.mrf.mxu0
    %v3779 = vadd.f32 %v3707, %v3778
    %v3780 = vpop.f32.mrf.mxu0
    %3781 = vmatprep.mubr.bf16.mxu0 0
    %3782 = vmatmul.mubr.bf16.gmra.mxu0 %v3736
    %v3783 = vpop.f32.mrf.mxu0
    %v3784 = vadd.f32 %v3707, %v3783
    %v3785 = vpop.f32.mrf.mxu0
    %v3786 = vpop.f32.mrf.mxu0
    %v3787 = vadd.f32 %v3707, %v3786
    %v3788 = vpop.f32.mrf.mxu0
    %3789 = vmatprep.mubr.bf16.mxu0 0
    %3790 = vmatmul.mubr.bf16.gmra.mxu0 %v3739
    %v3791 = vpop.f32.mrf.mxu0
    %v3792 = vadd.f32 %v3707, %v3791
    %v3793 = vpop.f32.mrf.mxu0
    %v3794 = vpop.f32.mrf.mxu0
    %v3795 = vpop.f32.mrf.mxu0
    %3796 = vdwg.mxu0
    %v3797 = vmax.f32 %v3776, 0.0
    %v3798 = vmax.f32 %v3779, 0.0
    %v3799 = vmax.f32 %v3784, 0.0
    %v3800 = vmax.f32 %v3787, 0.0
    %v3801 = vmax.f32 %v3792, 0.0
    %v3802 = vld [vmem:[%s5 + $0x40] sm:$0xf]
    %v3803 = vld [vmem:[%s5 + $0x44] sm:$0xf]
    %v3804 = vld [vmem:[%s5 + $0x48] sm:$0xf]
    %v3805 = vld [vmem:[%s5 + $0x4c] sm:$0xf]
    %v3806 = vld [vmem:[%s5 + $0x50] sm:$0xf]
    %v3807 = vld [vmem:[%s5 + $0x54] sm:$0xf]
    %v3808 = vld [vmem:[%s5 + $0x58] sm:$0xf]
    %v3809 = vld [vmem:[%s5 + $0x5c] sm:$0xf]
    %v3810 = vld [vmem:[%s5 + $0x60] sm:$0xf]
    %v3811 = vld [vmem:[%s5 + $0x64] sm:$0xf]
    %v3812 = vld [vmem:[%s5 + $0x68] sm:$0xf]
    %v3813 = vld [vmem:[%s5 + $0x6c] sm:$0xf]
    %v3814 = vld [vmem:[%s5 + $0x70] sm:$0xf]
    %v3815 = vld [vmem:[%s5 + $0x74] sm:$0xf]
    %v3816 = vld [vmem:[%s5 + $0x78] sm:$0xf]
    %v3817 = vld [vmem:[%s5 + $0x7c] sm:$0xf]
    %v3818 = vpack.c.bf16 %v3798, %v3797
    %v3819 = vpack.c.bf16 %v3800, %v3799
    %v3820 = vpack.c.bf16 %v3801, %v3801
    %v3821 = vld [vmem:[%s7 + $0x17] sm:$0x1]
    %v3822 = vlaneseq
    %v3823 = vshrl.u32 %v3822, 7
    %v3824 = vsub.s32 0, %v3823
    %v3825 = vrot.slane %v3821, %v3824
    %v3842 = vunpack.c.l.b16 %v3802
    %v3843 = vunpack.c.l.b16 %v3803
    %v3844 = vunpack.c.l.b16 %v3804
    %v3845 = vunpack.c.l.b16 %v3805
    %v3846 = vunpack.c.l.b16 %v3806
    %v3847 = vunpack.c.l.b16 %v3807
    %v3848 = vunpack.c.l.b16 %v3808
    %v3849 = vunpack.c.l.b16 %v3809
    %v3850 = vunpack.c.l.b16 %v3810
    %v3851 = vunpack.c.l.b16 %v3811
    %v3852 = vunpack.c.l.b16 %v3812
    %v3853 = vunpack.c.l.b16 %v3813
    %v3854 = vunpack.c.l.b16 %v3814
    %v3855 = vunpack.c.l.b16 %v3815
    %v3856 = vunpack.c.l.b16 %v3816
    %v3857 = vunpack.c.l.b16 %v3817
    %v3858 = vpack.c.b16 %v3843, %v3842
    %v3859 = vpack.c.b16 %v3845, %v3844
    %v3860 = vpack.c.b16 %v3847, %v3846
    %v3861 = vpack.c.b16 %v3849, %v3848
    %v3862 = vpack.c.b16 %v3851, %v3850
    %v3863 = vpack.c.b16 %v3853, %v3852
    %v3864 = vpack.c.b16 %v3855, %v3854
    %v3865 = vpack.c.b16 %v3857, %v3856
    %3874 = vmatprep.subr.bf16.mxu0 0
    %3875 = vmatpush1.bf16.msra.mxu0 %v3865
    %3876 = vmatprep.subr.bf16.mxu0 0
    %3877 = vmatpush1.bf16.msra.mxu0 %v3864
    %3878 = vmatprep.subr.bf16.mxu0 0
    %3879 = vmatpush1.bf16.msra.mxu0 %v3863
    %3880 = vmatprep.subr.bf16.mxu0 0
    %3881 = vmatpush1.bf16.msra.mxu0 %v3862
    %3882 = vmatprep.subr.bf16.mxu0 0
    %3883 = vmatpush1.bf16.msra.mxu0 %v3861
    %3884 = vmatprep.subr.bf16.mxu0 0
    %3885 = vmatpush1.bf16.msra.mxu0 %v3860
    %3886 = vmatprep.subr.bf16.mxu0 0
    %3887 = vmatpush1.bf16.msra.mxu0 %v3859
    %3888 = vmatprep.subr.bf16.mxu0 0
    %3889 = vmatpush1.bf16.msra.mxu0 %v3858
    %3890 = vmatprep.subr.bf16.mxu0 0
    %3891 = vmatpush2.bf16.msra.mxu0 0
    %3892 = vmatprep.subr.bf16.mxu0 0
    %3893 = vmatpush2.bf16.msra.mxu0 0
    %3894 = vmatprep.subr.bf16.mxu0 0
    %3895 = vmatpush2.bf16.msra.mxu0 0
    %3896 = vmatprep.subr.bf16.mxu0 0
    %3897 = vmatpush2.bf16.msra.mxu0 0
    %3898 = vmatprep.subr.bf16.mxu0 0
    %3899 = vmatpush2.bf16.msra.mxu0 0
    %3900 = vmatprep.subr.bf16.mxu0 0
    %3901 = vmatpush2.bf16.msra.mxu0 0
    %3902 = vmatprep.subr.bf16.mxu0 0
    %3903 = vmatpush2.bf16.msra.mxu0 0
    %3904 = vmatprep.subr.bf16.mxu0 0
    %3905 = vmatpush2.bf16.msra.mxu0 0
    %3906 = vmatprep.mubr.bf16.mxu0 0
    %3907 = vmatmul.mubr.bf16.gmra.mxu0 %v3818
    %v3908 = vpop.f32.mrf.mxu0
    %v3909 = vadd.f32 %v3825, %v3908
    %v3910 = vpop.f32.mrf.mxu0
    %v3911 = vpop.f32.mrf.mxu0
    %v3912 = vadd.f32 %v3825, %v3911
    %v3913 = vpop.f32.mrf.mxu0
    %3914 = vmatprep.mubr.bf16.mxu0 0
    %3915 = vmatmul.mubr.bf16.gmra.mxu0 %v3819
    %v3916 = vpop.f32.mrf.mxu0
    %v3917 = vadd.f32 %v3825, %v3916
    %v3918 = vpop.f32.mrf.mxu0
    %v3919 = vpop.f32.mrf.mxu0
    %v3920 = vadd.f32 %v3825, %v3919
    %v3921 = vpop.f32.mrf.mxu0
    %3922 = vmatprep.mubr.bf16.mxu0 0
    %3923 = vmatmul.mubr.bf16.gmra.mxu0 %v3820
    %v3924 = vpop.f32.mrf.mxu0
    %v3925 = vadd.f32 %v3825, %v3924
    %v3926 = vpop.f32.mrf.mxu0
    %v3927 = vpop.f32.mrf.mxu0
    %v3928 = vpop.f32.mrf.mxu0
    %3929 = vdwg.mxu0
    %v3930 = vadd.f32 %v3687, %v3909
    %v3931 = vadd.f32 %v3688, %v3912
    %v3932 = vadd.f32 %v3689, %v3917
    %v3933 = vadd.f32 %v3690, %v3920
    %v3934 = vadd.f32 %v3691, %v3925
    %v3935 = vld [vmem:[%s7 + $0x18] sm:$0x1]
    %v3936 = vld [vmem:[%s7 + $0x19] sm:$0x1]
    %v3937 = vsel %vm255, %v3930, 0.0
    %3938 = vadd.xlane.f32.xlu0 %v3937
    %v3939 = vpop.xlane.xlu0 %3938
    %v3940 = vsel %vm255, %v3931, 0.0
    %3941 = vadd.xlane.f32.xlu0 %v3940
    %v3942 = vpop.xlane.xlu0 %3941
    %v3943 = vsel %vm255, %v3932, 0.0
    %3944 = vadd.xlane.f32.xlu0 %v3943
    %v3945 = vpop.xlane.xlu0 %3944
    %v3946 = vsel %vm255, %v3933, 0.0
    %3947 = vadd.xlane.f32.xlu0 %v3946
    %v3948 = vpop.xlane.xlu0 %3947
    %v3949 = vsel %vm2465, %v3934, 0.0
    %3950 = vadd.xlane.f32.xlu0 %v3949
    %v3951 = vpop.xlane.xlu0 %3950
    %v3952 = vmul.f32 %v3939, %v1004
    %v3953 = vmul.f32 %v3942, %v1004
    %v3954 = vmul.f32 %v3945, %v1004
    %v3955 = vmul.f32 %v3948, %v1004
    %v3956 = vmul.f32 %v3951, %v1004
    %v3957 = vsub.f32 %v3930, %v3952
    %v3958 = vsub.f32 %v3931, %v3953
    %v3959 = vsub.f32 %v3932, %v3954
    %v3960 = vsub.f32 %v3933, %v3955
    %v3961 = vsub.f32 %v3934, %v3956
    %v3962 = vmul.f32 %v3957, %v3957
    %v3963 = vmul.f32 %v3958, %v3958
    %v3964 = vmul.f32 %v3959, %v3959
    %v3965 = vmul.f32 %v3960, %v3960
    %v3966 = vmul.f32 %v3961, %v3961
    %v3967 = vsel %vm255, %v3962, 0.0
    %3968 = vadd.xlane.f32.xlu0 %v3967
    %v3969 = vpop.xlane.xlu0 %3968
    %v3970 = vsel %vm255, %v3963, 0.0
    %3971 = vadd.xlane.f32.xlu0 %v3970
    %v3972 = vpop.xlane.xlu0 %3971
    %v3973 = vsel %vm255, %v3964, 0.0
    %3974 = vadd.xlane.f32.xlu0 %v3973
    %v3975 = vpop.xlane.xlu0 %3974
    %v3976 = vsel %vm255, %v3965, 0.0
    %3977 = vadd.xlane.f32.xlu0 %v3976
    %v3978 = vpop.xlane.xlu0 %3977
    %v3979 = vsel %vm2465, %v3966, 0.0
    %3980 = vadd.xlane.f32.xlu0 %v3979
    %v3981 = vpop.xlane.xlu0 %3980
    %v3982 = vmul.f32 %v3969, %v1004
    %v3983 = vmul.f32 %v3972, %v1004
    %v3984 = vmul.f32 %v3975, %v1004
    %v3985 = vmul.f32 %v3978, %v1004
    %v3986 = vmul.f32 %v3981, %v1004
    %v3987 = vadd.f32 %v3982, 1e-05
    %v3988 = vadd.f32 %v3983, 1e-05
    %v3989 = vadd.f32 %v3984, 1e-05
    %v3990 = vadd.f32 %v3985, 1e-05
    %v3991 = vadd.f32 %v3986, 1e-05
    %v3992 = vrsqrt.pop %v3987
    %v3993 = vrsqrt.pop %v3988
    %v3994 = vrsqrt.pop %v3989
    %v3995 = vrsqrt.pop %v3990
    %v3996 = vrsqrt.pop %v3991
    %v3997 = vmul.f32 %v3957, %v3992
    %v3998 = vmul.f32 %v3958, %v3993
    %v3999 = vmul.f32 %v3959, %v3994
    %v4000 = vmul.f32 %v3960, %v3995
    %v4001 = vmul.f32 %v3961, %v3996
    %v4002 = vlaneseq
    %v4003 = vshrl.u32 %v4002, 7
    %v4004 = vsub.s32 0, %v4003
    %v4005 = vrot.slane %v3935, %v4004
    %v4006 = vmul.f32 %v3997, %v4005
    %v4007 = vmul.f32 %v3998, %v4005
    %v4008 = vmul.f32 %v3999, %v4005
    %v4009 = vmul.f32 %v4000, %v4005
    %v4010 = vmul.f32 %v4001, %v4005
    %v4011 = vlaneseq
    %v4012 = vshrl.u32 %v4011, 7
    %v4013 = vsub.s32 0, %v4012
    %v4014 = vrot.slane %v3936, %v4013
    %v4015 = vadd.f32 %v4006, %v4014
    %v4016 = vadd.f32 %v4007, %v4014
    %v4017 = vadd.f32 %v4008, %v4014
    %v4018 = vadd.f32 %v4009, %v4014
    %v4019 = vadd.f32 %v4010, %v4014
    %v4020 = vld [vmem:[%s6] sm:$0xf]
    %v4021 = vld [vmem:[%s6 + $0x4] sm:$0xf]
    %v4022 = vld [vmem:[%s6 + $0x8] sm:$0xf]
    %v4023 = vld [vmem:[%s6 + $0xc] sm:$0xf]
    %v4024 = vld [vmem:[%s6 + $0x10] sm:$0xf]
    %v4025 = vld [vmem:[%s6 + $0x14] sm:$0xf]
    %v4026 = vld [vmem:[%s6 + $0x18] sm:$0xf]
    %v4027 = vld [vmem:[%s6 + $0x1c] sm:$0xf]
    %v4028 = vpack.c.bf16 %v4016, %v4015
    %v4029 = vpack.c.bf16 %v4018, %v4017
    %v4030 = vpack.c.bf16 %v4019, %v4019
    %v4031 = vld [vmem:[%s8 + $0x2] sm:$0x1]
    %v4032 = vlaneseq
    %v4033 = vshrl.u32 %v4032, 7
    %v4034 = vsub.s32 0, %v4033
    %v4035 = vrot.slane %v4031, %v4034
    %v4044 = vunpack.c.l.b16 %v4020
    %v4045 = vunpack.c.l.b16 %v4021
    %v4046 = vunpack.c.l.b16 %v4022
    %v4047 = vunpack.c.l.b16 %v4023
    %v4048 = vunpack.c.l.b16 %v4024
    %v4049 = vunpack.c.l.b16 %v4025
    %v4050 = vunpack.c.l.b16 %v4026
    %v4051 = vunpack.c.l.b16 %v4027
    %v4052 = vpack.c.b16 %v4045, %v4044
    %v4053 = vpack.c.b16 %v4047, %v4046
    %v4054 = vpack.c.b16 %v4049, %v4048
    %v4055 = vpack.c.b16 %v4051, %v4050
    %v4061 = vsel %vm255, %v4028, 0
    %v4064 = vsel %vm255, %v4029, 0
    %v4067 = vsel %vm255, %v4030, 0
    %4069 = vmatprep.subr.bf16.mxu0 0
    %4070 = vmatpush1.bf16.msra.mxu0 0
    %4071 = vmatprep.subr.bf16.mxu0 0
    %4072 = vmatpush1.bf16.msra.mxu0 0
    %4073 = vmatprep.subr.bf16.mxu0 0
    %4074 = vmatpush1.bf16.msra.mxu0 0
    %4075 = vmatprep.subr.bf16.mxu0 0
    %4076 = vmatpush1.bf16.msra.mxu0 0
    %4077 = vmatprep.subr.bf16.mxu0 0
    %4078 = vmatpush1.bf16.msra.mxu0 %v4055
    %4079 = vmatprep.subr.bf16.mxu0 0
    %4080 = vmatpush1.bf16.msra.mxu0 %v4054
    %4081 = vmatprep.subr.bf16.mxu0 0
    %4082 = vmatpush1.bf16.msra.mxu0 %v4053
    %4083 = vmatprep.subr.bf16.mxu0 0
    %4084 = vmatpush1.bf16.msra.mxu0 %v4052
    %4085 = vmatprep.subr.bf16.mxu0 0
    %4086 = vmatpush2.bf16.msra.mxu0 0
    %4087 = vmatprep.subr.bf16.mxu0 0
    %4088 = vmatpush2.bf16.msra.mxu0 0
    %4089 = vmatprep.subr.bf16.mxu0 0
    %4090 = vmatpush2.bf16.msra.mxu0 0
    %4091 = vmatprep.subr.bf16.mxu0 0
    %4092 = vmatpush2.bf16.msra.mxu0 0
    %4093 = vmatprep.subr.bf16.mxu0 0
    %4094 = vmatpush2.bf16.msra.mxu0 0
    %4095 = vmatprep.subr.bf16.mxu0 0
    %4096 = vmatpush2.bf16.msra.mxu0 0
    %4097 = vmatprep.subr.bf16.mxu0 0
    %4098 = vmatpush2.bf16.msra.mxu0 0
    %4099 = vmatprep.subr.bf16.mxu0 0
    %4100 = vmatpush2.bf16.msra.mxu0 0
    %4101 = vmatprep.mubr.bf16.mxu0 0
    %4102 = vmatmul.mubr.bf16.gmra.mxu0 %v4061
    %v4103 = vpop.f32.mrf.mxu0
    %v4104 = vadd.f32 %v4035, %v4103
    %v4105 = vpop.f32.mrf.mxu0
    %v4106 = vpop.f32.mrf.mxu0
    %v4107 = vadd.f32 %v4035, %v4106
    %v4108 = vpop.f32.mrf.mxu0
    %4109 = vmatprep.mubr.bf16.mxu0 0
    %4110 = vmatmul.mubr.bf16.gmra.mxu0 %v4064
    %v4111 = vpop.f32.mrf.mxu0
    %v4112 = vadd.f32 %v4035, %v4111
    %v4113 = vpop.f32.mrf.mxu0
    %v4114 = vpop.f32.mrf.mxu0
    %v4115 = vadd.f32 %v4035, %v4114
    %v4116 = vpop.f32.mrf.mxu0
    %4117 = vmatprep.mubr.bf16.mxu0 0
    %4118 = vmatmul.mubr.bf16.gmra.mxu0 %v4067
    %v4119 = vpop.f32.mrf.mxu0
    %v4120 = vadd.f32 %v4035, %v4119
    %v4121 = vpop.f32.mrf.mxu0
    %v4122 = vpop.f32.mrf.mxu0
    %v4123 = vpop.f32.mrf.mxu0
    %4124 = vdwg.mxu0
    %4125 = vst [vmem:[#allocation2] sm:$0xff] %v4104
    %4126 = vst [vmem:[#allocation2 + $0x8] sm:$0xff] %v4107
    %4127 = vst [vmem:[#allocation2 + $0x10] sm:$0xff] %v4112
    %4128 = vst [vmem:[#allocation2 + $0x18] sm:$0xff] %v4115
    %4129 = vst [vmem:[#allocation2 + $0x20] sm:$0x3] %v4120
    // Predicated region
    $region46: #{tpu_custom_call.1} parent=1 // pred_check
      _
    $region47: #{tpu_custom_call.1} parent=1 // pred_check_branch
      %4131 = sbr.rel (0) target = $region49
    $region48: #{tpu_custom_call.1} parent=1 // pred_region
      %s4133 = ssub.s32 640, 640
      %4134 = vsyncadd [#allocation3], %s4133
      %s4135 = sshll.u32 [#allocation2], 4
      %s4136 = int_to_ptr.vmem [resolvable:$true] %s4135
      %4141 = dma.vmem_to_hbm [thread:$0]  %s4136, 640, %s11, [#allocation3], 128, 128, 8
    $region49: #{tpu_custom_call.1} parent=1 // pred_fallthru
      _
    // Predicated region
    $region50: #{tpu_custom_call.1} parent=1 // pred_check
      _
    $region51: #{tpu_custom_call.1} parent=1 // pred_check_branch
      %4143 = sbr.rel (0) target = $region53
    $region52: #{tpu_custom_call.1} parent=1 // pred_region
      %4144 = dma.done [#allocation3], 640
    $region53: #{tpu_custom_call.1} parent=1 // pred_fallthru
      _
    %4145 = vsyncpa [#allocation3], 1

</llo_original>
